<compile_context>
chip_gen: v7x
topology: tpu7x:2x2x1
jax: 0.10.0
libtpu: 0.0.40
codegen_flags: <defaults>
</compile_context>

<pallas_src>
import jax
import jax.numpy as jnp
from jax.experimental import pallas as pl
from jax.experimental.pallas import tpu as pltpu


# ---------------------------------------------------------------------------
# Pallas kernels
# ---------------------------------------------------------------------------
def _conv_relu_pool_kernel(a_ref, w_ref, b_ref, o_ref):
    """Fused im2col-conv + bias + ReLU + 2x2 max-pool.

    a_ref: (4, bm, K) bf16 -- the 4 pool candidates of each pooled pixel,
           already im2col'd (K = 9 * Cin).
    w_ref: (K, Cout) bf16;  b_ref: (1, Cout) f32;  o_ref: (bm, Cout) bf16.
    relu(max_i(s_i) + b) == max_i(relu(s_i + b)) because +b and relu are
    monotone, so pooling happens on the raw f32 accumulators.
    """
    w = w_ref[...]
    acc = jnp.dot(a_ref[0], w, preferred_element_type=jnp.float32)
    for t in range(1, 4):
        acc = jnp.maximum(
            acc, jnp.dot(a_ref[t], w, preferred_element_type=jnp.float32))
    o_ref[...] = jnp.maximum(acc + b_ref[...], 0.0).astype(o_ref.dtype)


def conv_relu_pool(a4, w, b, *, block_m=256):
    """a4: (4, M, K) bf16, w: (K, Cout) bf16, b: (1, Cout) f32 -> (M, Cout) bf16."""
    _, M, K = a4.shape
    Kw, Cout = w.shape
    assert K == Kw
    bm = M if M <= block_m else block_m          # ragged last block is masked
    return pl.pallas_call(
        _conv_relu_pool_kernel,
        out_shape=jax.ShapeDtypeStruct((M, Cout), jnp.bfloat16),
        grid=(pl.cdiv(M, bm),),
        in_specs=[
            pl.BlockSpec((4, bm, K), lambda i: (0, i, 0)),   # pooled-row tile
            pl.BlockSpec((K, Cout), lambda i: (0, 0)),       # full weights
            pl.BlockSpec((1, Cout), lambda i: (0, 0)),       # bias (f32)
        ],
        out_specs=pl.BlockSpec((bm, Cout), lambda i: (i, 0)),
        compiler_params=pltpu.CompilerParams(
            dimension_semantics=("parallel",)),
    )(a4, w, b)


def _fc_fused_kernel(x_ref, w1_ref, b1_ref, w2_ref, b2_ref, o_ref):
    """logits = relu(x @ w1 + b1) @ w2 + b2 in a single kernel invocation."""
    h = jnp.dot(x_ref[...], w1_ref[...], preferred_element_type=jnp.float32)
    h = jnp.maximum(h + b1_ref[...], 0.0)
    out = jnp.dot(h.astype(w2_ref.dtype), w2_ref[...],
                  preferred_element_type=jnp.float32)
    o_ref[...] = (out + b2_ref[...]).astype(o_ref.dtype)


def fc_fused(x, w1, b1, w2p, b2p, *, block_b=256):
    """x:(B,K) bf16, w1:(K,H) bf16, b1:(1,H) f32, w2p:(H,NP) bf16, b2p:(1,NP) f32."""
    B, K = x.shape
    _, H = w1.shape
    _, NP = w2p.shape
    bb = B if B <= block_b else block_b
    return pl.pallas_call(
        _fc_fused_kernel,
        out_shape=jax.ShapeDtypeStruct((B, NP), jnp.float32),
        grid=(pl.cdiv(B, bb),),
        in_specs=[
            pl.BlockSpec((bb, K), lambda i: (i, 0)),
            pl.BlockSpec((K, H), lambda i: (0, 0)),
            pl.BlockSpec((1, H), lambda i: (0, 0)),
            pl.BlockSpec((H, NP), lambda i: (0, 0)),
            pl.BlockSpec((1, NP), lambda i: (0, 0)),
        ],
        out_specs=pl.BlockSpec((bb, NP), lambda i: (i, 0)),
        compiler_params=pltpu.CompilerParams(
            dimension_semantics=("parallel",)),
    )(x, w1, b1, w2p, b2p)


# ---------------------------------------------------------------------------
# JAX glue: window-grouped im2col for 3x3 / stride 1 / pad 1 conv + 2x2 pool
# ---------------------------------------------------------------------------
def im2col_3x3_pool_grouped(x_nhwc):
    """Return (4, N*Hp*Wp, 9*C): the four 2x2-pool candidates of each pooled
    pixel, stacked on a leading axis.  Rows ordered (n, hp, wp); K ordered
    (kh, kw, cin); leading axis is dh*2+dw.  Built from strided slices of the
    padded input (no transpose of the blown-up im2col matrix)."""
    N, H, W, C = x_nhwc.shape
    Hp, Wp = H // 2, W // 2
    xp = jnp.pad(x_nhwc, ((0, 0), (1, 1), (1, 1), (0, 0)))
    cands = []
    for dh in range(2):
        for dw in range(2):
            patches = [
                xp[:, dh + kh: dh + kh + 2 * Hp - 1: 2,
                      dw + kw: dw + kw + 2 * Wp - 1: 2, :]
                for kh in range(3) for kw in range(3)
            ]
            p = jnp.stack(patches, axis=3)              # (N, Hp, Wp, 9, C)
            cands.append(p.reshape(N * Hp * Wp, 9 * C))
    return jnp.stack(cands, axis=0)                     # (4, N*Hp*Wp, 9*C)


# ---------------------------------------------------------------------------
# Model
# ---------------------------------------------------------------------------
def init_params(key):
    ks = jax.random.split(key, 8)

    def u(k, shape, fan_in, dtype=jnp.float32):
        bound = 1.0 / (fan_in ** 0.5)
        return jax.random.uniform(k, shape, jnp.float32, -bound, bound).astype(dtype)

    # Conv weights stored as im2col matrices (9*Cin, Cout) in bf16; row index
    # (kh*3+kw)*Cin + cin corresponds to PyTorch weight[cout, cin, kh, kw].
    # fc1 rows are in HWC flatten order (hp*7+wp)*64 + c (PyTorch CHW weights
    # must be permuted accordingly if imported), so flatten is a pure reshape.
    # fc2 weight/bias are zero-padded from 10 to 128 output columns so the
    # fused FC kernel stores lane-dense; the wrapper slices [:, :10].
    wf2 = u(ks[6], (128, 10), 128)
    bf2 = u(ks[7], (1, 10), 128)
    return dict(
        w1=u(ks[0], (9 * 1, 32), 9 * 1, jnp.bfloat16),
        b1=u(ks[1], (1, 32), 9 * 1),
        w2=u(ks[2], (9 * 32, 64), 9 * 32, jnp.bfloat16),
        b2=u(ks[3], (1, 64), 9 * 32),
        wf1=u(ks[4], (64 * 7 * 7, 128), 64 * 7 * 7, jnp.bfloat16),
        bf1=u(ks[5], (1, 128), 64 * 7 * 7),
        wf2p=jnp.pad(wf2, ((0, 0), (0, 118))).astype(jnp.bfloat16),
        bf2p=jnp.pad(bf2, ((0, 0), (0, 118))),
    )


def simple_cnn_forward(x_nchw, params):
    N = x_nchw.shape[0]
    # NCHW -> NHWC once; bf16 activations between all kernels.
    x = jnp.transpose(x_nchw, (0, 2, 3, 1)).astype(jnp.bfloat16)

    # conv1 (1->32, 3x3, pad 1) + ReLU + 2x2 max-pool, fused in one kernel.
    a = im2col_3x3_pool_grouped(x)                       # (4, N*14*14, 9)
    y = conv_relu_pool(a, params["w1"], params["b1"])    # (N*14*14, 32) bf16
    y = y.reshape(N, 14, 14, 32)

    # conv2 (32->64, 3x3, pad 1) + ReLU + 2x2 max-pool, fused in one kernel.
    a = im2col_3x3_pool_grouped(y)                       # (4, N*7*7, 288)
    y = conv_relu_pool(a, params["w2"], params["b2"])    # (N*7*7, 64) bf16

    # Rows are already (n, hp, wp) with channels last and wf1 matches that
    # order -> flatten is a free reshape (no transpose).
    flat = y.reshape(N, 7 * 7 * 64)

    logits = fc_fused(flat, params["wf1"], params["bf1"],
                      params["wf2p"], params["bf2p"])    # (N, 128) f32
    return logits[:, :10]                                # (N, 10)


if __name__ == "__main__":
    key = jax.random.PRNGKey(0)
    kx, kp = jax.random.split(key)
    # fc1 = Linear(64*7*7, 128) pins the input spatial size to 1x28x28 (MNIST).
    x = jax.random.normal(kx, (2, 1, 28, 28), jnp.float32)
    params = init_params(kp)

    fwd = jax.jit(simple_cnn_forward)
    out = fwd(x, params)
    jax.block_until_ready(out)
    assert out.shape == (2, 10) and out.dtype == jnp.float32
    print("KERNEL_OK")
</pallas_src>

<mosaic_0001>
module attributes {stable_mosaic.version = 11 : i64} {
  func.func @_conv_relu_pool_kernel(%arg0: i32, %arg1: memref<4x256x9xbf16, #tpu.memory_space<vmem>>, %arg2: memref<9x32xbf16, #tpu.memory_space<vmem>>, %arg3: memref<1x32xf32, #tpu.memory_space<vmem>>, %arg4: memref<256x32xbf16, #tpu.memory_space<vmem>>) attributes {dimension_semantics = [#tpu.dimension_semantics<parallel>], iteration_bounds = array<i64: 2>, scalar_prefetch = 0 : i64, scratch_operands = 0 : i64, tpu.core_type = #tpu.core_type<tc>, window_params = [{transform_indices = @transform_0, window_bounds = array<i64: 4, 256, 9>}, {pipeline_mode = #tpu.pipeline_mode<synchronous>, transform_indices = @transform_1, window_bounds = array<i64: 9, 32>}, {pipeline_mode = #tpu.pipeline_mode<synchronous>, transform_indices = @transform_2, window_bounds = array<i64: 1, 32>}, {transform_indices = @transform_3, window_bounds = array<i64: 256, 32>}]} {
    %c0 = arith.constant 0 : index
    %c0_0 = arith.constant 0 : index
    %0 = vector.load %arg2[%c0, %c0_0] : memref<9x32xbf16, #tpu.memory_space<vmem>>, vector<9x32xbf16>
    %c0_1 = arith.constant 0 : index
    %c0_2 = arith.constant 0 : index
    %c0_3 = arith.constant 0 : index
    %1 = vector.load %arg1[%c0_1, %c0_2, %c0_3] : memref<4x256x9xbf16, #tpu.memory_space<vmem>>, vector<1x256x9xbf16>
    %2 = vector.shape_cast %1 : vector<1x256x9xbf16> to vector<256x9xbf16>
    %cst = arith.constant dense<0.000000e+00> : vector<256x32xf32>
    %3 = tpu.matmul %2, %0, %cst {dimension_numbers = #tpu.dot_dimension_numbers<[1], [0], [0], [1], [0, 0, 1, 1], [], []>} : vector<256x9xbf16>, vector<9x32xbf16>, vector<256x32xf32> -> vector<256x32xf32>
    %c1 = arith.constant 1 : index
    %c0_4 = arith.constant 0 : index
    %c0_5 = arith.constant 0 : index
    %4 = vector.load %arg1[%c1, %c0_4, %c0_5] : memref<4x256x9xbf16, #tpu.memory_space<vmem>>, vector<1x256x9xbf16>
    %5 = vector.shape_cast %4 : vector<1x256x9xbf16> to vector<256x9xbf16>
    %cst_6 = arith.constant dense<0.000000e+00> : vector<256x32xf32>
    %6 = tpu.matmul %5, %0, %cst_6 {dimension_numbers = #tpu.dot_dimension_numbers<[1], [0], [0], [1], [0, 0, 1, 1], [], []>} : vector<256x9xbf16>, vector<9x32xbf16>, vector<256x32xf32> -> vector<256x32xf32>
    %7 = arith.maximumf %3, %6 : vector<256x32xf32>
    %c2 = arith.constant 2 : index
    %c0_7 = arith.constant 0 : index
    %c0_8 = arith.constant 0 : index
    %8 = vector.load %arg1[%c2, %c0_7, %c0_8] : memref<4x256x9xbf16, #tpu.memory_space<vmem>>, vector<1x256x9xbf16>
    %9 = vector.shape_cast %8 : vector<1x256x9xbf16> to vector<256x9xbf16>
    %cst_9 = arith.constant dense<0.000000e+00> : vector<256x32xf32>
    %10 = tpu.matmul %9, %0, %cst_9 {dimension_numbers = #tpu.dot_dimension_numbers<[1], [0], [0], [1], [0, 0, 1, 1], [], []>} : vector<256x9xbf16>, vector<9x32xbf16>, vector<256x32xf32> -> vector<256x32xf32>
    %11 = arith.maximumf %7, %10 : vector<256x32xf32>
    %c3 = arith.constant 3 : index
    %c0_10 = arith.constant 0 : index
    %c0_11 = arith.constant 0 : index
    %12 = vector.load %arg1[%c3, %c0_10, %c0_11] : memref<4x256x9xbf16, #tpu.memory_space<vmem>>, vector<1x256x9xbf16>
    %13 = vector.shape_cast %12 : vector<1x256x9xbf16> to vector<256x9xbf16>
    %cst_12 = arith.constant dense<0.000000e+00> : vector<256x32xf32>
    %14 = tpu.matmul %13, %0, %cst_12 {dimension_numbers = #tpu.dot_dimension_numbers<[1], [0], [0], [1], [0, 0, 1, 1], [], []>} : vector<256x9xbf16>, vector<9x32xbf16>, vector<256x32xf32> -> vector<256x32xf32>
    %15 = arith.maximumf %11, %14 : vector<256x32xf32>
    %c0_13 = arith.constant 0 : index
    %c0_14 = arith.constant 0 : index
    %16 = vector.load %arg3[%c0_13, %c0_14] : memref<1x32xf32, #tpu.memory_space<vmem>>, vector<1x32xf32>
    %17 = vector.broadcast %16 : vector<1x32xf32> to vector<256x32xf32>
    %18 = arith.addf %15, %17 : vector<256x32xf32>
    %cst_15 = arith.constant 0.000000e+00 : f32
    %19 = vector.broadcast %cst_15 : f32 to vector<256x32xf32>
    %20 = arith.maximumf %18, %19 : vector<256x32xf32>
    %21 = arith.truncf %20 : vector<256x32xf32> to vector<256x32xbf16>
    %c0_16 = arith.constant 0 : index
    %c0_17 = arith.constant 0 : index
    %22 = vector.load %arg4[%c0_16, %c0_17] : memref<256x32xbf16, #tpu.memory_space<vmem>>, vector<256x32xbf16>
    tpu.vector_store %arg4[%c0_16, %c0_17], %21 {strides = array<i32>} : memref<256x32xbf16, #tpu.memory_space<vmem>>, vector<256x32xbf16>,
    return
  }
  func.func @transform_0(%arg0: i32) -> (i32, i32, i32) {
    %c0_i32 = arith.constant 0 : i32
    %c0_i32_0 = arith.constant 0 : i32
    %c0_i32_1 = arith.constant 0 : i32
    return %c0_i32, %arg0, %c0_i32_0 : i32, i32, i32
  }
  func.func @transform_1(%arg0: i32) -> (i32, i32) {
    %c0_i32 = arith.constant 0 : i32
    %c0_i32_0 = arith.constant 0 : i32
    %c0_i32_1 = arith.constant 0 : i32
    return %c0_i32, %c0_i32_0 : i32, i32
  }
  func.func @transform_2(%arg0: i32) -> (i32, i32) {
    %c0_i32 = arith.constant 0 : i32
    %c0_i32_0 = arith.constant 0 : i32
    %c0_i32_1 = arith.constant 0 : i32
    return %c0_i32, %c0_i32_0 : i32, i32
  }
  func.func @transform_3(%arg0: i32) -> (i32, i32) {
    %c0_i32 = arith.constant 0 : i32
    %c0_i32_0 = arith.constant 0 : i32
    return %arg0, %c0_i32 : i32, i32
  }
}

module attributes {stable_mosaic.version = 11 : i64} {
  func.func @_conv_relu_pool_kernel(%arg0: i32, %arg1: memref<4x98x288xbf16, #tpu.memory_space<vmem>>, %arg2: memref<288x64xbf16, #tpu.memory_space<vmem>>, %arg3: memref<1x64xf32, #tpu.memory_space<vmem>>, %arg4: memref<98x64xbf16, #tpu.memory_space<vmem>>) attributes {dimension_semantics = [#tpu.dimension_semantics<parallel>], iteration_bounds = array<i64: 1>, scalar_prefetch = 0 : i64, scratch_operands = 0 : i64, tpu.core_type = #tpu.core_type<tc>, window_params = [{transform_indices = @transform_0, window_bounds = array<i64: 4, 98, 288>}, {pipeline_mode = #tpu.pipeline_mode<synchronous>, transform_indices = @transform_1, window_bounds = array<i64: 288, 64>}, {pipeline_mode = #tpu.pipeline_mode<synchronous>, transform_indices = @transform_2, window_bounds = array<i64: 1, 64>}, {transform_indices = @transform_3, window_bounds = array<i64: 98, 64>}]} {
    %c0 = arith.constant 0 : index
    %c0_0 = arith.constant 0 : index
    %0 = vector.load %arg2[%c0, %c0_0] : memref<288x64xbf16, #tpu.memory_space<vmem>>, vector<288x64xbf16>
    %c0_1 = arith.constant 0 : index
    %c0_2 = arith.constant 0 : index
    %c0_3 = arith.constant 0 : index
    %1 = vector.load %arg1[%c0_1, %c0_2, %c0_3] : memref<4x98x288xbf16, #tpu.memory_space<vmem>>, vector<1x98x288xbf16>
    %2 = vector.shape_cast %1 : vector<1x98x288xbf16> to vector<98x288xbf16>
    %cst = arith.constant dense<0.000000e+00> : vector<98x64xf32>
    %3 = tpu.matmul %2, %0, %cst {dimension_numbers = #tpu.dot_dimension_numbers<[1], [0], [0], [1], [0, 0, 1, 1], [], []>} : vector<98x288xbf16>, vector<288x64xbf16>, vector<98x64xf32> -> vector<98x64xf32>
    %c1 = arith.constant 1 : index
    %c0_4 = arith.constant 0 : index
    %c0_5 = arith.constant 0 : index
    %4 = vector.load %arg1[%c1, %c0_4, %c0_5] : memref<4x98x288xbf16, #tpu.memory_space<vmem>>, vector<1x98x288xbf16>
    %5 = vector.shape_cast %4 : vector<1x98x288xbf16> to vector<98x288xbf16>
    %cst_6 = arith.constant dense<0.000000e+00> : vector<98x64xf32>
    %6 = tpu.matmul %5, %0, %cst_6 {dimension_numbers = #tpu.dot_dimension_numbers<[1], [0], [0], [1], [0, 0, 1, 1], [], []>} : vector<98x288xbf16>, vector<288x64xbf16>, vector<98x64xf32> -> vector<98x64xf32>
    %7 = arith.maximumf %3, %6 : vector<98x64xf32>
    %c2 = arith.constant 2 : index
    %c0_7 = arith.constant 0 : index
    %c0_8 = arith.constant 0 : index
    %8 = vector.load %arg1[%c2, %c0_7, %c0_8] : memref<4x98x288xbf16, #tpu.memory_space<vmem>>, vector<1x98x288xbf16>
    %9 = vector.shape_cast %8 : vector<1x98x288xbf16> to vector<98x288xbf16>
    %cst_9 = arith.constant dense<0.000000e+00> : vector<98x64xf32>
    %10 = tpu.matmul %9, %0, %cst_9 {dimension_numbers = #tpu.dot_dimension_numbers<[1], [0], [0], [1], [0, 0, 1, 1], [], []>} : vector<98x288xbf16>, vector<288x64xbf16>, vector<98x64xf32> -> vector<98x64xf32>
    %11 = arith.maximumf %7, %10 : vector<98x64xf32>
    %c3 = arith.constant 3 : index
    %c0_10 = arith.constant 0 : index
    %c0_11 = arith.constant 0 : index
    %12 = vector.load %arg1[%c3, %c0_10, %c0_11] : memref<4x98x288xbf16, #tpu.memory_space<vmem>>, vector<1x98x288xbf16>
    %13 = vector.shape_cast %12 : vector<1x98x288xbf16> to vector<98x288xbf16>
    %cst_12 = arith.constant dense<0.000000e+00> : vector<98x64xf32>
    %14 = tpu.matmul %13, %0, %cst_12 {dimension_numbers = #tpu.dot_dimension_numbers<[1], [0], [0], [1], [0, 0, 1, 1], [], []>} : vector<98x288xbf16>, vector<288x64xbf16>, vector<98x64xf32> -> vector<98x64xf32>
    %15 = arith.maximumf %11, %14 : vector<98x64xf32>
    %c0_13 = arith.constant 0 : index
    %c0_14 = arith.constant 0 : index
    %16 = vector.load %arg3[%c0_13, %c0_14] : memref<1x64xf32, #tpu.memory_space<vmem>>, vector<1x64xf32>
    %17 = vector.broadcast %16 : vector<1x64xf32> to vector<98x64xf32>
    %18 = arith.addf %15, %17 : vector<98x64xf32>
    %cst_15 = arith.constant 0.000000e+00 : f32
    %19 = vector.broadcast %cst_15 : f32 to vector<98x64xf32>
    %20 = arith.maximumf %18, %19 : vector<98x64xf32>
    %21 = arith.truncf %20 : vector<98x64xf32> to vector<98x64xbf16>
    %c0_16 = arith.constant 0 : index
    %c0_17 = arith.constant 0 : index
    %22 = vector.load %arg4[%c0_16, %c0_17] : memref<98x64xbf16, #tpu.memory_space<vmem>>, vector<98x64xbf16>
    tpu.vector_store %arg4[%c0_16, %c0_17], %21 {strides = array<i32>} : memref<98x64xbf16, #tpu.memory_space<vmem>>, vector<98x64xbf16>,
    return
  }
  func.func @transform_0(%arg0: i32) -> (i32, i32, i32) {
    %c0_i32 = arith.constant 0 : i32
    %c0_i32_0 = arith.constant 0 : i32
    %c0_i32_1 = arith.constant 0 : i32
    return %c0_i32, %arg0, %c0_i32_0 : i32, i32, i32
  }
  func.func @transform_1(%arg0: i32) -> (i32, i32) {
    %c0_i32 = arith.constant 0 : i32
    %c0_i32_0 = arith.constant 0 : i32
    %c0_i32_1 = arith.constant 0 : i32
    return %c0_i32, %c0_i32_0 : i32, i32
  }
  func.func @transform_2(%arg0: i32) -> (i32, i32) {
    %c0_i32 = arith.constant 0 : i32
    %c0_i32_0 = arith.constant 0 : i32
    %c0_i32_1 = arith.constant 0 : i32
    return %c0_i32, %c0_i32_0 : i32, i32
  }
  func.func @transform_3(%arg0: i32) -> (i32, i32) {
    %c0_i32 = arith.constant 0 : i32
    %c0_i32_0 = arith.constant 0 : i32
    return %arg0, %c0_i32 : i32, i32
  }
}

module attributes {stable_mosaic.version = 11 : i64} {
  func.func @_fc_fused_kernel(%arg0: i32, %arg1: memref<2x3136xbf16, #tpu.memory_space<vmem>>, %arg2: memref<3136x128xbf16, #tpu.memory_space<vmem>>, %arg3: memref<1x128xf32, #tpu.memory_space<vmem>>, %arg4: memref<128x128xbf16, #tpu.memory_space<vmem>>, %arg5: memref<1x128xf32, #tpu.memory_space<vmem>>, %arg6: memref<2x128xf32, #tpu.memory_space<vmem>>) attributes {dimension_semantics = [#tpu.dimension_semantics<parallel>], iteration_bounds = array<i64: 1>, scalar_prefetch = 0 : i64, scratch_operands = 0 : i64, tpu.core_type = #tpu.core_type<tc>, window_params = [{transform_indices = @transform_0, window_bounds = array<i64: 2, 3136>}, {pipeline_mode = #tpu.pipeline_mode<synchronous>, transform_indices = @transform_1, window_bounds = array<i64: 3136, 128>}, {pipeline_mode = #tpu.pipeline_mode<synchronous>, transform_indices = @transform_2, window_bounds = array<i64: 1, 128>}, {pipeline_mode = #tpu.pipeline_mode<synchronous>, transform_indices = @transform_3, window_bounds = array<i64: 128, 128>}, {pipeline_mode = #tpu.pipeline_mode<synchronous>, transform_indices = @transform_4, window_bounds = array<i64: 1, 128>}, {transform_indices = @transform_5, window_bounds = array<i64: 2, 128>}]} {
    %c0 = arith.constant 0 : index
    %c0_0 = arith.constant 0 : index
    %0 = vector.load %arg1[%c0, %c0_0] : memref<2x3136xbf16, #tpu.memory_space<vmem>>, vector<2x3136xbf16>
    %c0_1 = arith.constant 0 : index
    %c0_2 = arith.constant 0 : index
    %1 = vector.load %arg2[%c0_1, %c0_2] : memref<3136x128xbf16, #tpu.memory_space<vmem>>, vector<3136x128xbf16>
    %cst = arith.constant dense<0.000000e+00> : vector<2x128xf32>
    %2 = tpu.matmul %0, %1, %cst {dimension_numbers = #tpu.dot_dimension_numbers<[1], [0], [0], [1], [0, 0, 1, 1], [], []>} : vector<2x3136xbf16>, vector<3136x128xbf16>, vector<2x128xf32> -> vector<2x128xf32>
    %c0_3 = arith.constant 0 : index
    %c0_4 = arith.constant 0 : index
    %3 = vector.load %arg3[%c0_3, %c0_4] : memref<1x128xf32, #tpu.memory_space<vmem>>, vector<1x128xf32>
    %4 = vector.broadcast %3 : vector<1x128xf32> to vector<2x128xf32>
    %5 = arith.addf %2, %4 : vector<2x128xf32>
    %cst_5 = arith.constant 0.000000e+00 : f32
    %6 = vector.broadcast %cst_5 : f32 to vector<2x128xf32>
    %7 = arith.maximumf %5, %6 : vector<2x128xf32>
    %8 = arith.truncf %7 : vector<2x128xf32> to vector<2x128xbf16>
    %c0_6 = arith.constant 0 : index
    %c0_7 = arith.constant 0 : index
    %9 = vector.load %arg4[%c0_6, %c0_7] : memref<128x128xbf16, #tpu.memory_space<vmem>>, vector<128x128xbf16>
    %cst_8 = arith.constant dense<0.000000e+00> : vector<2x128xf32>
    %10 = tpu.matmul %8, %9, %cst_8 {dimension_numbers = #tpu.dot_dimension_numbers<[1], [0], [0], [1], [0, 0, 1, 1], [], []>} : vector<2x128xbf16>, vector<128x128xbf16>, vector<2x128xf32> -> vector<2x128xf32>
    %c0_9 = arith.constant 0 : index
    %c0_10 = arith.constant 0 : index
    %11 = vector.load %arg5[%c0_9, %c0_10] : memref<1x128xf32, #tpu.memory_space<vmem>>, vector<1x128xf32>
    %12 = vector.broadcast %11 : vector<1x128xf32> to vector<2x128xf32>
    %13 = arith.addf %10, %12 : vector<2x128xf32>
    %c0_11 = arith.constant 0 : index
    %c0_12 = arith.constant 0 : index
    %14 = vector.load %arg6[%c0_11, %c0_12] : memref<2x128xf32, #tpu.memory_space<vmem>>, vector<2x128xf32>
    tpu.vector_store %arg6[%c0_11, %c0_12], %13 {strides = array<i32>} : memref<2x128xf32, #tpu.memory_space<vmem>>, vector<2x128xf32>,
    return
  }
  func.func @transform_0(%arg0: i32) -> (i32, i32) {
    %c0_i32 = arith.constant 0 : i32
    %c0_i32_0 = arith.constant 0 : i32
    return %arg0, %c0_i32 : i32, i32
  }
  func.func @transform_1(%arg0: i32) -> (i32, i32) {
    %c0_i32 = arith.constant 0 : i32
    %c0_i32_0 = arith.constant 0 : i32
    %c0_i32_1 = arith.constant 0 : i32
    return %c0_i32, %c0_i32_0 : i32, i32
  }
  func.func @transform_2(%arg0: i32) -> (i32, i32) {
    %c0_i32 = arith.constant 0 : i32
    %c0_i32_0 = arith.constant 0 : i32
    %c0_i32_1 = arith.constant 0 : i32
    return %c0_i32, %c0_i32_0 : i32, i32
  }
  func.func @transform_3(%arg0: i32) -> (i32, i32) {
    %c0_i32 = arith.constant 0 : i32
    %c0_i32_0 = arith.constant 0 : i32
    %c0_i32_1 = arith.constant 0 : i32
    return %c0_i32, %c0_i32_0 : i32, i32
  }
  func.func @transform_4(%arg0: i32) -> (i32, i32) {
    %c0_i32 = arith.constant 0 : i32
    %c0_i32_0 = arith.constant 0 : i32
    %c0_i32_1 = arith.constant 0 : i32
    return %c0_i32, %c0_i32_0 : i32, i32
  }
  func.func @transform_5(%arg0: i32) -> (i32, i32) {
    %c0_i32 = arith.constant 0 : i32
    %c0_i32_0 = arith.constant 0 : i32
    return %arg0, %c0_i32 : i32, i32
  }
}

</mosaic_0001>

<llo_original>
// kernel: simple_cnn_forward.3
$region0: #{simple_cnn_forward.3}
  #allocation0 [shape = 'u32[]', space=smem, size = 0x4, offset = 0x4, fixed_abs, tag = 'smem constant byte address 0x4 - core index']
  #allocation1 [shape = 'u32[144,128]{1,0:T(1,128)}', space=vmem, size = 0x12000, scoped, tag = 'internal scratch']
  %s0 = inlined_call_operand.vmem [shape: bf16[4,392,9], index: 0, kind: input, shape index: {}]
  %s1 = inlined_call_operand.vmem [shape: bf16[9,32], index: 1, kind: input, shape index: {}]
  %s2 = inlined_call_operand.vmem [shape: f32[1,32], index: 2, kind: input, shape index: {}]
  %s3 = inlined_call_operand.vmem [shape: bf16[392,32], index: 3, kind: output, shape index: {}]
  %s4 = sld [smem:[#allocation0]]
  $region151: #{simple_cnn_forward.3} parent=0
    _
  %s6 = ssub.s32 1, %s4
  %s7 = scalar_select 0, %s6, %s4
  $region1: #{simple_cnn_forward.3} parent=0
    #allocation2 [shape = 'u8[524288]{0}', space=vmem, size = 0x80000, scoped, tag = 'input window, operand 0']
    #allocation3 [shape = 'u8[131072]{0}', space=vmem, size = 0x20000, scoped, tag = 'output window, operand 0']
    loop: start=0, step=1, limit=4
    $region2: #{simple_cnn_forward.3} parent=1 // loop_pre_header
      _
    $region3: #{simple_cnn_forward.3} parent=1 // loop_header
      %s9 = sphi 0, %s13
      %p10 = scmp.ge.s32.totalorder %s9, 4
      %s19 = sphi 0, %s21
      %s22 = sphi 0, %s19
      %s23 = sphi 0, %s22
      %s39 = sphi 0, %s23
      %s43 = sphi 0, %s43
      %s45 = sphi 0, %s43
      %s46 = sphi 0, %s45
      %s60 = sphi 0, %s46
      %s64 = sphi 0, %s64
      %s66 = sphi 0, %s64
      %s67 = sphi 0, %s66
      %s81 = sphi 0, %s67
      %s87 = sphi 0, %s89
      %s90 = sphi 0, %s87
      %s91 = sphi 0, %s90
      %s107 = sphi 0, %s91
    $region4: #{simple_cnn_forward.3} parent=1 // loop_header_branch
      %12 = sbr.rel (%p10) target = $region8
    $region5: #{simple_cnn_forward.3} parent=1 // loop_body
      %s14 = ssub.s32 %s9, 1
      %s15 = ssub.s32 %s9, 2
      %s16 = sadd.s32 %s9, 1
      %s17 = ssub.s32 %s9, %s16
      %p18 = scmp.eq.s32.totalorder %s17, 0
      %s20 = sadd.s32 %s19, 1
      %s21 = scalar_select %p18, %s19, %s20
      %p24 = pneg %p18
      %p25 = scmp.eq.s32.totalorder %s9, 1
      %p26 = por %p24, %p25
      %p27 = scmp.ne.s32.totalorder %s19, %s22
      %p28 = scmp.eq.s32.totalorder %s9, 0
      %p29 = por %p27, %p28
      %p30 = scmp.ne.s32.totalorder %s19, %s22
      %p31 = scmp.eq.s32.totalorder %s14, 1
      %p32 = por %p30, %p31
      %p33 = scmp.ne.s32.totalorder %s22, %s23
      %p34 = scmp.eq.s32.totalorder %s14, 0
      %p35 = por %p33, %p34
      %p36 = scmp.ne.s32.totalorder %s22, %s23
      %p37 = scmp.eq.s32.totalorder %s15, 1
      %p38 = por %p36, %p37
      %p40 = scmp.ne.s32.totalorder %s23, %s39
      %p41 = scmp.eq.s32.totalorder %s15, 0
      %p42 = por %p40, %p41
      %s44 = sadd.s32 %s43, 1
      %p47 = scmp.eq.s32.totalorder %s9, 1
      %p48 = scmp.ne.s32.totalorder %s43, %s45
      %p49 = scmp.eq.s32.totalorder %s9, 0
      %p50 = por %p48, %p49
      %p51 = scmp.ne.s32.totalorder %s43, %s45
      %p52 = scmp.eq.s32.totalorder %s14, 1
      %p53 = por %p51, %p52
      %p54 = scmp.ne.s32.totalorder %s45, %s46
      %p55 = scmp.eq.s32.totalorder %s14, 0
      %p56 = por %p54, %p55
      %p57 = scmp.ne.s32.totalorder %s45, %s46
      %p58 = scmp.eq.s32.totalorder %s15, 1
      %p59 = por %p57, %p58
      %p61 = scmp.ne.s32.totalorder %s46, %s60
      %p62 = scmp.eq.s32.totalorder %s15, 0
      %p63 = por %p61, %p62
      %s65 = sadd.s32 %s64, 1
      %p68 = scmp.eq.s32.totalorder %s9, 1
      %p69 = scmp.ne.s32.totalorder %s64, %s66
      %p70 = scmp.eq.s32.totalorder %s9, 0
      %p71 = por %p69, %p70
      %p72 = scmp.ne.s32.totalorder %s64, %s66
      %p73 = scmp.eq.s32.totalorder %s14, 1
      %p74 = por %p72, %p73
      %p75 = scmp.ne.s32.totalorder %s66, %s67
      %p76 = scmp.eq.s32.totalorder %s14, 0
      %p77 = por %p75, %p76
      %p78 = scmp.ne.s32.totalorder %s66, %s67
      %p79 = scmp.eq.s32.totalorder %s15, 1
      %p80 = por %p78, %p79
      %p82 = scmp.ne.s32.totalorder %s67, %s81
      %p83 = scmp.eq.s32.totalorder %s15, 0
      %p84 = por %p82, %p83
      %s85 = ssub.s32 %s9, %s16
      %p86 = scmp.eq.s32.totalorder %s85, 0
      %s88 = sadd.s32 %s87, 1
      %s89 = scalar_select %p86, %s87, %s88
      %p92 = pneg %p86
      %p93 = scmp.eq.s32.totalorder %s9, 1
      %p94 = por %p92, %p93
      %p95 = scmp.ne.s32.totalorder %s87, %s90
      %p96 = scmp.eq.s32.totalorder %s9, 0
      %p97 = por %p95, %p96
      %p98 = scmp.ne.s32.totalorder %s87, %s90
      %p99 = scmp.eq.s32.totalorder %s14, 1
      %p100 = por %p98, %p99
      %p101 = scmp.ne.s32.totalorder %s90, %s91
      %p102 = scmp.eq.s32.totalorder %s14, 0
      %p103 = por %p101, %p102
      %p104 = scmp.ne.s32.totalorder %s90, %s91
      %p105 = scmp.eq.s32.totalorder %s15, 1
      %p106 = por %p104, %p105
      %p108 = scmp.ne.s32.totalorder %s91, %s107
      %p109 = scmp.eq.s32.totalorder %s15, 0
      %p110 = por %p108, %p109
      %p111 = scmp.le.s32.totalorder 1, %s9
      %p112 = scmp.lt.s32.totalorder %s9, 3
      %p113 = pnand %p111, %p112
      %p114 = pneg %p113
      // Predicated region
      $region9: #{simple_cnn_forward.3} parent=5 // pred_check
        _
      $region10: #{simple_cnn_forward.3} parent=5 // pred_check_branch
        %116 = sbr.rel (%p113) target = $region12
      $region11: #{simple_cnn_forward.3} parent=5 // pred_region
        %s117 = ssub.s32 %s9, 1
        // Predicated region
        $region13: #{simple_cnn_forward.3} parent=11 // pred_check
          %p118 = pneg %p56
        $region14: #{simple_cnn_forward.3} parent=11 // pred_check_branch
          %120 = sbr.rel (%p118) target = $region16
        $region15: #{simple_cnn_forward.3} parent=11 // pred_region
          _
        $region16: #{simple_cnn_forward.3} parent=11 // pred_fallthru
          _
        // Predicated region
        $region17: #{simple_cnn_forward.3} parent=11 // pred_check
          %p121 = pneg %p77
        $region18: #{simple_cnn_forward.3} parent=11 // pred_check_branch
          %123 = sbr.rel (%p121) target = $region20
        $region19: #{simple_cnn_forward.3} parent=11 // pred_region
          _
        $region20: #{simple_cnn_forward.3} parent=11 // pred_fallthru
          _
      $region12: #{simple_cnn_forward.3} parent=5 // pred_fallthru
        _
      %p124 = scmp.lt.s32.totalorder %s9, 2
      // Predicated region
      $region21: #{simple_cnn_forward.3} parent=5 // pred_check
        %p125 = pneg %p124
      $region22: #{simple_cnn_forward.3} parent=5 // pred_check_branch
        %127 = sbr.rel (%p125) target = $region24
      $region23: #{simple_cnn_forward.3} parent=5 // pred_region
        // Predicated region
        $region25: #{simple_cnn_forward.3} parent=23 // pred_check
          %p128 = pneg %p29
        $region26: #{simple_cnn_forward.3} parent=23 // pred_check_branch
          %130 = sbr.rel (%p128) target = $region28
        $region27: #{simple_cnn_forward.3} parent=23 // pred_region
          %s131 = sand.u32 %s19, 1
          %s132 = sand.u32 %s19, 1
          %s133 = smul.addr %s132, 512
          %s134 = scalar_lea.vmem [#allocation2], %s133
          %s135 = smul.u32 32, %s9
          %s136 = ssub.s32 49, %s135
          %p137 = scmp.lt.s32.totalorder %s136, 32
          %s138 = scalar_select %p137, %s136, 32
          %s139 = smul.u32 256, %s138
          %p140 = scmp.ne.s32.totalorder 0, %s139
          %s141 = smul.addr %s135, 4
          %s142 = scalar_lea.vmem %s0, %s141
          // Predicated region
          $region29: #{simple_cnn_forward.3} parent=27 // pred_check
            %p143 = pneg %p140
          $region30: #{simple_cnn_forward.3} parent=27 // pred_check_branch
            %145 = sbr.rel (%p143) target = $region32
          $region31: #{simple_cnn_forward.3} parent=27 // pred_region
            // Predicated region
            $region33: #{simple_cnn_forward.3} parent=31 // pred_check
              _
            $region34: #{simple_cnn_forward.3} parent=31 // pred_check_branch
              %147 = sbr.rel target = $region36
            $region35: #{simple_cnn_forward.3} parent=31 // pred_region
              // Predicated region
              $region55: #{simple_cnn_forward.3} parent=35 // pred_check
                _
              $region56: #{simple_cnn_forward.3} parent=35 // pred_check_branch
                %328 = sbr.rel (0) target = $region58
              $region57: #{simple_cnn_forward.3} parent=35 // pred_region
                %s329 = sshrl.u32 %s138, 5
                // While loop
                $region59: #{simple_cnn_forward.3} parent=57 // loop_pre_header
                  _
                $region60: #{simple_cnn_forward.3} parent=57 // loop_header
                  %s331 = sphi 0, %s333
                  %p332 = scmp.ge.s32.totalorder %s331, %s329
                  %s336 = sphi 0, %s341
                  %s337 = sphi %s142, %s344
                  %s338 = sphi %s134, %s345
                $region61: #{simple_cnn_forward.3} parent=57 // loop_header_branch
                  %335 = sbr.rel (%p332) target = $region65
                $region62: #{simple_cnn_forward.3} parent=57 // loop_body
                  %s339 = sadd.s32 1, %s336
                  %p340 = scmp.ge.s32.totalorder %s339, %s329
                  %s341 = scalar_select %p340, 0, %s339
                  %s342 = smul.u32 %s341, 128
                  %s343 = smul.u32 %s341, 128
                  %s344 = scalar_lea.vmem %s142, %s342
                  %s345 = scalar_lea.vmem %s134, %s343 [#allocation2]
                $region63: #{simple_cnn_forward.3} parent=57 // loop_footer
                  %s333 = sadd.s32 %s331, 1
                $region64: #{simple_cnn_forward.3} parent=57 // loop_footer_branch
                  %330 = sbr.rel target = $region60
                $region65: #{simple_cnn_forward.3} parent=57 // loop_exit
                  _
                %s346 = sshrl.u32 %s138, 5
                %s347 = sand.u32 %s138, 31
                %s348 = smul.u32 %s346, 32
                %s349 = smul.u32 4, %s348
                %s350 = scalar_lea.vmem %s142, %s349
                %s351 = smul.u32 4, %s348
                %s352 = scalar_lea.vmem %s134, %s351 [#allocation2]
                // While loop
                $region66: #{simple_cnn_forward.3} parent=57 // loop_pre_header
                  _
                $region67: #{simple_cnn_forward.3} parent=57 // loop_header
                  %s354 = sphi 0, %s356
                  %p355 = scmp.ge.s32.totalorder %s354, %s347
                  %s359 = sphi 0, %s364
                  %s360 = sphi %s350, %s367
                  %s361 = sphi %s352, %s368
                $region68: #{simple_cnn_forward.3} parent=57 // loop_header_branch
                  %358 = sbr.rel (%p355) target = $region72
                $region69: #{simple_cnn_forward.3} parent=57 // loop_body
                  %s362 = sadd.s32 1, %s359
                  %p363 = scmp.ge.s32.totalorder %s362, %s347
                  %s364 = scalar_select %p363, 0, %s362
                  %s365 = smul.u32 %s364, 4
                  %s366 = smul.u32 %s364, 4
                  %s367 = scalar_lea.vmem %s350, %s365
                  %s368 = scalar_lea.vmem %s352, %s366 [#allocation2]
                $region70: #{simple_cnn_forward.3} parent=57 // loop_footer
                  %s356 = sadd.s32 %s354, 1
                $region71: #{simple_cnn_forward.3} parent=57 // loop_footer_branch
                  %353 = sbr.rel target = $region67
                $region72: #{simple_cnn_forward.3} parent=57 // loop_exit
                  _
                %s370 = sshrl.u32 %s138, 4
                // While loop
                $region73: #{simple_cnn_forward.3} parent=57 // loop_pre_header
                  _
                $region74: #{simple_cnn_forward.3} parent=57 // loop_header
                  %s372 = sphi 0, %s374
                  %p373 = scmp.ge.s32.totalorder %s372, %s370
                  %s377 = sphi 0, %s510
                  %s378 = sphi %s142, %s513
                  %s379 = sphi %s134, %s514
                $region75: #{simple_cnn_forward.3} parent=57 // loop_header_branch
                  %376 = sbr.rel (%p373) target = $region79
                $region76: #{simple_cnn_forward.3} parent=57 // loop_body
                  %v380 = vld [vmem:[%s378] sm:$0xf]
                  %381 = vst [vmem:[%s379] sm:$0xf] %v380
                  %v382 = vld [vmem:[%s378 + $0x4] sm:$0xf]
                  %383 = vst [vmem:[%s379 + $0x4] sm:$0xf] %v382
                  %v384 = vld [vmem:[%s378 + $0x8] sm:$0xf]
                  %385 = vst [vmem:[%s379 + $0x8] sm:$0xf] %v384
                  %v386 = vld [vmem:[%s378 + $0xc] sm:$0xf]
                  %387 = vst [vmem:[%s379 + $0xc] sm:$0xf] %v386
                  %v388 = vld [vmem:[%s378 + $0x10] sm:$0xf]
                  %389 = vst [vmem:[%s379 + $0x10] sm:$0xf] %v388
                  %v390 = vld [vmem:[%s378 + $0x14] sm:$0xf]
                  %391 = vst [vmem:[%s379 + $0x14] sm:$0xf] %v390
                  %v392 = vld [vmem:[%s378 + $0x18] sm:$0xf]
                  %393 = vst [vmem:[%s379 + $0x18] sm:$0xf] %v392
                  %v394 = vld [vmem:[%s378 + $0x1c] sm:$0xf]
                  %395 = vst [vmem:[%s379 + $0x1c] sm:$0xf] %v394
                  %v396 = vld [vmem:[%s378 + $0x20] sm:$0xf]
                  %397 = vst [vmem:[%s379 + $0x20] sm:$0xf] %v396
                  %v398 = vld [vmem:[%s378 + $0x24] sm:$0xf]
                  %399 = vst [vmem:[%s379 + $0x24] sm:$0xf] %v398
                  %v400 = vld [vmem:[%s378 + $0x28] sm:$0xf]
                  %401 = vst [vmem:[%s379 + $0x28] sm:$0xf] %v400
                  %v402 = vld [vmem:[%s378 + $0x2c] sm:$0xf]
                  %403 = vst [vmem:[%s379 + $0x2c] sm:$0xf] %v402
                  %v404 = vld [vmem:[%s378 + $0x30] sm:$0xf]
                  %405 = vst [vmem:[%s379 + $0x30] sm:$0xf] %v404
                  %v406 = vld [vmem:[%s378 + $0x34] sm:$0xf]
                  %407 = vst [vmem:[%s379 + $0x34] sm:$0xf] %v406
                  %v408 = vld [vmem:[%s378 + $0x38] sm:$0xf]
                  %409 = vst [vmem:[%s379 + $0x38] sm:$0xf] %v408
                  %v410 = vld [vmem:[%s378 + $0x3c] sm:$0xf]
                  %411 = vst [vmem:[%s379 + $0x3c] sm:$0xf] %v410
                  %v412 = vld [vmem:[%s378 + $0xc4] sm:$0xf]
                  %413 = vst [vmem:[%s379 + $0x80] sm:$0xf] %v412
                  %v414 = vld [vmem:[%s378 + $0xc8] sm:$0xf]
                  %415 = vst [vmem:[%s379 + $0x84] sm:$0xf] %v414
                  %v416 = vld [vmem:[%s378 + $0xcc] sm:$0xf]
                  %417 = vst [vmem:[%s379 + $0x88] sm:$0xf] %v416
                  %v418 = vld [vmem:[%s378 + $0xd0] sm:$0xf]
                  %419 = vst [vmem:[%s379 + $0x8c] sm:$0xf] %v418
                  %v420 = vld [vmem:[%s378 + $0xd4] sm:$0xf]
                  %421 = vst [vmem:[%s379 + $0x90] sm:$0xf] %v420
                  %v422 = vld [vmem:[%s378 + $0xd8] sm:$0xf]
                  %423 = vst [vmem:[%s379 + $0x94] sm:$0xf] %v422
                  %v424 = vld [vmem:[%s378 + $0xdc] sm:$0xf]
                  %425 = vst [vmem:[%s379 + $0x98] sm:$0xf] %v424
                  %v426 = vld [vmem:[%s378 + $0xe0] sm:$0xf]
                  %427 = vst [vmem:[%s379 + $0x9c] sm:$0xf] %v426
                  %v428 = vld [vmem:[%s378 + $0xe4] sm:$0xf]
                  %429 = vst [vmem:[%s379 + $0xa0] sm:$0xf] %v428
                  %v430 = vld [vmem:[%s378 + $0xe8] sm:$0xf]
                  %431 = vst [vmem:[%s379 + $0xa4] sm:$0xf] %v430
                  %v432 = vld [vmem:[%s378 + $0xec] sm:$0xf]
                  %433 = vst [vmem:[%s379 + $0xa8] sm:$0xf] %v432
                  %v434 = vld [vmem:[%s378 + $0xf0] sm:$0xf]
                  %435 = vst [vmem:[%s379 + $0xac] sm:$0xf] %v434
                  %v436 = vld [vmem:[%s378 + $0xf4] sm:$0xf]
                  %437 = vst [vmem:[%s379 + $0xb0] sm:$0xf] %v436
                  %v438 = vld [vmem:[%s378 + $0xf8] sm:$0xf]
                  %439 = vst [vmem:[%s379 + $0xb4] sm:$0xf] %v438
                  %v440 = vld [vmem:[%s378 + $0xfc] sm:$0xf]
                  %441 = vst [vmem:[%s379 + $0xb8] sm:$0xf] %v440
                  %v442 = vld [vmem:[%s378 + $0x100] sm:$0xf]
                  %443 = vst [vmem:[%s379 + $0xbc] sm:$0xf] %v442
                  %v444 = vld [vmem:[%s378 + $0x188] sm:$0xf]
                  %445 = vst [vmem:[%s379 + $0x100] sm:$0xf] %v444
                  %v446 = vld [vmem:[%s378 + $0x18c] sm:$0xf]
                  %447 = vst [vmem:[%s379 + $0x104] sm:$0xf] %v446
                  %v448 = vld [vmem:[%s378 + $0x190] sm:$0xf]
                  %449 = vst [vmem:[%s379 + $0x108] sm:$0xf] %v448
                  %v450 = vld [vmem:[%s378 + $0x194] sm:$0xf]
                  %451 = vst [vmem:[%s379 + $0x10c] sm:$0xf] %v450
                  %v452 = vld [vmem:[%s378 + $0x198] sm:$0xf]
                  %453 = vst [vmem:[%s379 + $0x110] sm:$0xf] %v452
                  %v454 = vld [vmem:[%s378 + $0x19c] sm:$0xf]
                  %455 = vst [vmem:[%s379 + $0x114] sm:$0xf] %v454
                  %v456 = vld [vmem:[%s378 + $0x1a0] sm:$0xf]
                  %457 = vst [vmem:[%s379 + $0x118] sm:$0xf] %v456
                  %v458 = vld [vmem:[%s378 + $0x1a4] sm:$0xf]
                  %459 = vst [vmem:[%s379 + $0x11c] sm:$0xf] %v458
                  %v460 = vld [vmem:[%s378 + $0x1a8] sm:$0xf]
                  %461 = vst [vmem:[%s379 + $0x120] sm:$0xf] %v460
                  %v462 = vld [vmem:[%s378 + $0x1ac] sm:$0xf]
                  %463 = vst [vmem:[%s379 + $0x124] sm:$0xf] %v462
                  %v464 = vld [vmem:[%s378 + $0x1b0] sm:$0xf]
                  %465 = vst [vmem:[%s379 + $0x128] sm:$0xf] %v464
                  %v466 = vld [vmem:[%s378 + $0x1b4] sm:$0xf]
                  %467 = vst [vmem:[%s379 + $0x12c] sm:$0xf] %v466
                  %v468 = vld [vmem:[%s378 + $0x1b8] sm:$0xf]
                  %469 = vst [vmem:[%s379 + $0x130] sm:$0xf] %v468
                  %v470 = vld [vmem:[%s378 + $0x1bc] sm:$0xf]
                  %471 = vst [vmem:[%s379 + $0x134] sm:$0xf] %v470
                  %v472 = vld [vmem:[%s378 + $0x1c0] sm:$0xf]
                  %473 = vst [vmem:[%s379 + $0x138] sm:$0xf] %v472
                  %v474 = vld [vmem:[%s378 + $0x1c4] sm:$0xf]
                  %475 = vst [vmem:[%s379 + $0x13c] sm:$0xf] %v474
                  %v476 = vld [vmem:[%s378 + $0x24c] sm:$0xf]
                  %477 = vst [vmem:[%s379 + $0x180] sm:$0xf] %v476
                  %v478 = vld [vmem:[%s378 + $0x250] sm:$0xf]
                  %479 = vst [vmem:[%s379 + $0x184] sm:$0xf] %v478
                  %v480 = vld [vmem:[%s378 + $0x254] sm:$0xf]
                  %481 = vst [vmem:[%s379 + $0x188] sm:$0xf] %v480
                  %v482 = vld [vmem:[%s378 + $0x258] sm:$0xf]
                  %483 = vst [vmem:[%s379 + $0x18c] sm:$0xf] %v482
                  %v484 = vld [vmem:[%s378 + $0x25c] sm:$0xf]
                  %485 = vst [vmem:[%s379 + $0x190] sm:$0xf] %v484
                  %v486 = vld [vmem:[%s378 + $0x260] sm:$0xf]
                  %487 = vst [vmem:[%s379 + $0x194] sm:$0xf] %v486
                  %v488 = vld [vmem:[%s378 + $0x264] sm:$0xf]
                  %489 = vst [vmem:[%s379 + $0x198] sm:$0xf] %v488
                  %v490 = vld [vmem:[%s378 + $0x268] sm:$0xf]
                  %491 = vst [vmem:[%s379 + $0x19c] sm:$0xf] %v490
                  %v492 = vld [vmem:[%s378 + $0x26c] sm:$0xf]
                  %493 = vst [vmem:[%s379 + $0x1a0] sm:$0xf] %v492
                  %v494 = vld [vmem:[%s378 + $0x270] sm:$0xf]
                  %495 = vst [vmem:[%s379 + $0x1a4] sm:$0xf] %v494
                  %v496 = vld [vmem:[%s378 + $0x274] sm:$0xf]
                  %497 = vst [vmem:[%s379 + $0x1a8] sm:$0xf] %v496
                  %v498 = vld [vmem:[%s378 + $0x278] sm:$0xf]
                  %499 = vst [vmem:[%s379 + $0x1ac] sm:$0xf] %v498
                  %v500 = vld [vmem:[%s378 + $0x27c] sm:$0xf]
                  %501 = vst [vmem:[%s379 + $0x1b0] sm:$0xf] %v500
                  %v502 = vld [vmem:[%s378 + $0x280] sm:$0xf]
                  %503 = vst [vmem:[%s379 + $0x1b4] sm:$0xf] %v502
                  %v504 = vld [vmem:[%s378 + $0x284] sm:$0xf]
                  %505 = vst [vmem:[%s379 + $0x1b8] sm:$0xf] %v504
                  %v506 = vld [vmem:[%s378 + $0x288] sm:$0xf]
                  %507 = vst [vmem:[%s379 + $0x1bc] sm:$0xf] %v506
                  %s508 = sadd.s32 1, %s377
                  %p509 = scmp.ge.s32.totalorder %s508, %s370
                  %s510 = scalar_select %p509, 0, %s508
                  %s511 = smul.u32 %s510, 64
                  %s512 = smul.u32 %s510, 64
                  %s513 = scalar_lea.vmem %s142, %s511
                  %s514 = scalar_lea.vmem %s134, %s512 [#allocation2]
                $region77: #{simple_cnn_forward.3} parent=57 // loop_footer
                  %s374 = sadd.s32 %s372, 1
                $region78: #{simple_cnn_forward.3} parent=57 // loop_footer_branch
                  %371 = sbr.rel target = $region74
                $region79: #{simple_cnn_forward.3} parent=57 // loop_exit
                  _
                %s515 = sshrl.u32 %s138, 4
                %s516 = sand.u32 %s138, 15
                %s517 = smul.u32 %s515, 16
                %s518 = smul.u32 4, %s517
                %s519 = scalar_lea.vmem %s142, %s518
                %s520 = smul.u32 4, %s517
                %s521 = scalar_lea.vmem %s134, %s520 [#allocation2]
                // While loop
                $region80: #{simple_cnn_forward.3} parent=57 // loop_pre_header
                  _
                $region81: #{simple_cnn_forward.3} parent=57 // loop_header
                  %s523 = sphi 0, %s525
                  %p524 = scmp.ge.s32.totalorder %s523, %s516
                  %s528 = sphi 0, %s541
                  %s529 = sphi %s519, %s544
                  %s530 = sphi %s521, %s545
                $region82: #{simple_cnn_forward.3} parent=57 // loop_header_branch
                  %527 = sbr.rel (%p524) target = $region86
                $region83: #{simple_cnn_forward.3} parent=57 // loop_body
                  %v531 = vld [vmem:[%s529] sm:$0xf]
                  %532 = vst [vmem:[%s530] sm:$0xf] %v531
                  %v533 = vld [vmem:[%s529 + $0xc4] sm:$0xf]
                  %534 = vst [vmem:[%s530 + $0x80] sm:$0xf] %v533
                  %v535 = vld [vmem:[%s529 + $0x188] sm:$0xf]
                  %536 = vst [vmem:[%s530 + $0x100] sm:$0xf] %v535
                  %v537 = vld [vmem:[%s529 + $0x24c] sm:$0xf]
                  %538 = vst [vmem:[%s530 + $0x180] sm:$0xf] %v537
                  %s539 = sadd.s32 1, %s528
                  %p540 = scmp.ge.s32.totalorder %s539, %s516
                  %s541 = scalar_select %p540, 0, %s539
                  %s542 = smul.u32 %s541, 4
                  %s543 = smul.u32 %s541, 4
                  %s544 = scalar_lea.vmem %s519, %s542
                  %s545 = scalar_lea.vmem %s521, %s543 [#allocation2]
                $region84: #{simple_cnn_forward.3} parent=57 // loop_footer
                  %s525 = sadd.s32 %s523, 1
                $region85: #{simple_cnn_forward.3} parent=57 // loop_footer_branch
                  %522 = sbr.rel target = $region81
                $region86: #{simple_cnn_forward.3} parent=57 // loop_exit
                  _
              $region58: #{simple_cnn_forward.3} parent=35 // pred_fallthru
                _
            $region36: #{simple_cnn_forward.3} parent=31 // pred_fallthru
              _
            // Predicated region
            $region37: #{simple_cnn_forward.3} parent=31 // pred_check
              _
            $region38: #{simple_cnn_forward.3} parent=31 // pred_check_branch
              %149 = sbr.rel (0) target = $region40
            $region39: #{simple_cnn_forward.3} parent=31 // pred_region
              %s151 = sshrl.u32 %s138, 4
              // While loop
              $region41: #{simple_cnn_forward.3} parent=39 // loop_pre_header
                _
              $region42: #{simple_cnn_forward.3} parent=39 // loop_header
                %s153 = sphi 0, %s155
                %p154 = scmp.ge.s32.totalorder %s153, %s151
                %s158 = sphi 0, %s291
                %s159 = sphi %s142, %s294
                %s160 = sphi %s134, %s295
              $region43: #{simple_cnn_forward.3} parent=39 // loop_header_branch
                %157 = sbr.rel (%p154) target = $region47
              $region44: #{simple_cnn_forward.3} parent=39 // loop_body
                %v161 = vld [vmem:[%s159] sm:$0xf]
                %162 = vst [vmem:[%s160] sm:$0xf] %v161
                %v163 = vld [vmem:[%s159 + $0x4] sm:$0xf]
                %164 = vst [vmem:[%s160 + $0x4] sm:$0xf] %v163
                %v165 = vld [vmem:[%s159 + $0x8] sm:$0xf]
                %166 = vst [vmem:[%s160 + $0x8] sm:$0xf] %v165
                %v167 = vld [vmem:[%s159 + $0xc] sm:$0xf]
                %168 = vst [vmem:[%s160 + $0xc] sm:$0xf] %v167
                %v169 = vld [vmem:[%s159 + $0x10] sm:$0xf]
                %170 = vst [vmem:[%s160 + $0x10] sm:$0xf] %v169
                %v171 = vld [vmem:[%s159 + $0x14] sm:$0xf]
                %172 = vst [vmem:[%s160 + $0x14] sm:$0xf] %v171
                %v173 = vld [vmem:[%s159 + $0x18] sm:$0xf]
                %174 = vst [vmem:[%s160 + $0x18] sm:$0xf] %v173
                %v175 = vld [vmem:[%s159 + $0x1c] sm:$0xf]
                %176 = vst [vmem:[%s160 + $0x1c] sm:$0xf] %v175
                %v177 = vld [vmem:[%s159 + $0x20] sm:$0xf]
                %178 = vst [vmem:[%s160 + $0x20] sm:$0xf] %v177
                %v179 = vld [vmem:[%s159 + $0x24] sm:$0xf]
                %180 = vst [vmem:[%s160 + $0x24] sm:$0xf] %v179
                %v181 = vld [vmem:[%s159 + $0x28] sm:$0xf]
                %182 = vst [vmem:[%s160 + $0x28] sm:$0xf] %v181
                %v183 = vld [vmem:[%s159 + $0x2c] sm:$0xf]
                %184 = vst [vmem:[%s160 + $0x2c] sm:$0xf] %v183
                %v185 = vld [vmem:[%s159 + $0x30] sm:$0xf]
                %186 = vst [vmem:[%s160 + $0x30] sm:$0xf] %v185
                %v187 = vld [vmem:[%s159 + $0x34] sm:$0xf]
                %188 = vst [vmem:[%s160 + $0x34] sm:$0xf] %v187
                %v189 = vld [vmem:[%s159 + $0x38] sm:$0xf]
                %190 = vst [vmem:[%s160 + $0x38] sm:$0xf] %v189
                %v191 = vld [vmem:[%s159 + $0x3c] sm:$0xf]
                %192 = vst [vmem:[%s160 + $0x3c] sm:$0xf] %v191
                %v193 = vld [vmem:[%s159 + $0xc4] sm:$0xf]
                %194 = vst [vmem:[%s160 + $0x80] sm:$0xf] %v193
                %v195 = vld [vmem:[%s159 + $0xc8] sm:$0xf]
                %196 = vst [vmem:[%s160 + $0x84] sm:$0xf] %v195
                %v197 = vld [vmem:[%s159 + $0xcc] sm:$0xf]
                %198 = vst [vmem:[%s160 + $0x88] sm:$0xf] %v197
                %v199 = vld [vmem:[%s159 + $0xd0] sm:$0xf]
                %200 = vst [vmem:[%s160 + $0x8c] sm:$0xf] %v199
                %v201 = vld [vmem:[%s159 + $0xd4] sm:$0xf]
                %202 = vst [vmem:[%s160 + $0x90] sm:$0xf] %v201
                %v203 = vld [vmem:[%s159 + $0xd8] sm:$0xf]
                %204 = vst [vmem:[%s160 + $0x94] sm:$0xf] %v203
                %v205 = vld [vmem:[%s159 + $0xdc] sm:$0xf]
                %206 = vst [vmem:[%s160 + $0x98] sm:$0xf] %v205
                %v207 = vld [vmem:[%s159 + $0xe0] sm:$0xf]
                %208 = vst [vmem:[%s160 + $0x9c] sm:$0xf] %v207
                %v209 = vld [vmem:[%s159 + $0xe4] sm:$0xf]
                %210 = vst [vmem:[%s160 + $0xa0] sm:$0xf] %v209
                %v211 = vld [vmem:[%s159 + $0xe8] sm:$0xf]
                %212 = vst [vmem:[%s160 + $0xa4] sm:$0xf] %v211
                %v213 = vld [vmem:[%s159 + $0xec] sm:$0xf]
                %214 = vst [vmem:[%s160 + $0xa8] sm:$0xf] %v213
                %v215 = vld [vmem:[%s159 + $0xf0] sm:$0xf]
                %216 = vst [vmem:[%s160 + $0xac] sm:$0xf] %v215
                %v217 = vld [vmem:[%s159 + $0xf4] sm:$0xf]
                %218 = vst [vmem:[%s160 + $0xb0] sm:$0xf] %v217
                %v219 = vld [vmem:[%s159 + $0xf8] sm:$0xf]
                %220 = vst [vmem:[%s160 + $0xb4] sm:$0xf] %v219
                %v221 = vld [vmem:[%s159 + $0xfc] sm:$0xf]
                %222 = vst [vmem:[%s160 + $0xb8] sm:$0xf] %v221
                %v223 = vld [vmem:[%s159 + $0x100] sm:$0xf]
                %224 = vst [vmem:[%s160 + $0xbc] sm:$0xf] %v223
                %v225 = vld [vmem:[%s159 + $0x188] sm:$0xf]
                %226 = vst [vmem:[%s160 + $0x100] sm:$0xf] %v225
                %v227 = vld [vmem:[%s159 + $0x18c] sm:$0xf]
                %228 = vst [vmem:[%s160 + $0x104] sm:$0xf] %v227
                %v229 = vld [vmem:[%s159 + $0x190] sm:$0xf]
                %230 = vst [vmem:[%s160 + $0x108] sm:$0xf] %v229
                %v231 = vld [vmem:[%s159 + $0x194] sm:$0xf]
                %232 = vst [vmem:[%s160 + $0x10c] sm:$0xf] %v231
                %v233 = vld [vmem:[%s159 + $0x198] sm:$0xf]
                %234 = vst [vmem:[%s160 + $0x110] sm:$0xf] %v233
                %v235 = vld [vmem:[%s159 + $0x19c] sm:$0xf]
                %236 = vst [vmem:[%s160 + $0x114] sm:$0xf] %v235
                %v237 = vld [vmem:[%s159 + $0x1a0] sm:$0xf]
                %238 = vst [vmem:[%s160 + $0x118] sm:$0xf] %v237
                %v239 = vld [vmem:[%s159 + $0x1a4] sm:$0xf]
                %240 = vst [vmem:[%s160 + $0x11c] sm:$0xf] %v239
                %v241 = vld [vmem:[%s159 + $0x1a8] sm:$0xf]
                %242 = vst [vmem:[%s160 + $0x120] sm:$0xf] %v241
                %v243 = vld [vmem:[%s159 + $0x1ac] sm:$0xf]
                %244 = vst [vmem:[%s160 + $0x124] sm:$0xf] %v243
                %v245 = vld [vmem:[%s159 + $0x1b0] sm:$0xf]
                %246 = vst [vmem:[%s160 + $0x128] sm:$0xf] %v245
                %v247 = vld [vmem:[%s159 + $0x1b4] sm:$0xf]
                %248 = vst [vmem:[%s160 + $0x12c] sm:$0xf] %v247
                %v249 = vld [vmem:[%s159 + $0x1b8] sm:$0xf]
                %250 = vst [vmem:[%s160 + $0x130] sm:$0xf] %v249
                %v251 = vld [vmem:[%s159 + $0x1bc] sm:$0xf]
                %252 = vst [vmem:[%s160 + $0x134] sm:$0xf] %v251
                %v253 = vld [vmem:[%s159 + $0x1c0] sm:$0xf]
                %254 = vst [vmem:[%s160 + $0x138] sm:$0xf] %v253
                %v255 = vld [vmem:[%s159 + $0x1c4] sm:$0xf]
                %256 = vst [vmem:[%s160 + $0x13c] sm:$0xf] %v255
                %v257 = vld [vmem:[%s159 + $0x24c] sm:$0xf]
                %258 = vst [vmem:[%s160 + $0x180] sm:$0xf] %v257
                %v259 = vld [vmem:[%s159 + $0x250] sm:$0xf]
                %260 = vst [vmem:[%s160 + $0x184] sm:$0xf] %v259
                %v261 = vld [vmem:[%s159 + $0x254] sm:$0xf]
                %262 = vst [vmem:[%s160 + $0x188] sm:$0xf] %v261
                %v263 = vld [vmem:[%s159 + $0x258] sm:$0xf]
                %264 = vst [vmem:[%s160 + $0x18c] sm:$0xf] %v263
                %v265 = vld [vmem:[%s159 + $0x25c] sm:$0xf]
                %266 = vst [vmem:[%s160 + $0x190] sm:$0xf] %v265
                %v267 = vld [vmem:[%s159 + $0x260] sm:$0xf]
                %268 = vst [vmem:[%s160 + $0x194] sm:$0xf] %v267
                %v269 = vld [vmem:[%s159 + $0x264] sm:$0xf]
                %270 = vst [vmem:[%s160 + $0x198] sm:$0xf] %v269
                %v271 = vld [vmem:[%s159 + $0x268] sm:$0xf]
                %272 = vst [vmem:[%s160 + $0x19c] sm:$0xf] %v271
                %v273 = vld [vmem:[%s159 + $0x26c] sm:$0xf]
                %274 = vst [vmem:[%s160 + $0x1a0] sm:$0xf] %v273
                %v275 = vld [vmem:[%s159 + $0x270] sm:$0xf]
                %276 = vst [vmem:[%s160 + $0x1a4] sm:$0xf] %v275
                %v277 = vld [vmem:[%s159 + $0x274] sm:$0xf]
                %278 = vst [vmem:[%s160 + $0x1a8] sm:$0xf] %v277
                %v279 = vld [vmem:[%s159 + $0x278] sm:$0xf]
                %280 = vst [vmem:[%s160 + $0x1ac] sm:$0xf] %v279
                %v281 = vld [vmem:[%s159 + $0x27c] sm:$0xf]
                %282 = vst [vmem:[%s160 + $0x1b0] sm:$0xf] %v281
                %v283 = vld [vmem:[%s159 + $0x280] sm:$0xf]
                %284 = vst [vmem:[%s160 + $0x1b4] sm:$0xf] %v283
                %v285 = vld [vmem:[%s159 + $0x284] sm:$0xf]
                %286 = vst [vmem:[%s160 + $0x1b8] sm:$0xf] %v285
                %v287 = vld [vmem:[%s159 + $0x288] sm:$0xf]
                %288 = vst [vmem:[%s160 + $0x1bc] sm:$0xf] %v287
                %s289 = sadd.s32 1, %s158
                %p290 = scmp.ge.s32.totalorder %s289, %s151
                %s291 = scalar_select %p290, 0, %s289
                %s292 = smul.u32 %s291, 64
                %s293 = smul.u32 %s291, 64
                %s294 = scalar_lea.vmem %s142, %s292
                %s295 = scalar_lea.vmem %s134, %s293 [#allocation2]
              $region45: #{simple_cnn_forward.3} parent=39 // loop_footer
                %s155 = sadd.s32 %s153, 1
              $region46: #{simple_cnn_forward.3} parent=39 // loop_footer_branch
                %152 = sbr.rel target = $region42
              $region47: #{simple_cnn_forward.3} parent=39 // loop_exit
                _
              %s296 = sshrl.u32 %s138, 4
              %s297 = sand.u32 %s138, 15
              %s298 = smul.u32 %s296, 16
              %s299 = smul.u32 4, %s298
              %s300 = scalar_lea.vmem %s142, %s299
              %s301 = smul.u32 4, %s298
              %s302 = scalar_lea.vmem %s134, %s301 [#allocation2]
              // While loop
              $region48: #{simple_cnn_forward.3} parent=39 // loop_pre_header
                _
              $region49: #{simple_cnn_forward.3} parent=39 // loop_header
                %s304 = sphi 0, %s306
                %p305 = scmp.ge.s32.totalorder %s304, %s297
                %s309 = sphi 0, %s322
                %s310 = sphi %s300, %s325
                %s311 = sphi %s302, %s326
              $region50: #{simple_cnn_forward.3} parent=39 // loop_header_branch
                %308 = sbr.rel (%p305) target = $region54
              $region51: #{simple_cnn_forward.3} parent=39 // loop_body
                %v312 = vld [vmem:[%s310] sm:$0xf]
                %313 = vst [vmem:[%s311] sm:$0xf] %v312
                %v314 = vld [vmem:[%s310 + $0xc4] sm:$0xf]
                %315 = vst [vmem:[%s311 + $0x80] sm:$0xf] %v314
                %v316 = vld [vmem:[%s310 + $0x188] sm:$0xf]
                %317 = vst [vmem:[%s311 + $0x100] sm:$0xf] %v316
                %v318 = vld [vmem:[%s310 + $0x24c] sm:$0xf]
                %319 = vst [vmem:[%s311 + $0x180] sm:$0xf] %v318
                %s320 = sadd.s32 1, %s309
                %p321 = scmp.ge.s32.totalorder %s320, %s297
                %s322 = scalar_select %p321, 0, %s320
                %s323 = smul.u32 %s322, 4
                %s324 = smul.u32 %s322, 4
                %s325 = scalar_lea.vmem %s300, %s323
                %s326 = scalar_lea.vmem %s302, %s324 [#allocation2]
              $region52: #{simple_cnn_forward.3} parent=39 // loop_footer
                %s306 = sadd.s32 %s304, 1
              $region53: #{simple_cnn_forward.3} parent=39 // loop_footer_branch
                %303 = sbr.rel target = $region49
              $region54: #{simple_cnn_forward.3} parent=39 // loop_exit
                _
            $region40: #{simple_cnn_forward.3} parent=31 // pred_fallthru
              _
          $region32: #{simple_cnn_forward.3} parent=27 // pred_fallthru
            _
          %546 = vnop
        $region28: #{simple_cnn_forward.3} parent=23 // pred_fallthru
          _
      $region24: #{simple_cnn_forward.3} parent=5 // pred_fallthru
        _
      %p547 = scmp.le.s32.totalorder 1, %s9
      %p548 = scmp.lt.s32.totalorder %s9, 3
      %p549 = pnand %p547, %p548
      %p550 = pneg %p549
      // Predicated region
      $region87: #{simple_cnn_forward.3} parent=5 // pred_check
        _
      $region88: #{simple_cnn_forward.3} parent=5 // pred_check_branch
        %552 = sbr.rel (%p549) target = $region90
      $region89: #{simple_cnn_forward.3} parent=5 // pred_region
        %s553 = ssub.s32 %s9, 1
        %s554 = sand.u32 %s22, 1
        %s555 = sand.u32 %s22, 1
        %s556 = smul.addr %s555, 512
        %s557 = scalar_lea.vmem [#allocation2], %s556
        // Predicated region
        $region91: #{simple_cnn_forward.3} parent=89 // pred_check
          %p558 = pneg %p35
        $region92: #{simple_cnn_forward.3} parent=89 // pred_check_branch
          %560 = sbr.rel (%p558) target = $region94
        $region93: #{simple_cnn_forward.3} parent=89 // pred_region
          _
        $region94: #{simple_cnn_forward.3} parent=89 // pred_fallthru
          _
        %s561 = sand.u32 %s22, 1
        %s562 = sand.u32 %s22, 1
        %s563 = smul.addr %s562, 512
        %s564 = scalar_lea.vmem [#allocation2], %s563
        %p565 = pneg %p35
        %p566 = pneg %p32
        %p567 = pneg %p56
        %p568 = pneg %p53
        %p569 = pneg %p77
        %p570 = pneg %p74
        %p571 = pneg %p103
        %p572 = pneg %p100
        %s573 = sand.u32 %s90, 1
        %s574 = sand.u32 %s90, 1
        %s575 = smul.addr %s574, 128
        %s576 = scalar_lea.vmem [#allocation3], %s575
        %s577 = smul.u32 32, %s14
        %s578 = ssub.s32 49, %s577
        %p579 = scmp.lt.s32.totalorder %s578, 32
        %s580 = scalar_select %p579, %s578, 32
        %s581 = smul.u32 256, %s580
        %s582 = smul.u32 32, %s14
        %s583 = ssub.s32 49, %s582
        %p584 = scmp.lt.s32.totalorder %s583, 32
        %s585 = scalar_select %p584, %s583, 32
        %s586 = smul.u32 64, %s585
        %v588 = vld [vmem:[%s1] sm:$0xf]
        %v589 = vld [vmem:[%s1 + $0x4] sm:$0x1]
        %v590 = vld [vmem:[%s557] sm:$0xf]
        %v591 = vld [vmem:[%s557 + $0x4] sm:$0xf]
        %v592 = vld [vmem:[%s557 + $0x8] sm:$0xf]
        %v593 = vld [vmem:[%s557 + $0xc] sm:$0xf]
        %v594 = vld [vmem:[%s557 + $0x10] sm:$0xf]
        %v595 = vld [vmem:[%s557 + $0x14] sm:$0xf]
        %v596 = vld [vmem:[%s557 + $0x18] sm:$0xf]
        %v597 = vld [vmem:[%s557 + $0x1c] sm:$0xf]
        %v598 = vld [vmem:[%s557 + $0x20] sm:$0xf]
        %v599 = vld [vmem:[%s557 + $0x24] sm:$0xf]
        %v600 = vld [vmem:[%s557 + $0x28] sm:$0xf]
        %v601 = vld [vmem:[%s557 + $0x2c] sm:$0xf]
        %v602 = vld [vmem:[%s557 + $0x30] sm:$0xf]
        %v603 = vld [vmem:[%s557 + $0x34] sm:$0xf]
        %v604 = vld [vmem:[%s557 + $0x38] sm:$0xf]
        %v605 = vld [vmem:[%s557 + $0x3c] sm:$0xf]
        %v606 = vld [vmem:[%s557 + $0x40] sm:$0xf]
        %v607 = vld [vmem:[%s557 + $0x44] sm:$0xf]
        %v608 = vld [vmem:[%s557 + $0x48] sm:$0xf]
        %v609 = vld [vmem:[%s557 + $0x4c] sm:$0xf]
        %v610 = vld [vmem:[%s557 + $0x50] sm:$0xf]
        %v611 = vld [vmem:[%s557 + $0x54] sm:$0xf]
        %v612 = vld [vmem:[%s557 + $0x58] sm:$0xf]
        %v613 = vld [vmem:[%s557 + $0x5c] sm:$0xf]
        %v614 = vld [vmem:[%s557 + $0x60] sm:$0xf]
        %v615 = vld [vmem:[%s557 + $0x64] sm:$0xf]
        %v616 = vld [vmem:[%s557 + $0x68] sm:$0xf]
        %v617 = vld [vmem:[%s557 + $0x6c] sm:$0xf]
        %v618 = vld [vmem:[%s557 + $0x70] sm:$0xf]
        %v619 = vld [vmem:[%s557 + $0x74] sm:$0xf]
        %v620 = vld [vmem:[%s557 + $0x78] sm:$0xf]
        %v621 = vld [vmem:[%s557 + $0x7c] sm:$0xf]
        %v654 = vunpack.c.l.b16 %v590
        %v655 = vunpack.c.l.b16 %v591
        %v656 = vunpack.c.l.b16 %v592
        %v657 = vunpack.c.l.b16 %v593
        %v658 = vunpack.c.l.b16 %v594
        %v659 = vunpack.c.l.b16 %v595
        %v660 = vunpack.c.l.b16 %v596
        %v661 = vunpack.c.l.b16 %v597
        %v662 = vunpack.c.l.b16 %v598
        %v663 = vunpack.c.l.b16 %v599
        %v664 = vunpack.c.l.b16 %v600
        %v665 = vunpack.c.l.b16 %v601
        %v666 = vunpack.c.l.b16 %v602
        %v667 = vunpack.c.l.b16 %v603
        %v668 = vunpack.c.l.b16 %v604
        %v669 = vunpack.c.l.b16 %v605
        %v670 = vunpack.c.l.b16 %v606
        %v671 = vunpack.c.l.b16 %v607
        %v672 = vunpack.c.l.b16 %v608
        %v673 = vunpack.c.l.b16 %v609
        %v674 = vunpack.c.l.b16 %v610
        %v675 = vunpack.c.l.b16 %v611
        %v676 = vunpack.c.l.b16 %v612
        %v677 = vunpack.c.l.b16 %v613
        %v678 = vunpack.c.l.b16 %v614
        %v679 = vunpack.c.l.b16 %v615
        %v680 = vunpack.c.l.b16 %v616
        %v681 = vunpack.c.l.b16 %v617
        %v682 = vunpack.c.l.b16 %v618
        %v683 = vunpack.c.l.b16 %v619
        %v684 = vunpack.c.l.b16 %v620
        %v685 = vunpack.c.l.b16 %v621
        %v686 = vpack.c.b16 %v655, %v654
        %v687 = vpack.c.b16 %v657, %v656
        %v688 = vpack.c.b16 %v659, %v658
        %v689 = vpack.c.b16 %v661, %v660
        %v690 = vpack.c.b16 %v663, %v662
        %v691 = vpack.c.b16 %v665, %v664
        %v692 = vpack.c.b16 %v667, %v666
        %v693 = vpack.c.b16 %v669, %v668
        %v694 = vpack.c.b16 %v671, %v670
        %v695 = vpack.c.b16 %v673, %v672
        %v696 = vpack.c.b16 %v675, %v674
        %v697 = vpack.c.b16 %v677, %v676
        %v698 = vpack.c.b16 %v679, %v678
        %v699 = vpack.c.b16 %v681, %v680
        %v700 = vpack.c.b16 %v683, %v682
        %v701 = vpack.c.b16 %v685, %v684
        %v704 = vunpack.c.l.b16 %v588
        %v705 = vunpack.c.l.b16 %v589
        %v706 = vpack.c.b16 %v705, %v704
        %vm707 = vcmask 72704
        %v709 = vsel %vm707, %v686, 0
        %v712 = vsel %vm707, %v687, 0
        %v715 = vsel %vm707, %v688, 0
        %v718 = vsel %vm707, %v689, 0
        %v721 = vsel %vm707, %v690, 0
        %v724 = vsel %vm707, %v691, 0
        %v727 = vsel %vm707, %v692, 0
        %v730 = vsel %vm707, %v693, 0
        %v733 = vsel %vm707, %v694, 0
        %v736 = vsel %vm707, %v695, 0
        %v739 = vsel %vm707, %v696, 0
        %v742 = vsel %vm707, %v697, 0
        %v745 = vsel %vm707, %v698, 0
        %v748 = vsel %vm707, %v699, 0
        %v751 = vsel %vm707, %v700, 0
        %v754 = vsel %vm707, %v701, 0
        %vm756 = vcmask 1043456
        %vm757 = vcmask 1044480
        %v758 = vsel %vm756, 4294967295, 65535
        %v759 = vsel %vm757, %v758, 0
        %v761 = vand.u32 %v706, %v759
        %763 = vmatprep.subr.bf16.mxu0 0
        %764 = vmatpush1.bf16.msra.mxu0 %v761
        %765 = vmatprep.subr.bf16.mxu0 0
        %766 = vmatpush1.bf16.msra.mxu0 0
        %767 = vmatprep.subr.bf16.mxu0 0
        %768 = vmatpush1.bf16.msra.mxu0 0
        %769 = vmatprep.subr.bf16.mxu0 0
        %770 = vmatpush1.bf16.msra.mxu0 0
        %771 = vmatprep.subr.bf16.mxu0 0
        %772 = vmatpush1.bf16.msra.mxu0 0
        %773 = vmatprep.subr.bf16.mxu0 0
        %774 = vmatpush1.bf16.msra.mxu0 0
        %775 = vmatprep.subr.bf16.mxu0 0
        %776 = vmatpush1.bf16.msra.mxu0 0
        %777 = vmatprep.subr.bf16.mxu0 0
        %778 = vmatpush1.bf16.msra.mxu0 0
        %779 = vmatprep.subr.bf16.mxu0 0
        %780 = vmatpush1.bf16.msra.mxu0 0
        %781 = vmatprep.subr.bf16.mxu0 0
        %782 = vmatpush1.bf16.msra.mxu0 0
        %783 = vmatprep.subr.bf16.mxu0 0
        %784 = vmatpush1.bf16.msra.mxu0 0
        %785 = vmatprep.subr.bf16.mxu0 0
        %786 = vmatpush1.bf16.msra.mxu0 0
        %787 = vmatprep.subr.bf16.mxu0 0
        %788 = vmatpush1.bf16.msra.mxu0 0
        %789 = vmatprep.subr.bf16.mxu0 0
        %790 = vmatpush1.bf16.msra.mxu0 0
        %791 = vmatprep.subr.bf16.mxu0 0
        %792 = vmatpush1.bf16.msra.mxu0 0
        %793 = vmatprep.subr.bf16.mxu0 0
        %794 = vmatpush1.bf16.msra.mxu0 0
        %795 = vmatprep.mubr.bf16.mxu0 0
        %796 = vmatmul.mubr.bf16.gmra.mrb[0].mxu0 %v709
        %v797 = vpop.f32.mrb[0].mxu0
        %v798 = vadd.f32 0.0, %v797
        %v799 = vpop.f32.mrb[0].mxu0
        %v800 = vpop.f32.mrb[0].mxu0
        %v801 = vadd.f32 0.0, %v800
        %v802 = vpop.f32.mrb[0].mxu0
        %803 = vmatprep.mubr.bf16.mxu0 0
        %804 = vmatmul.mubr.bf16.gmra.mrb[0].mxu0 %v712
        %v805 = vpop.f32.mrb[0].mxu0
        %v806 = vadd.f32 0.0, %v805
        %v807 = vpop.f32.mrb[0].mxu0
        %v808 = vpop.f32.mrb[0].mxu0
        %v809 = vadd.f32 0.0, %v808
        %v810 = vpop.f32.mrb[0].mxu0
        %811 = vmatprep.mubr.bf16.mxu0 0
        %812 = vmatmul.mubr.bf16.gmra.mrb[0].mxu0 %v715
        %v813 = vpop.f32.mrb[0].mxu0
        %v814 = vadd.f32 0.0, %v813
        %v815 = vpop.f32.mrb[0].mxu0
        %v816 = vpop.f32.mrb[0].mxu0
        %v817 = vadd.f32 0.0, %v816
        %v818 = vpop.f32.mrb[0].mxu0
        %819 = vmatprep.mubr.bf16.mxu0 0
        %820 = vmatmul.mubr.bf16.gmra.mrb[0].mxu0 %v718
        %v821 = vpop.f32.mrb[0].mxu0
        %v822 = vadd.f32 0.0, %v821
        %v823 = vpop.f32.mrb[0].mxu0
        %v824 = vpop.f32.mrb[0].mxu0
        %v825 = vadd.f32 0.0, %v824
        %v826 = vpop.f32.mrb[0].mxu0
        %827 = vmatprep.mubr.bf16.mxu0 0
        %828 = vmatmul.mubr.bf16.gmra.mrb[0].mxu0 %v721
        %v829 = vpop.f32.mrb[0].mxu0
        %v830 = vadd.f32 0.0, %v829
        %v831 = vpop.f32.mrb[0].mxu0
        %v832 = vpop.f32.mrb[0].mxu0
        %v833 = vadd.f32 0.0, %v832
        %v834 = vpop.f32.mrb[0].mxu0
        %835 = vmatprep.mubr.bf16.mxu0 0
        %836 = vmatmul.mubr.bf16.gmra.mrb[0].mxu0 %v724
        %v837 = vpop.f32.mrb[0].mxu0
        %v838 = vadd.f32 0.0, %v837
        %v839 = vpop.f32.mrb[0].mxu0
        %v840 = vpop.f32.mrb[0].mxu0
        %v841 = vadd.f32 0.0, %v840
        %v842 = vpop.f32.mrb[0].mxu0
        %843 = vmatprep.mubr.bf16.mxu0 0
        %844 = vmatmul.mubr.bf16.gmra.mrb[0].mxu0 %v727
        %v845 = vpop.f32.mrb[0].mxu0
        %v846 = vadd.f32 0.0, %v845
        %v847 = vpop.f32.mrb[0].mxu0
        %v848 = vpop.f32.mrb[0].mxu0
        %v849 = vadd.f32 0.0, %v848
        %v850 = vpop.f32.mrb[0].mxu0
        %851 = vmatprep.mubr.bf16.mxu0 0
        %852 = vmatmul.mubr.bf16.gmra.mrb[0].mxu0 %v730
        %v853 = vpop.f32.mrb[0].mxu0
        %v854 = vadd.f32 0.0, %v853
        %v855 = vpop.f32.mrb[0].mxu0
        %v856 = vpop.f32.mrb[0].mxu0
        %v857 = vadd.f32 0.0, %v856
        %v858 = vpop.f32.mrb[0].mxu0
        %859 = vmatprep.mubr.bf16.mxu0 0
        %860 = vmatmul.mubr.bf16.gmra.mrb[0].mxu0 %v733
        %v861 = vpop.f32.mrb[0].mxu0
        %v862 = vadd.f32 0.0, %v861
        %v863 = vpop.f32.mrb[0].mxu0
        %v864 = vpop.f32.mrb[0].mxu0
        %v865 = vadd.f32 0.0, %v864
        %v866 = vpop.f32.mrb[0].mxu0
        %867 = vmatprep.mubr.bf16.mxu0 0
        %868 = vmatmul.mubr.bf16.gmra.mrb[0].mxu0 %v736
        %v869 = vpop.f32.mrb[0].mxu0
        %v870 = vadd.f32 0.0, %v869
        %v871 = vpop.f32.mrb[0].mxu0
        %v872 = vpop.f32.mrb[0].mxu0
        %v873 = vadd.f32 0.0, %v872
        %v874 = vpop.f32.mrb[0].mxu0
        %875 = vmatprep.mubr.bf16.mxu0 0
        %876 = vmatmul.mubr.bf16.gmra.mrb[0].mxu0 %v739
        %v877 = vpop.f32.mrb[0].mxu0
        %v878 = vadd.f32 0.0, %v877
        %v879 = vpop.f32.mrb[0].mxu0
        %v880 = vpop.f32.mrb[0].mxu0
        %v881 = vadd.f32 0.0, %v880
        %v882 = vpop.f32.mrb[0].mxu0
        %883 = vmatprep.mubr.bf16.mxu0 0
        %884 = vmatmul.mubr.bf16.gmra.mrb[0].mxu0 %v742
        %v885 = vpop.f32.mrb[0].mxu0
        %v886 = vadd.f32 0.0, %v885
        %v887 = vpop.f32.mrb[0].mxu0
        %v888 = vpop.f32.mrb[0].mxu0
        %v889 = vadd.f32 0.0, %v888
        %v890 = vpop.f32.mrb[0].mxu0
        %891 = vmatprep.mubr.bf16.mxu0 0
        %892 = vmatmul.mubr.bf16.gmra.mrb[0].mxu0 %v745
        %v893 = vpop.f32.mrb[0].mxu0
        %v894 = vadd.f32 0.0, %v893
        %v895 = vpop.f32.mrb[0].mxu0
        %v896 = vpop.f32.mrb[0].mxu0
        %v897 = vadd.f32 0.0, %v896
        %v898 = vpop.f32.mrb[0].mxu0
        %899 = vmatprep.mubr.bf16.mxu0 0
        %900 = vmatmul.mubr.bf16.gmra.mrb[0].mxu0 %v748
        %v901 = vpop.f32.mrb[0].mxu0
        %v902 = vadd.f32 0.0, %v901
        %v903 = vpop.f32.mrb[0].mxu0
        %v904 = vpop.f32.mrb[0].mxu0
        %v905 = vadd.f32 0.0, %v904
        %v906 = vpop.f32.mrb[0].mxu0
        %907 = vmatprep.mubr.bf16.mxu0 0
        %908 = vmatmul.mubr.bf16.gmra.mrb[0].mxu0 %v751
        %v909 = vpop.f32.mrb[0].mxu0
        %v910 = vadd.f32 0.0, %v909
        %v911 = vpop.f32.mrb[0].mxu0
        %v912 = vpop.f32.mrb[0].mxu0
        %v913 = vadd.f32 0.0, %v912
        %v914 = vpop.f32.mrb[0].mxu0
        %915 = vmatprep.mubr.bf16.mxu0 0
        %916 = vmatmul.mubr.bf16.gmra.mrb[0].mxu0 %v754
        %v917 = vpop.f32.mrb[0].mxu0
        %v918 = vadd.f32 0.0, %v917
        %v919 = vpop.f32.mrb[0].mxu0
        %v920 = vpop.f32.mrb[0].mxu0
        %v921 = vadd.f32 0.0, %v920
        %v922 = vpop.f32.mrb[0].mxu0
        %923 = vdwg.mxu0
        %s924 = scalar_lea.vmem %s557, 128 [#allocation2]
        %v925 = vld [vmem:[%s924] sm:$0xf]
        %v926 = vld [vmem:[%s924 + $0x4] sm:$0xf]
        %v927 = vld [vmem:[%s924 + $0x8] sm:$0xf]
        %v928 = vld [vmem:[%s924 + $0xc] sm:$0xf]
        %v929 = vld [vmem:[%s924 + $0x10] sm:$0xf]
        %v930 = vld [vmem:[%s924 + $0x14] sm:$0xf]
        %v931 = vld [vmem:[%s924 + $0x18] sm:$0xf]
        %v932 = vld [vmem:[%s924 + $0x1c] sm:$0xf]
        %v933 = vld [vmem:[%s924 + $0x20] sm:$0xf]
        %v934 = vld [vmem:[%s924 + $0x24] sm:$0xf]
        %v935 = vld [vmem:[%s924 + $0x28] sm:$0xf]
        %v936 = vld [vmem:[%s924 + $0x2c] sm:$0xf]
        %v937 = vld [vmem:[%s924 + $0x30] sm:$0xf]
        %v938 = vld [vmem:[%s924 + $0x34] sm:$0xf]
        %v939 = vld [vmem:[%s924 + $0x38] sm:$0xf]
        %v940 = vld [vmem:[%s924 + $0x3c] sm:$0xf]
        %v941 = vld [vmem:[%s924 + $0x40] sm:$0xf]
        %v942 = vld [vmem:[%s924 + $0x44] sm:$0xf]
        %v943 = vld [vmem:[%s924 + $0x48] sm:$0xf]
        %v944 = vld [vmem:[%s924 + $0x4c] sm:$0xf]
        %v945 = vld [vmem:[%s924 + $0x50] sm:$0xf]
        %v946 = vld [vmem:[%s924 + $0x54] sm:$0xf]
        %v947 = vld [vmem:[%s924 + $0x58] sm:$0xf]
        %v948 = vld [vmem:[%s924 + $0x5c] sm:$0xf]
        %v949 = vld [vmem:[%s924 + $0x60] sm:$0xf]
        %v950 = vld [vmem:[%s924 + $0x64] sm:$0xf]
        %v951 = vld [vmem:[%s924 + $0x68] sm:$0xf]
        %v952 = vld [vmem:[%s924 + $0x6c] sm:$0xf]
        %v953 = vld [vmem:[%s924 + $0x70] sm:$0xf]
        %v954 = vld [vmem:[%s924 + $0x74] sm:$0xf]
        %v955 = vld [vmem:[%s924 + $0x78] sm:$0xf]
        %v956 = vld [vmem:[%s924 + $0x7c] sm:$0xf]
        %v989 = vunpack.c.l.b16 %v925
        %v990 = vunpack.c.l.b16 %v926
        %v991 = vunpack.c.l.b16 %v927
        %v992 = vunpack.c.l.b16 %v928
        %v993 = vunpack.c.l.b16 %v929
        %v994 = vunpack.c.l.b16 %v930
        %v995 = vunpack.c.l.b16 %v931
        %v996 = vunpack.c.l.b16 %v932
        %v997 = vunpack.c.l.b16 %v933
        %v998 = vunpack.c.l.b16 %v934
        %v999 = vunpack.c.l.b16 %v935
        %v1000 = vunpack.c.l.b16 %v936
        %v1001 = vunpack.c.l.b16 %v937
        %v1002 = vunpack.c.l.b16 %v938
        %v1003 = vunpack.c.l.b16 %v939
        %v1004 = vunpack.c.l.b16 %v940
        %v1005 = vunpack.c.l.b16 %v941
        %v1006 = vunpack.c.l.b16 %v942
        %v1007 = vunpack.c.l.b16 %v943
        %v1008 = vunpack.c.l.b16 %v944
        %v1009 = vunpack.c.l.b16 %v945
        %v1010 = vunpack.c.l.b16 %v946
        %v1011 = vunpack.c.l.b16 %v947
        %v1012 = vunpack.c.l.b16 %v948
        %v1013 = vunpack.c.l.b16 %v949
        %v1014 = vunpack.c.l.b16 %v950
        %v1015 = vunpack.c.l.b16 %v951
        %v1016 = vunpack.c.l.b16 %v952
        %v1017 = vunpack.c.l.b16 %v953
        %v1018 = vunpack.c.l.b16 %v954
        %v1019 = vunpack.c.l.b16 %v955
        %v1020 = vunpack.c.l.b16 %v956
        %v1021 = vpack.c.b16 %v990, %v989
        %v1022 = vpack.c.b16 %v992, %v991
        %v1023 = vpack.c.b16 %v994, %v993
        %v1024 = vpack.c.b16 %v996, %v995
        %v1025 = vpack.c.b16 %v998, %v997
        %v1026 = vpack.c.b16 %v1000, %v999
        %v1027 = vpack.c.b16 %v1002, %v1001
        %v1028 = vpack.c.b16 %v1004, %v1003
        %v1029 = vpack.c.b16 %v1006, %v1005
        %v1030 = vpack.c.b16 %v1008, %v1007
        %v1031 = vpack.c.b16 %v1010, %v1009
        %v1032 = vpack.c.b16 %v1012, %v1011
        %v1033 = vpack.c.b16 %v1014, %v1013
        %v1034 = vpack.c.b16 %v1016, %v1015
        %v1035 = vpack.c.b16 %v1018, %v1017
        %v1036 = vpack.c.b16 %v1020, %v1019
        %v1038 = vsel %vm707, %v1021, 0
        %v1041 = vsel %vm707, %v1022, 0
        %v1044 = vsel %vm707, %v1023, 0
        %v1047 = vsel %vm707, %v1024, 0
        %v1050 = vsel %vm707, %v1025, 0
        %v1053 = vsel %vm707, %v1026, 0
        %v1056 = vsel %vm707, %v1027, 0
        %v1059 = vsel %vm707, %v1028, 0
        %v1062 = vsel %vm707, %v1029, 0
        %v1065 = vsel %vm707, %v1030, 0
        %v1068 = vsel %vm707, %v1031, 0
        %v1071 = vsel %vm707, %v1032, 0
        %v1074 = vsel %vm707, %v1033, 0
        %v1077 = vsel %vm707, %v1034, 0
        %v1080 = vsel %vm707, %v1035, 0
        %v1083 = vsel %vm707, %v1036, 0
        %1085 = vmatprep.subr.bf16.mxu0 0
        %1086 = vmatpush1.bf16.msra.mxu0 %v761
        %1087 = vmatprep.subr.bf16.mxu0 0
        %1088 = vmatpush1.bf16.msra.mxu0 0
        %1089 = vmatprep.subr.bf16.mxu0 0
        %1090 = vmatpush1.bf16.msra.mxu0 0
        %1091 = vmatprep.subr.bf16.mxu0 0
        %1092 = vmatpush1.bf16.msra.mxu0 0
        %1093 = vmatprep.subr.bf16.mxu0 0
        %1094 = vmatpush1.bf16.msra.mxu0 0
        %1095 = vmatprep.subr.bf16.mxu0 0
        %1096 = vmatpush1.bf16.msra.mxu0 0
        %1097 = vmatprep.subr.bf16.mxu0 0
        %1098 = vmatpush1.bf16.msra.mxu0 0
        %1099 = vmatprep.subr.bf16.mxu0 0
        %1100 = vmatpush1.bf16.msra.mxu0 0
        %1101 = vmatprep.subr.bf16.mxu0 0
        %1102 = vmatpush1.bf16.msra.mxu0 0
        %1103 = vmatprep.subr.bf16.mxu0 0
        %1104 = vmatpush1.bf16.msra.mxu0 0
        %1105 = vmatprep.subr.bf16.mxu0 0
        %1106 = vmatpush1.bf16.msra.mxu0 0
        %1107 = vmatprep.subr.bf16.mxu0 0
        %1108 = vmatpush1.bf16.msra.mxu0 0
        %1109 = vmatprep.subr.bf16.mxu0 0
        %1110 = vmatpush1.bf16.msra.mxu0 0
        %1111 = vmatprep.subr.bf16.mxu0 0
        %1112 = vmatpush1.bf16.msra.mxu0 0
        %1113 = vmatprep.subr.bf16.mxu0 0
        %1114 = vmatpush1.bf16.msra.mxu0 0
        %1115 = vmatprep.subr.bf16.mxu0 0
        %1116 = vmatpush1.bf16.msra.mxu0 0
        %1117 = vmatprep.mubr.bf16.mxu0 0
        %1118 = vmatmul.mubr.bf16.gmra.mrb[0].mxu0 %v1038
        %v1119 = vpop.f32.mrb[0].mxu0
        %v1120 = vadd.f32 0.0, %v1119
        %v1121 = vpop.f32.mrb[0].mxu0
        %v1122 = vpop.f32.mrb[0].mxu0
        %v1123 = vadd.f32 0.0, %v1122
        %v1124 = vpop.f32.mrb[0].mxu0
        %1125 = vmatprep.mubr.bf16.mxu0 0
        %1126 = vmatmul.mubr.bf16.gmra.mrb[0].mxu0 %v1041
        %v1127 = vpop.f32.mrb[0].mxu0
        %v1128 = vadd.f32 0.0, %v1127
        %v1129 = vpop.f32.mrb[0].mxu0
        %v1130 = vpop.f32.mrb[0].mxu0
        %v1131 = vadd.f32 0.0, %v1130
        %v1132 = vpop.f32.mrb[0].mxu0
        %1133 = vmatprep.mubr.bf16.mxu0 0
        %1134 = vmatmul.mubr.bf16.gmra.mrb[0].mxu0 %v1044
        %v1135 = vpop.f32.mrb[0].mxu0
        %v1136 = vadd.f32 0.0, %v1135
        %v1137 = vpop.f32.mrb[0].mxu0
        %v1138 = vpop.f32.mrb[0].mxu0
        %v1139 = vadd.f32 0.0, %v1138
        %v1140 = vpop.f32.mrb[0].mxu0
        %1141 = vmatprep.mubr.bf16.mxu0 0
        %1142 = vmatmul.mubr.bf16.gmra.mrb[0].mxu0 %v1047
        %v1143 = vpop.f32.mrb[0].mxu0
        %v1144 = vadd.f32 0.0, %v1143
        %v1145 = vpop.f32.mrb[0].mxu0
        %v1146 = vpop.f32.mrb[0].mxu0
        %v1147 = vadd.f32 0.0, %v1146
        %v1148 = vpop.f32.mrb[0].mxu0
        %1149 = vmatprep.mubr.bf16.mxu0 0
        %1150 = vmatmul.mubr.bf16.gmra.mrb[0].mxu0 %v1050
        %v1151 = vpop.f32.mrb[0].mxu0
        %v1152 = vadd.f32 0.0, %v1151
        %v1153 = vpop.f32.mrb[0].mxu0
        %v1154 = vpop.f32.mrb[0].mxu0
        %v1155 = vadd.f32 0.0, %v1154
        %v1156 = vpop.f32.mrb[0].mxu0
        %1157 = vmatprep.mubr.bf16.mxu0 0
        %1158 = vmatmul.mubr.bf16.gmra.mrb[0].mxu0 %v1053
        %v1159 = vpop.f32.mrb[0].mxu0
        %v1160 = vadd.f32 0.0, %v1159
        %v1161 = vpop.f32.mrb[0].mxu0
        %v1162 = vpop.f32.mrb[0].mxu0
        %v1163 = vadd.f32 0.0, %v1162
        %v1164 = vpop.f32.mrb[0].mxu0
        %1165 = vmatprep.mubr.bf16.mxu0 0
        %1166 = vmatmul.mubr.bf16.gmra.mrb[0].mxu0 %v1056
        %v1167 = vpop.f32.mrb[0].mxu0
        %v1168 = vadd.f32 0.0, %v1167
        %v1169 = vpop.f32.mrb[0].mxu0
        %v1170 = vpop.f32.mrb[0].mxu0
        %v1171 = vadd.f32 0.0, %v1170
        %v1172 = vpop.f32.mrb[0].mxu0
        %1173 = vmatprep.mubr.bf16.mxu0 0
        %1174 = vmatmul.mubr.bf16.gmra.mrb[0].mxu0 %v1059
        %v1175 = vpop.f32.mrb[0].mxu0
        %v1176 = vadd.f32 0.0, %v1175
        %v1177 = vpop.f32.mrb[0].mxu0
        %v1178 = vpop.f32.mrb[0].mxu0
        %v1179 = vadd.f32 0.0, %v1178
        %v1180 = vpop.f32.mrb[0].mxu0
        %1181 = vmatprep.mubr.bf16.mxu0 0
        %1182 = vmatmul.mubr.bf16.gmra.mrb[0].mxu0 %v1062
        %v1183 = vpop.f32.mrb[0].mxu0
        %v1184 = vadd.f32 0.0, %v1183
        %v1185 = vpop.f32.mrb[0].mxu0
        %v1186 = vpop.f32.mrb[0].mxu0
        %v1187 = vadd.f32 0.0, %v1186
        %v1188 = vpop.f32.mrb[0].mxu0
        %1189 = vmatprep.mubr.bf16.mxu0 0
        %1190 = vmatmul.mubr.bf16.gmra.mrb[0].mxu0 %v1065
        %v1191 = vpop.f32.mrb[0].mxu0
        %v1192 = vadd.f32 0.0, %v1191
        %v1193 = vpop.f32.mrb[0].mxu0
        %v1194 = vpop.f32.mrb[0].mxu0
        %v1195 = vadd.f32 0.0, %v1194
        %v1196 = vpop.f32.mrb[0].mxu0
        %1197 = vmatprep.mubr.bf16.mxu0 0
        %1198 = vmatmul.mubr.bf16.gmra.mrb[0].mxu0 %v1068
        %v1199 = vpop.f32.mrb[0].mxu0
        %v1200 = vadd.f32 0.0, %v1199
        %v1201 = vpop.f32.mrb[0].mxu0
        %v1202 = vpop.f32.mrb[0].mxu0
        %v1203 = vadd.f32 0.0, %v1202
        %v1204 = vpop.f32.mrb[0].mxu0
        %1205 = vmatprep.mubr.bf16.mxu0 0
        %1206 = vmatmul.mubr.bf16.gmra.mrb[0].mxu0 %v1071
        %v1207 = vpop.f32.mrb[0].mxu0
        %v1208 = vadd.f32 0.0, %v1207
        %v1209 = vpop.f32.mrb[0].mxu0
        %v1210 = vpop.f32.mrb[0].mxu0
        %v1211 = vadd.f32 0.0, %v1210
        %v1212 = vpop.f32.mrb[0].mxu0
        %1213 = vmatprep.mubr.bf16.mxu0 0
        %1214 = vmatmul.mubr.bf16.gmra.mrb[0].mxu0 %v1074
        %v1215 = vpop.f32.mrb[0].mxu0
        %v1216 = vadd.f32 0.0, %v1215
        %v1217 = vpop.f32.mrb[0].mxu0
        %v1218 = vpop.f32.mrb[0].mxu0
        %v1219 = vadd.f32 0.0, %v1218
        %v1220 = vpop.f32.mrb[0].mxu0
        %1221 = vmatprep.mubr.bf16.mxu0 0
        %1222 = vmatmul.mubr.bf16.gmra.mrb[0].mxu0 %v1077
        %v1223 = vpop.f32.mrb[0].mxu0
        %v1224 = vadd.f32 0.0, %v1223
        %v1225 = vpop.f32.mrb[0].mxu0
        %v1226 = vpop.f32.mrb[0].mxu0
        %v1227 = vadd.f32 0.0, %v1226
        %v1228 = vpop.f32.mrb[0].mxu0
        %1229 = vmatprep.mubr.bf16.mxu0 0
        %1230 = vmatmul.mubr.bf16.gmra.mrb[0].mxu0 %v1080
        %v1231 = vpop.f32.mrb[0].mxu0
        %v1232 = vadd.f32 0.0, %v1231
        %v1233 = vpop.f32.mrb[0].mxu0
        %v1234 = vpop.f32.mrb[0].mxu0
        %v1235 = vadd.f32 0.0, %v1234
        %v1236 = vpop.f32.mrb[0].mxu0
        %1237 = vmatprep.mubr.bf16.mxu0 0
        %1238 = vmatmul.mubr.bf16.gmra.mrb[0].mxu0 %v1083
        %v1239 = vpop.f32.mrb[0].mxu0
        %v1240 = vadd.f32 0.0, %v1239
        %v1241 = vpop.f32.mrb[0].mxu0
        %v1242 = vpop.f32.mrb[0].mxu0
        %v1243 = vadd.f32 0.0, %v1242
        %v1244 = vpop.f32.mrb[0].mxu0
        %1245 = vdwg.mxu0
        %v1246 = vmax.f32 %v798, %v1120
        %v1247 = vmax.f32 %v801, %v1123
        %v1248 = vmax.f32 %v806, %v1128
        %v1249 = vmax.f32 %v809, %v1131
        %v1250 = vmax.f32 %v814, %v1136
        %v1251 = vmax.f32 %v817, %v1139
        %v1252 = vmax.f32 %v822, %v1144
        %v1253 = vmax.f32 %v825, %v1147
        %v1254 = vmax.f32 %v830, %v1152
        %v1255 = vmax.f32 %v833, %v1155
        %v1256 = vmax.f32 %v838, %v1160
        %v1257 = vmax.f32 %v841, %v1163
        %v1258 = vmax.f32 %v846, %v1168
        %v1259 = vmax.f32 %v849, %v1171
        %v1260 = vmax.f32 %v854, %v1176
        %v1261 = vmax.f32 %v857, %v1179
        %v1262 = vmax.f32 %v862, %v1184
        %v1263 = vmax.f32 %v865, %v1187
        %v1264 = vmax.f32 %v870, %v1192
        %v1265 = vmax.f32 %v873, %v1195
        %v1266 = vmax.f32 %v878, %v1200
        %v1267 = vmax.f32 %v881, %v1203
        %v1268 = vmax.f32 %v886, %v1208
        %v1269 = vmax.f32 %v889, %v1211
        %v1270 = vmax.f32 %v894, %v1216
        %v1271 = vmax.f32 %v897, %v1219
        %v1272 = vmax.f32 %v902, %v1224
        %v1273 = vmax.f32 %v905, %v1227
        %v1274 = vmax.f32 %v910, %v1232
        %v1275 = vmax.f32 %v913, %v1235
        %v1276 = vmax.f32 %v918, %v1240
        %v1277 = vmax.f32 %v921, %v1243
        %s1278 = scalar_lea.vmem %s557, 256 [#allocation2]
        %v1279 = vld [vmem:[%s1278] sm:$0xf]
        %v1280 = vld [vmem:[%s1278 + $0x4] sm:$0xf]
        %v1281 = vld [vmem:[%s1278 + $0x8] sm:$0xf]
        %v1282 = vld [vmem:[%s1278 + $0xc] sm:$0xf]
        %v1283 = vld [vmem:[%s1278 + $0x10] sm:$0xf]
        %v1284 = vld [vmem:[%s1278 + $0x14] sm:$0xf]
        %v1285 = vld [vmem:[%s1278 + $0x18] sm:$0xf]
        %v1286 = vld [vmem:[%s1278 + $0x1c] sm:$0xf]
        %v1287 = vld [vmem:[%s1278 + $0x20] sm:$0xf]
        %v1288 = vld [vmem:[%s1278 + $0x24] sm:$0xf]
        %v1289 = vld [vmem:[%s1278 + $0x28] sm:$0xf]
        %v1290 = vld [vmem:[%s1278 + $0x2c] sm:$0xf]
        %v1291 = vld [vmem:[%s1278 + $0x30] sm:$0xf]
        %v1292 = vld [vmem:[%s1278 + $0x34] sm:$0xf]
        %v1293 = vld [vmem:[%s1278 + $0x38] sm:$0xf]
        %v1294 = vld [vmem:[%s1278 + $0x3c] sm:$0xf]
        %v1295 = vld [vmem:[%s1278 + $0x40] sm:$0xf]
        %v1296 = vld [vmem:[%s1278 + $0x44] sm:$0xf]
        %v1297 = vld [vmem:[%s1278 + $0x48] sm:$0xf]
        %v1298 = vld [vmem:[%s1278 + $0x4c] sm:$0xf]
        %v1299 = vld [vmem:[%s1278 + $0x50] sm:$0xf]
        %v1300 = vld [vmem:[%s1278 + $0x54] sm:$0xf]
        %v1301 = vld [vmem:[%s1278 + $0x58] sm:$0xf]
        %v1302 = vld [vmem:[%s1278 + $0x5c] sm:$0xf]
        %v1303 = vld [vmem:[%s1278 + $0x60] sm:$0xf]
        %v1304 = vld [vmem:[%s1278 + $0x64] sm:$0xf]
        %v1305 = vld [vmem:[%s1278 + $0x68] sm:$0xf]
        %v1306 = vld [vmem:[%s1278 + $0x6c] sm:$0xf]
        %v1307 = vld [vmem:[%s1278 + $0x70] sm:$0xf]
        %v1308 = vld [vmem:[%s1278 + $0x74] sm:$0xf]
        %v1309 = vld [vmem:[%s1278 + $0x78] sm:$0xf]
        %v1310 = vld [vmem:[%s1278 + $0x7c] sm:$0xf]
        %v1343 = vunpack.c.l.b16 %v1279
        %v1344 = vunpack.c.l.b16 %v1280
        %v1345 = vunpack.c.l.b16 %v1281
        %v1346 = vunpack.c.l.b16 %v1282
        %v1347 = vunpack.c.l.b16 %v1283
        %v1348 = vunpack.c.l.b16 %v1284
        %v1349 = vunpack.c.l.b16 %v1285
        %v1350 = vunpack.c.l.b16 %v1286
        %v1351 = vunpack.c.l.b16 %v1287
        %v1352 = vunpack.c.l.b16 %v1288
        %v1353 = vunpack.c.l.b16 %v1289
        %v1354 = vunpack.c.l.b16 %v1290
        %v1355 = vunpack.c.l.b16 %v1291
        %v1356 = vunpack.c.l.b16 %v1292
        %v1357 = vunpack.c.l.b16 %v1293
        %v1358 = vunpack.c.l.b16 %v1294
        %v1359 = vunpack.c.l.b16 %v1295
        %v1360 = vunpack.c.l.b16 %v1296
        %v1361 = vunpack.c.l.b16 %v1297
        %v1362 = vunpack.c.l.b16 %v1298
        %v1363 = vunpack.c.l.b16 %v1299
        %v1364 = vunpack.c.l.b16 %v1300
        %v1365 = vunpack.c.l.b16 %v1301
        %v1366 = vunpack.c.l.b16 %v1302
        %v1367 = vunpack.c.l.b16 %v1303
        %v1368 = vunpack.c.l.b16 %v1304
        %v1369 = vunpack.c.l.b16 %v1305
        %v1370 = vunpack.c.l.b16 %v1306
        %v1371 = vunpack.c.l.b16 %v1307
        %v1372 = vunpack.c.l.b16 %v1308
        %v1373 = vunpack.c.l.b16 %v1309
        %v1374 = vunpack.c.l.b16 %v1310
        %v1375 = vpack.c.b16 %v1344, %v1343
        %v1376 = vpack.c.b16 %v1346, %v1345
        %v1377 = vpack.c.b16 %v1348, %v1347
        %v1378 = vpack.c.b16 %v1350, %v1349
        %v1379 = vpack.c.b16 %v1352, %v1351
        %v1380 = vpack.c.b16 %v1354, %v1353
        %v1381 = vpack.c.b16 %v1356, %v1355
        %v1382 = vpack.c.b16 %v1358, %v1357
        %v1383 = vpack.c.b16 %v1360, %v1359
        %v1384 = vpack.c.b16 %v1362, %v1361
        %v1385 = vpack.c.b16 %v1364, %v1363
        %v1386 = vpack.c.b16 %v1366, %v1365
        %v1387 = vpack.c.b16 %v1368, %v1367
        %v1388 = vpack.c.b16 %v1370, %v1369
        %v1389 = vpack.c.b16 %v1372, %v1371
        %v1390 = vpack.c.b16 %v1374, %v1373
        %v1392 = vsel %vm707, %v1375, 0
        %v1395 = vsel %vm707, %v1376, 0
        %v1398 = vsel %vm707, %v1377, 0
        %v1401 = vsel %vm707, %v1378, 0
        %v1404 = vsel %vm707, %v1379, 0
        %v1407 = vsel %vm707, %v1380, 0
        %v1410 = vsel %vm707, %v1381, 0
        %v1413 = vsel %vm707, %v1382, 0
        %v1416 = vsel %vm707, %v1383, 0
        %v1419 = vsel %vm707, %v1384, 0
        %v1422 = vsel %vm707, %v1385, 0
        %v1425 = vsel %vm707, %v1386, 0
        %v1428 = vsel %vm707, %v1387, 0
        %v1431 = vsel %vm707, %v1388, 0
        %v1434 = vsel %vm707, %v1389, 0
        %v1437 = vsel %vm707, %v1390, 0
        %1439 = vmatprep.subr.bf16.mxu0 0
        %1440 = vmatpush1.bf16.msra.mxu0 %v761
        %1441 = vmatprep.subr.bf16.mxu0 0
        %1442 = vmatpush1.bf16.msra.mxu0 0
        %1443 = vmatprep.subr.bf16.mxu0 0
        %1444 = vmatpush1.bf16.msra.mxu0 0
        %1445 = vmatprep.subr.bf16.mxu0 0
        %1446 = vmatpush1.bf16.msra.mxu0 0
        %1447 = vmatprep.subr.bf16.mxu0 0
        %1448 = vmatpush1.bf16.msra.mxu0 0
        %1449 = vmatprep.subr.bf16.mxu0 0
        %1450 = vmatpush1.bf16.msra.mxu0 0
        %1451 = vmatprep.subr.bf16.mxu0 0
        %1452 = vmatpush1.bf16.msra.mxu0 0
        %1453 = vmatprep.subr.bf16.mxu0 0
        %1454 = vmatpush1.bf16.msra.mxu0 0
        %1455 = vmatprep.subr.bf16.mxu0 0
        %1456 = vmatpush1.bf16.msra.mxu0 0
        %1457 = vmatprep.subr.bf16.mxu0 0
        %1458 = vmatpush1.bf16.msra.mxu0 0
        %1459 = vmatprep.subr.bf16.mxu0 0
        %1460 = vmatpush1.bf16.msra.mxu0 0
        %1461 = vmatprep.subr.bf16.mxu0 0
        %1462 = vmatpush1.bf16.msra.mxu0 0
        %1463 = vmatprep.subr.bf16.mxu0 0
        %1464 = vmatpush1.bf16.msra.mxu0 0
        %1465 = vmatprep.subr.bf16.mxu0 0
        %1466 = vmatpush1.bf16.msra.mxu0 0
        %1467 = vmatprep.subr.bf16.mxu0 0
        %1468 = vmatpush1.bf16.msra.mxu0 0
        %1469 = vmatprep.subr.bf16.mxu0 0
        %1470 = vmatpush1.bf16.msra.mxu0 0
        %1471 = vmatprep.mubr.bf16.mxu0 0
        %1472 = vmatmul.mubr.bf16.gmra.mrb[0].mxu0 %v1392
        %v1473 = vpop.f32.mrb[0].mxu0
        %v1474 = vadd.f32 0.0, %v1473
        %v1475 = vpop.f32.mrb[0].mxu0
        %v1476 = vpop.f32.mrb[0].mxu0
        %v1477 = vadd.f32 0.0, %v1476
        %v1478 = vpop.f32.mrb[0].mxu0
        %1479 = vmatprep.mubr.bf16.mxu0 0
        %1480 = vmatmul.mubr.bf16.gmra.mrb[0].mxu0 %v1395
        %v1481 = vpop.f32.mrb[0].mxu0
        %v1482 = vadd.f32 0.0, %v1481
        %v1483 = vpop.f32.mrb[0].mxu0
        %v1484 = vpop.f32.mrb[0].mxu0
        %v1485 = vadd.f32 0.0, %v1484
        %v1486 = vpop.f32.mrb[0].mxu0
        %1487 = vmatprep.mubr.bf16.mxu0 0
        %1488 = vmatmul.mubr.bf16.gmra.mrb[0].mxu0 %v1398
        %v1489 = vpop.f32.mrb[0].mxu0
        %v1490 = vadd.f32 0.0, %v1489
        %v1491 = vpop.f32.mrb[0].mxu0
        %v1492 = vpop.f32.mrb[0].mxu0
        %v1493 = vadd.f32 0.0, %v1492
        %v1494 = vpop.f32.mrb[0].mxu0
        %1495 = vmatprep.mubr.bf16.mxu0 0
        %1496 = vmatmul.mubr.bf16.gmra.mrb[0].mxu0 %v1401
        %v1497 = vpop.f32.mrb[0].mxu0
        %v1498 = vadd.f32 0.0, %v1497
        %v1499 = vpop.f32.mrb[0].mxu0
        %v1500 = vpop.f32.mrb[0].mxu0
        %v1501 = vadd.f32 0.0, %v1500
        %v1502 = vpop.f32.mrb[0].mxu0
        %1503 = vmatprep.mubr.bf16.mxu0 0
        %1504 = vmatmul.mubr.bf16.gmra.mrb[0].mxu0 %v1404
        %v1505 = vpop.f32.mrb[0].mxu0
        %v1506 = vadd.f32 0.0, %v1505
        %v1507 = vpop.f32.mrb[0].mxu0
        %v1508 = vpop.f32.mrb[0].mxu0
        %v1509 = vadd.f32 0.0, %v1508
        %v1510 = vpop.f32.mrb[0].mxu0
        %1511 = vmatprep.mubr.bf16.mxu0 0
        %1512 = vmatmul.mubr.bf16.gmra.mrb[0].mxu0 %v1407
        %v1513 = vpop.f32.mrb[0].mxu0
        %v1514 = vadd.f32 0.0, %v1513
        %v1515 = vpop.f32.mrb[0].mxu0
        %v1516 = vpop.f32.mrb[0].mxu0
        %v1517 = vadd.f32 0.0, %v1516
        %v1518 = vpop.f32.mrb[0].mxu0
        %1519 = vmatprep.mubr.bf16.mxu0 0
        %1520 = vmatmul.mubr.bf16.gmra.mrb[0].mxu0 %v1410
        %v1521 = vpop.f32.mrb[0].mxu0
        %v1522 = vadd.f32 0.0, %v1521
        %v1523 = vpop.f32.mrb[0].mxu0
        %v1524 = vpop.f32.mrb[0].mxu0
        %v1525 = vadd.f32 0.0, %v1524
        %v1526 = vpop.f32.mrb[0].mxu0
        %1527 = vmatprep.mubr.bf16.mxu0 0
        %1528 = vmatmul.mubr.bf16.gmra.mrb[0].mxu0 %v1413
        %v1529 = vpop.f32.mrb[0].mxu0
        %v1530 = vadd.f32 0.0, %v1529
        %v1531 = vpop.f32.mrb[0].mxu0
        %v1532 = vpop.f32.mrb[0].mxu0
        %v1533 = vadd.f32 0.0, %v1532
        %v1534 = vpop.f32.mrb[0].mxu0
        %1535 = vmatprep.mubr.bf16.mxu0 0
        %1536 = vmatmul.mubr.bf16.gmra.mrb[0].mxu0 %v1416
        %v1537 = vpop.f32.mrb[0].mxu0
        %v1538 = vadd.f32 0.0, %v1537
        %v1539 = vpop.f32.mrb[0].mxu0
        %v1540 = vpop.f32.mrb[0].mxu0
        %v1541 = vadd.f32 0.0, %v1540
        %v1542 = vpop.f32.mrb[0].mxu0
        %1543 = vmatprep.mubr.bf16.mxu0 0
        %1544 = vmatmul.mubr.bf16.gmra.mrb[0].mxu0 %v1419
        %v1545 = vpop.f32.mrb[0].mxu0
        %v1546 = vadd.f32 0.0, %v1545
        %v1547 = vpop.f32.mrb[0].mxu0
        %v1548 = vpop.f32.mrb[0].mxu0
        %v1549 = vadd.f32 0.0, %v1548
        %v1550 = vpop.f32.mrb[0].mxu0
        %1551 = vmatprep.mubr.bf16.mxu0 0
        %1552 = vmatmul.mubr.bf16.gmra.mrb[0].mxu0 %v1422
        %v1553 = vpop.f32.mrb[0].mxu0
        %v1554 = vadd.f32 0.0, %v1553
        %v1555 = vpop.f32.mrb[0].mxu0
        %v1556 = vpop.f32.mrb[0].mxu0
        %v1557 = vadd.f32 0.0, %v1556
        %v1558 = vpop.f32.mrb[0].mxu0
        %1559 = vmatprep.mubr.bf16.mxu0 0
        %1560 = vmatmul.mubr.bf16.gmra.mrb[0].mxu0 %v1425
        %v1561 = vpop.f32.mrb[0].mxu0
        %v1562 = vadd.f32 0.0, %v1561
        %v1563 = vpop.f32.mrb[0].mxu0
        %v1564 = vpop.f32.mrb[0].mxu0
        %v1565 = vadd.f32 0.0, %v1564
        %v1566 = vpop.f32.mrb[0].mxu0
        %1567 = vmatprep.mubr.bf16.mxu0 0
        %1568 = vmatmul.mubr.bf16.gmra.mrb[0].mxu0 %v1428
        %v1569 = vpop.f32.mrb[0].mxu0
        %v1570 = vadd.f32 0.0, %v1569
        %v1571 = vpop.f32.mrb[0].mxu0
        %v1572 = vpop.f32.mrb[0].mxu0
        %v1573 = vadd.f32 0.0, %v1572
        %v1574 = vpop.f32.mrb[0].mxu0
        %1575 = vmatprep.mubr.bf16.mxu0 0
        %1576 = vmatmul.mubr.bf16.gmra.mrb[0].mxu0 %v1431
        %v1577 = vpop.f32.mrb[0].mxu0
        %v1578 = vadd.f32 0.0, %v1577
        %v1579 = vpop.f32.mrb[0].mxu0
        %v1580 = vpop.f32.mrb[0].mxu0
        %v1581 = vadd.f32 0.0, %v1580
        %v1582 = vpop.f32.mrb[0].mxu0
        %1583 = vmatprep.mubr.bf16.mxu0 0
        %1584 = vmatmul.mubr.bf16.gmra.mrb[0].mxu0 %v1434
        %v1585 = vpop.f32.mrb[0].mxu0
        %v1586 = vadd.f32 0.0, %v1585
        %v1587 = vpop.f32.mrb[0].mxu0
        %v1588 = vpop.f32.mrb[0].mxu0
        %v1589 = vadd.f32 0.0, %v1588
        %v1590 = vpop.f32.mrb[0].mxu0
        %1591 = vmatprep.mubr.bf16.mxu0 0
        %1592 = vmatmul.mubr.bf16.gmra.mrb[0].mxu0 %v1437
        %v1593 = vpop.f32.mrb[0].mxu0
        %v1594 = vadd.f32 0.0, %v1593
        %v1595 = vpop.f32.mrb[0].mxu0
        %v1596 = vpop.f32.mrb[0].mxu0
        %v1597 = vadd.f32 0.0, %v1596
        %v1598 = vpop.f32.mrb[0].mxu0
        %1599 = vdwg.mxu0
        %v1600 = vmax.f32 %v1246, %v1474
        %v1601 = vmax.f32 %v1247, %v1477
        %v1602 = vmax.f32 %v1248, %v1482
        %v1603 = vmax.f32 %v1249, %v1485
        %v1604 = vmax.f32 %v1250, %v1490
        %v1605 = vmax.f32 %v1251, %v1493
        %v1606 = vmax.f32 %v1252, %v1498
        %v1607 = vmax.f32 %v1253, %v1501
        %v1608 = vmax.f32 %v1254, %v1506
        %v1609 = vmax.f32 %v1255, %v1509
        %v1610 = vmax.f32 %v1256, %v1514
        %v1611 = vmax.f32 %v1257, %v1517
        %v1612 = vmax.f32 %v1258, %v1522
        %v1613 = vmax.f32 %v1259, %v1525
        %v1614 = vmax.f32 %v1260, %v1530
        %v1615 = vmax.f32 %v1261, %v1533
        %v1616 = vmax.f32 %v1262, %v1538
        %v1617 = vmax.f32 %v1263, %v1541
        %v1618 = vmax.f32 %v1264, %v1546
        %v1619 = vmax.f32 %v1265, %v1549
        %v1620 = vmax.f32 %v1266, %v1554
        %v1621 = vmax.f32 %v1267, %v1557
        %v1622 = vmax.f32 %v1268, %v1562
        %v1623 = vmax.f32 %v1269, %v1565
        %v1624 = vmax.f32 %v1270, %v1570
        %v1625 = vmax.f32 %v1271, %v1573
        %v1626 = vmax.f32 %v1272, %v1578
        %v1627 = vmax.f32 %v1273, %v1581
        %v1628 = vmax.f32 %v1274, %v1586
        %v1629 = vmax.f32 %v1275, %v1589
        %v1630 = vmax.f32 %v1276, %v1594
        %v1631 = vmax.f32 %v1277, %v1597
        %s1632 = scalar_lea.vmem %s557, 384 [#allocation2]
        %v1633 = vld [vmem:[%s1632] sm:$0xf]
        %v1634 = vld [vmem:[%s1632 + $0x4] sm:$0xf]
        %v1635 = vld [vmem:[%s1632 + $0x8] sm:$0xf]
        %v1636 = vld [vmem:[%s1632 + $0xc] sm:$0xf]
        %v1637 = vld [vmem:[%s1632 + $0x10] sm:$0xf]
        %v1638 = vld [vmem:[%s1632 + $0x14] sm:$0xf]
        %v1639 = vld [vmem:[%s1632 + $0x18] sm:$0xf]
        %v1640 = vld [vmem:[%s1632 + $0x1c] sm:$0xf]
        %v1641 = vld [vmem:[%s1632 + $0x20] sm:$0xf]
        %v1642 = vld [vmem:[%s1632 + $0x24] sm:$0xf]
        %v1643 = vld [vmem:[%s1632 + $0x28] sm:$0xf]
        %v1644 = vld [vmem:[%s1632 + $0x2c] sm:$0xf]
        %v1645 = vld [vmem:[%s1632 + $0x30] sm:$0xf]
        %v1646 = vld [vmem:[%s1632 + $0x34] sm:$0xf]
        %v1647 = vld [vmem:[%s1632 + $0x38] sm:$0xf]
        %v1648 = vld [vmem:[%s1632 + $0x3c] sm:$0xf]
        %v1649 = vld [vmem:[%s1632 + $0x40] sm:$0xf]
        %v1650 = vld [vmem:[%s1632 + $0x44] sm:$0xf]
        %v1651 = vld [vmem:[%s1632 + $0x48] sm:$0xf]
        %v1652 = vld [vmem:[%s1632 + $0x4c] sm:$0xf]
        %v1653 = vld [vmem:[%s1632 + $0x50] sm:$0xf]
        %v1654 = vld [vmem:[%s1632 + $0x54] sm:$0xf]
        %v1655 = vld [vmem:[%s1632 + $0x58] sm:$0xf]
        %v1656 = vld [vmem:[%s1632 + $0x5c] sm:$0xf]
        %v1657 = vld [vmem:[%s1632 + $0x60] sm:$0xf]
        %v1658 = vld [vmem:[%s1632 + $0x64] sm:$0xf]
        %v1659 = vld [vmem:[%s1632 + $0x68] sm:$0xf]
        %v1660 = vld [vmem:[%s1632 + $0x6c] sm:$0xf]
        %v1661 = vld [vmem:[%s1632 + $0x70] sm:$0xf]
        %v1662 = vld [vmem:[%s1632 + $0x74] sm:$0xf]
        %v1663 = vld [vmem:[%s1632 + $0x78] sm:$0xf]
        %v1664 = vld [vmem:[%s1632 + $0x7c] sm:$0xf]
        %v1697 = vunpack.c.l.b16 %v1633
        %v1698 = vunpack.c.l.b16 %v1634
        %v1699 = vunpack.c.l.b16 %v1635
        %v1700 = vunpack.c.l.b16 %v1636
        %v1701 = vunpack.c.l.b16 %v1637
        %v1702 = vunpack.c.l.b16 %v1638
        %v1703 = vunpack.c.l.b16 %v1639
        %v1704 = vunpack.c.l.b16 %v1640
        %v1705 = vunpack.c.l.b16 %v1641
        %v1706 = vunpack.c.l.b16 %v1642
        %v1707 = vunpack.c.l.b16 %v1643
        %v1708 = vunpack.c.l.b16 %v1644
        %v1709 = vunpack.c.l.b16 %v1645
        %v1710 = vunpack.c.l.b16 %v1646
        %v1711 = vunpack.c.l.b16 %v1647
        %v1712 = vunpack.c.l.b16 %v1648
        %v1713 = vunpack.c.l.b16 %v1649
        %v1714 = vunpack.c.l.b16 %v1650
        %v1715 = vunpack.c.l.b16 %v1651
        %v1716 = vunpack.c.l.b16 %v1652
        %v1717 = vunpack.c.l.b16 %v1653
        %v1718 = vunpack.c.l.b16 %v1654
        %v1719 = vunpack.c.l.b16 %v1655
        %v1720 = vunpack.c.l.b16 %v1656
        %v1721 = vunpack.c.l.b16 %v1657
        %v1722 = vunpack.c.l.b16 %v1658
        %v1723 = vunpack.c.l.b16 %v1659
        %v1724 = vunpack.c.l.b16 %v1660
        %v1725 = vunpack.c.l.b16 %v1661
        %v1726 = vunpack.c.l.b16 %v1662
        %v1727 = vunpack.c.l.b16 %v1663
        %v1728 = vunpack.c.l.b16 %v1664
        %v1729 = vpack.c.b16 %v1698, %v1697
        %v1730 = vpack.c.b16 %v1700, %v1699
        %v1731 = vpack.c.b16 %v1702, %v1701
        %v1732 = vpack.c.b16 %v1704, %v1703
        %v1733 = vpack.c.b16 %v1706, %v1705
        %v1734 = vpack.c.b16 %v1708, %v1707
        %v1735 = vpack.c.b16 %v1710, %v1709
        %v1736 = vpack.c.b16 %v1712, %v1711
        %v1737 = vpack.c.b16 %v1714, %v1713
        %v1738 = vpack.c.b16 %v1716, %v1715
        %v1739 = vpack.c.b16 %v1718, %v1717
        %v1740 = vpack.c.b16 %v1720, %v1719
        %v1741 = vpack.c.b16 %v1722, %v1721
        %v1742 = vpack.c.b16 %v1724, %v1723
        %v1743 = vpack.c.b16 %v1726, %v1725
        %v1744 = vpack.c.b16 %v1728, %v1727
        %v1746 = vsel %vm707, %v1729, 0
        %v1749 = vsel %vm707, %v1730, 0
        %v1752 = vsel %vm707, %v1731, 0
        %v1755 = vsel %vm707, %v1732, 0
        %v1758 = vsel %vm707, %v1733, 0
        %v1761 = vsel %vm707, %v1734, 0
        %v1764 = vsel %vm707, %v1735, 0
        %v1767 = vsel %vm707, %v1736, 0
        %v1770 = vsel %vm707, %v1737, 0
        %v1773 = vsel %vm707, %v1738, 0
        %v1776 = vsel %vm707, %v1739, 0
        %v1779 = vsel %vm707, %v1740, 0
        %v1782 = vsel %vm707, %v1741, 0
        %v1785 = vsel %vm707, %v1742, 0
        %v1788 = vsel %vm707, %v1743, 0
        %v1791 = vsel %vm707, %v1744, 0
        %1793 = vmatprep.subr.bf16.mxu0 0
        %1794 = vmatpush1.bf16.msra.mxu0 %v761
        %1795 = vmatprep.subr.bf16.mxu0 0
        %1796 = vmatpush1.bf16.msra.mxu0 0
        %1797 = vmatprep.subr.bf16.mxu0 0
        %1798 = vmatpush1.bf16.msra.mxu0 0
        %1799 = vmatprep.subr.bf16.mxu0 0
        %1800 = vmatpush1.bf16.msra.mxu0 0
        %1801 = vmatprep.subr.bf16.mxu0 0
        %1802 = vmatpush1.bf16.msra.mxu0 0
        %1803 = vmatprep.subr.bf16.mxu0 0
        %1804 = vmatpush1.bf16.msra.mxu0 0
        %1805 = vmatprep.subr.bf16.mxu0 0
        %1806 = vmatpush1.bf16.msra.mxu0 0
        %1807 = vmatprep.subr.bf16.mxu0 0
        %1808 = vmatpush1.bf16.msra.mxu0 0
        %1809 = vmatprep.subr.bf16.mxu0 0
        %1810 = vmatpush1.bf16.msra.mxu0 0
        %1811 = vmatprep.subr.bf16.mxu0 0
        %1812 = vmatpush1.bf16.msra.mxu0 0
        %1813 = vmatprep.subr.bf16.mxu0 0
        %1814 = vmatpush1.bf16.msra.mxu0 0
        %1815 = vmatprep.subr.bf16.mxu0 0
        %1816 = vmatpush1.bf16.msra.mxu0 0
        %1817 = vmatprep.subr.bf16.mxu0 0
        %1818 = vmatpush1.bf16.msra.mxu0 0
        %1819 = vmatprep.subr.bf16.mxu0 0
        %1820 = vmatpush1.bf16.msra.mxu0 0
        %1821 = vmatprep.subr.bf16.mxu0 0
        %1822 = vmatpush1.bf16.msra.mxu0 0
        %1823 = vmatprep.subr.bf16.mxu0 0
        %1824 = vmatpush1.bf16.msra.mxu0 0
        %1825 = vmatprep.mubr.bf16.mxu0 0
        %1826 = vmatmul.mubr.bf16.gmra.mrb[0].mxu0 %v1746
        %v1827 = vpop.f32.mrb[0].mxu0
        %v1828 = vadd.f32 0.0, %v1827
        %v1829 = vpop.f32.mrb[0].mxu0
        %v1830 = vpop.f32.mrb[0].mxu0
        %v1831 = vadd.f32 0.0, %v1830
        %v1832 = vpop.f32.mrb[0].mxu0
        %1833 = vmatprep.mubr.bf16.mxu0 0
        %1834 = vmatmul.mubr.bf16.gmra.mrb[0].mxu0 %v1749
        %v1835 = vpop.f32.mrb[0].mxu0
        %v1836 = vadd.f32 0.0, %v1835
        %v1837 = vpop.f32.mrb[0].mxu0
        %v1838 = vpop.f32.mrb[0].mxu0
        %v1839 = vadd.f32 0.0, %v1838
        %v1840 = vpop.f32.mrb[0].mxu0
        %1841 = vmatprep.mubr.bf16.mxu0 0
        %1842 = vmatmul.mubr.bf16.gmra.mrb[0].mxu0 %v1752
        %v1843 = vpop.f32.mrb[0].mxu0
        %v1844 = vadd.f32 0.0, %v1843
        %v1845 = vpop.f32.mrb[0].mxu0
        %v1846 = vpop.f32.mrb[0].mxu0
        %v1847 = vadd.f32 0.0, %v1846
        %v1848 = vpop.f32.mrb[0].mxu0
        %1849 = vmatprep.mubr.bf16.mxu0 0
        %1850 = vmatmul.mubr.bf16.gmra.mrb[0].mxu0 %v1755
        %v1851 = vpop.f32.mrb[0].mxu0
        %v1852 = vadd.f32 0.0, %v1851
        %v1853 = vpop.f32.mrb[0].mxu0
        %v1854 = vpop.f32.mrb[0].mxu0
        %v1855 = vadd.f32 0.0, %v1854
        %v1856 = vpop.f32.mrb[0].mxu0
        %1857 = vmatprep.mubr.bf16.mxu0 0
        %1858 = vmatmul.mubr.bf16.gmra.mrb[0].mxu0 %v1758
        %v1859 = vpop.f32.mrb[0].mxu0
        %v1860 = vadd.f32 0.0, %v1859
        %v1861 = vpop.f32.mrb[0].mxu0
        %v1862 = vpop.f32.mrb[0].mxu0
        %v1863 = vadd.f32 0.0, %v1862
        %v1864 = vpop.f32.mrb[0].mxu0
        %1865 = vmatprep.mubr.bf16.mxu0 0
        %1866 = vmatmul.mubr.bf16.gmra.mrb[0].mxu0 %v1761
        %v1867 = vpop.f32.mrb[0].mxu0
        %v1868 = vadd.f32 0.0, %v1867
        %v1869 = vpop.f32.mrb[0].mxu0
        %v1870 = vpop.f32.mrb[0].mxu0
        %v1871 = vadd.f32 0.0, %v1870
        %v1872 = vpop.f32.mrb[0].mxu0
        %1873 = vmatprep.mubr.bf16.mxu0 0
        %1874 = vmatmul.mubr.bf16.gmra.mrb[0].mxu0 %v1764
        %v1875 = vpop.f32.mrb[0].mxu0
        %v1876 = vadd.f32 0.0, %v1875
        %v1877 = vpop.f32.mrb[0].mxu0
        %v1878 = vpop.f32.mrb[0].mxu0
        %v1879 = vadd.f32 0.0, %v1878
        %v1880 = vpop.f32.mrb[0].mxu0
        %1881 = vmatprep.mubr.bf16.mxu0 0
        %1882 = vmatmul.mubr.bf16.gmra.mrb[0].mxu0 %v1767
        %v1883 = vpop.f32.mrb[0].mxu0
        %v1884 = vadd.f32 0.0, %v1883
        %v1885 = vpop.f32.mrb[0].mxu0
        %v1886 = vpop.f32.mrb[0].mxu0
        %v1887 = vadd.f32 0.0, %v1886
        %v1888 = vpop.f32.mrb[0].mxu0
        %1889 = vmatprep.mubr.bf16.mxu0 0
        %1890 = vmatmul.mubr.bf16.gmra.mrb[0].mxu0 %v1770
        %v1891 = vpop.f32.mrb[0].mxu0
        %v1892 = vadd.f32 0.0, %v1891
        %v1893 = vpop.f32.mrb[0].mxu0
        %v1894 = vpop.f32.mrb[0].mxu0
        %v1895 = vadd.f32 0.0, %v1894
        %v1896 = vpop.f32.mrb[0].mxu0
        %1897 = vmatprep.mubr.bf16.mxu0 0
        %1898 = vmatmul.mubr.bf16.gmra.mrb[0].mxu0 %v1773
        %v1899 = vpop.f32.mrb[0].mxu0
        %v1900 = vadd.f32 0.0, %v1899
        %v1901 = vpop.f32.mrb[0].mxu0
        %v1902 = vpop.f32.mrb[0].mxu0
        %v1903 = vadd.f32 0.0, %v1902
        %v1904 = vpop.f32.mrb[0].mxu0
        %1905 = vmatprep.mubr.bf16.mxu0 0
        %1906 = vmatmul.mubr.bf16.gmra.mrb[0].mxu0 %v1776
        %v1907 = vpop.f32.mrb[0].mxu0
        %v1908 = vadd.f32 0.0, %v1907
        %v1909 = vpop.f32.mrb[0].mxu0
        %v1910 = vpop.f32.mrb[0].mxu0
        %v1911 = vadd.f32 0.0, %v1910
        %v1912 = vpop.f32.mrb[0].mxu0
        %1913 = vmatprep.mubr.bf16.mxu0 0
        %1914 = vmatmul.mubr.bf16.gmra.mrb[0].mxu0 %v1779
        %v1915 = vpop.f32.mrb[0].mxu0
        %v1916 = vadd.f32 0.0, %v1915
        %v1917 = vpop.f32.mrb[0].mxu0
        %v1918 = vpop.f32.mrb[0].mxu0
        %v1919 = vadd.f32 0.0, %v1918
        %v1920 = vpop.f32.mrb[0].mxu0
        %1921 = vmatprep.mubr.bf16.mxu0 0
        %1922 = vmatmul.mubr.bf16.gmra.mrb[0].mxu0 %v1782
        %v1923 = vpop.f32.mrb[0].mxu0
        %v1924 = vadd.f32 0.0, %v1923
        %v1925 = vpop.f32.mrb[0].mxu0
        %v1926 = vpop.f32.mrb[0].mxu0
        %v1927 = vadd.f32 0.0, %v1926
        %v1928 = vpop.f32.mrb[0].mxu0
        %1929 = vmatprep.mubr.bf16.mxu0 0
        %1930 = vmatmul.mubr.bf16.gmra.mrb[0].mxu0 %v1785
        %v1931 = vpop.f32.mrb[0].mxu0
        %v1932 = vadd.f32 0.0, %v1931
        %v1933 = vpop.f32.mrb[0].mxu0
        %v1934 = vpop.f32.mrb[0].mxu0
        %v1935 = vadd.f32 0.0, %v1934
        %v1936 = vpop.f32.mrb[0].mxu0
        %1937 = vmatprep.mubr.bf16.mxu0 0
        %1938 = vmatmul.mubr.bf16.gmra.mrb[0].mxu0 %v1788
        %v1939 = vpop.f32.mrb[0].mxu0
        %v1940 = vadd.f32 0.0, %v1939
        %v1941 = vpop.f32.mrb[0].mxu0
        %v1942 = vpop.f32.mrb[0].mxu0
        %v1943 = vadd.f32 0.0, %v1942
        %v1944 = vpop.f32.mrb[0].mxu0
        %1945 = vmatprep.mubr.bf16.mxu0 0
        %1946 = vmatmul.mubr.bf16.gmra.mrb[0].mxu0 %v1791
        %v1947 = vpop.f32.mrb[0].mxu0
        %v1948 = vadd.f32 0.0, %v1947
        %v1949 = vpop.f32.mrb[0].mxu0
        %v1950 = vpop.f32.mrb[0].mxu0
        %v1951 = vadd.f32 0.0, %v1950
        %v1952 = vpop.f32.mrb[0].mxu0
        %1953 = vdwg.mxu0
        %v1954 = vmax.f32 %v1600, %v1828
        %v1955 = vmax.f32 %v1601, %v1831
        %v1956 = vmax.f32 %v1602, %v1836
        %v1957 = vmax.f32 %v1603, %v1839
        %v1958 = vmax.f32 %v1604, %v1844
        %v1959 = vmax.f32 %v1605, %v1847
        %v1960 = vmax.f32 %v1606, %v1852
        %v1961 = vmax.f32 %v1607, %v1855
        %v1962 = vmax.f32 %v1608, %v1860
        %v1963 = vmax.f32 %v1609, %v1863
        %v1964 = vmax.f32 %v1610, %v1868
        %v1965 = vmax.f32 %v1611, %v1871
        %v1966 = vmax.f32 %v1612, %v1876
        %v1967 = vmax.f32 %v1613, %v1879
        %v1968 = vmax.f32 %v1614, %v1884
        %v1969 = vmax.f32 %v1615, %v1887
        %v1970 = vmax.f32 %v1616, %v1892
        %v1971 = vmax.f32 %v1617, %v1895
        %v1972 = vmax.f32 %v1618, %v1900
        %v1973 = vmax.f32 %v1619, %v1903
        %v1974 = vmax.f32 %v1620, %v1908
        %v1975 = vmax.f32 %v1621, %v1911
        %v1976 = vmax.f32 %v1622, %v1916
        %v1977 = vmax.f32 %v1623, %v1919
        %v1978 = vmax.f32 %v1624, %v1924
        %v1979 = vmax.f32 %v1625, %v1927
        %v1980 = vmax.f32 %v1626, %v1932
        %v1981 = vmax.f32 %v1627, %v1935
        %v1982 = vmax.f32 %v1628, %v1940
        %v1983 = vmax.f32 %v1629, %v1943
        %v1984 = vmax.f32 %v1630, %v1948
        %v1985 = vmax.f32 %v1631, %v1951
        %v1986 = vld [vmem:[%s2] sm:$0x1]
        %v1988 = vlaneseq
        %v1989 = vshrl.u32 %v1988, 7
        %v1990 = vsub.s32 0, %v1989
        %v1991 = vrot.slane %v1986, %v1990
        %v1993 = vadd.f32 %v1954, %v1991
        %v1994 = vadd.f32 %v1955, %v1991
        %v1995 = vadd.f32 %v1956, %v1991
        %v1996 = vadd.f32 %v1957, %v1991
        %v1997 = vadd.f32 %v1958, %v1991
        %v1998 = vadd.f32 %v1959, %v1991
        %v1999 = vadd.f32 %v1960, %v1991
        %v2000 = vadd.f32 %v1961, %v1991
        %v2001 = vadd.f32 %v1962, %v1991
        %v2002 = vadd.f32 %v1963, %v1991
        %v2003 = vadd.f32 %v1964, %v1991
        %v2004 = vadd.f32 %v1965, %v1991
        %v2005 = vadd.f32 %v1966, %v1991
        %v2006 = vadd.f32 %v1967, %v1991
        %v2007 = vadd.f32 %v1968, %v1991
        %v2008 = vadd.f32 %v1969, %v1991
        %v2009 = vadd.f32 %v1970, %v1991
        %v2010 = vadd.f32 %v1971, %v1991
        %v2011 = vadd.f32 %v1972, %v1991
        %v2012 = vadd.f32 %v1973, %v1991
        %v2013 = vadd.f32 %v1974, %v1991
        %v2014 = vadd.f32 %v1975, %v1991
        %v2015 = vadd.f32 %v1976, %v1991
        %v2016 = vadd.f32 %v1977, %v1991
        %v2017 = vadd.f32 %v1978, %v1991
        %v2018 = vadd.f32 %v1979, %v1991
        %v2019 = vadd.f32 %v1980, %v1991
        %v2020 = vadd.f32 %v1981, %v1991
        %v2021 = vadd.f32 %v1982, %v1991
        %v2022 = vadd.f32 %v1983, %v1991
        %v2023 = vadd.f32 %v1984, %v1991
        %v2024 = vadd.f32 %v1985, %v1991
        %v2025 = vmax.f32 %v1993, 0.0
        %v2026 = vmax.f32 %v1994, 0.0
        %v2027 = vmax.f32 %v1995, 0.0
        %v2028 = vmax.f32 %v1996, 0.0
        %v2029 = vmax.f32 %v1997, 0.0
        %v2030 = vmax.f32 %v1998, 0.0
        %v2031 = vmax.f32 %v1999, 0.0
        %v2032 = vmax.f32 %v2000, 0.0
        %v2033 = vmax.f32 %v2001, 0.0
        %v2034 = vmax.f32 %v2002, 0.0
        %v2035 = vmax.f32 %v2003, 0.0
        %v2036 = vmax.f32 %v2004, 0.0
        %v2037 = vmax.f32 %v2005, 0.0
        %v2038 = vmax.f32 %v2006, 0.0
        %v2039 = vmax.f32 %v2007, 0.0
        %v2040 = vmax.f32 %v2008, 0.0
        %v2041 = vmax.f32 %v2009, 0.0
        %v2042 = vmax.f32 %v2010, 0.0
        %v2043 = vmax.f32 %v2011, 0.0
        %v2044 = vmax.f32 %v2012, 0.0
        %v2045 = vmax.f32 %v2013, 0.0
        %v2046 = vmax.f32 %v2014, 0.0
        %v2047 = vmax.f32 %v2015, 0.0
        %v2048 = vmax.f32 %v2016, 0.0
        %v2049 = vmax.f32 %v2017, 0.0
        %v2050 = vmax.f32 %v2018, 0.0
        %v2051 = vmax.f32 %v2019, 0.0
        %v2052 = vmax.f32 %v2020, 0.0
        %v2053 = vmax.f32 %v2021, 0.0
        %v2054 = vmax.f32 %v2022, 0.0
        %v2055 = vmax.f32 %v2023, 0.0
        %v2056 = vmax.f32 %v2024, 0.0
        %v2057 = vpack.c.bf16 %v2026, %v2025
        %v2058 = vpack.c.bf16 %v2028, %v2027
        %v2059 = vpack.c.bf16 %v2030, %v2029
        %v2060 = vpack.c.bf16 %v2032, %v2031
        %v2061 = vpack.c.bf16 %v2034, %v2033
        %v2062 = vpack.c.bf16 %v2036, %v2035
        %v2063 = vpack.c.bf16 %v2038, %v2037
        %v2064 = vpack.c.bf16 %v2040, %v2039
        %v2065 = vpack.c.bf16 %v2042, %v2041
        %v2066 = vpack.c.bf16 %v2044, %v2043
        %v2067 = vpack.c.bf16 %v2046, %v2045
        %v2068 = vpack.c.bf16 %v2048, %v2047
        %v2069 = vpack.c.bf16 %v2050, %v2049
        %v2070 = vpack.c.bf16 %v2052, %v2051
        %v2071 = vpack.c.bf16 %v2054, %v2053
        %v2072 = vpack.c.bf16 %v2056, %v2055
        %v2089 = vunpack.c.l.b16 %v2057
        %v2090 = vunpack.c.h.b16 %v2057
        %v2091 = vunpack.c.l.b16 %v2058
        %v2092 = vunpack.c.h.b16 %v2058
        %v2093 = vunpack.c.l.b16 %v2059
        %v2094 = vunpack.c.h.b16 %v2059
        %v2095 = vunpack.c.l.b16 %v2060
        %v2096 = vunpack.c.h.b16 %v2060
        %v2097 = vunpack.c.l.b16 %v2061
        %v2098 = vunpack.c.h.b16 %v2061
        %v2099 = vunpack.c.l.b16 %v2062
        %v2100 = vunpack.c.h.b16 %v2062
        %v2101 = vunpack.c.l.b16 %v2063
        %v2102 = vunpack.c.h.b16 %v2063
        %v2103 = vunpack.c.l.b16 %v2064
        %v2104 = vunpack.c.h.b16 %v2064
        %v2105 = vunpack.c.l.b16 %v2065
        %v2106 = vunpack.c.h.b16 %v2065
        %v2107 = vunpack.c.l.b16 %v2066
        %v2108 = vunpack.c.h.b16 %v2066
        %v2109 = vunpack.c.l.b16 %v2067
        %v2110 = vunpack.c.h.b16 %v2067
        %v2111 = vunpack.c.l.b16 %v2068
        %v2112 = vunpack.c.h.b16 %v2068
        %v2113 = vunpack.c.l.b16 %v2069
        %v2114 = vunpack.c.h.b16 %v2069
        %v2115 = vunpack.c.l.b16 %v2070
        %v2116 = vunpack.c.h.b16 %v2070
        %v2117 = vunpack.c.l.b16 %v2071
        %v2118 = vunpack.c.h.b16 %v2071
        %v2119 = vunpack.c.l.b16 %v2072
        %v2120 = vunpack.c.h.b16 %v2072
        %v2121 = vpack.c.b16 %v2089, %v2089
        %v2122 = vpack.c.b16 %v2090, %v2090
        %v2123 = vpack.c.b16 %v2091, %v2091
        %v2124 = vpack.c.b16 %v2092, %v2092
        %v2125 = vpack.c.b16 %v2093, %v2093
        %v2126 = vpack.c.b16 %v2094, %v2094
        %v2127 = vpack.c.b16 %v2095, %v2095
        %v2128 = vpack.c.b16 %v2096, %v2096
        %v2129 = vpack.c.b16 %v2097, %v2097
        %v2130 = vpack.c.b16 %v2098, %v2098
        %v2131 = vpack.c.b16 %v2099, %v2099
        %v2132 = vpack.c.b16 %v2100, %v2100
        %v2133 = vpack.c.b16 %v2101, %v2101
        %v2134 = vpack.c.b16 %v2102, %v2102
        %v2135 = vpack.c.b16 %v2103, %v2103
        %v2136 = vpack.c.b16 %v2104, %v2104
        %v2137 = vpack.c.b16 %v2105, %v2105
        %v2138 = vpack.c.b16 %v2106, %v2106
        %v2139 = vpack.c.b16 %v2107, %v2107
        %v2140 = vpack.c.b16 %v2108, %v2108
        %v2141 = vpack.c.b16 %v2109, %v2109
        %v2142 = vpack.c.b16 %v2110, %v2110
        %v2143 = vpack.c.b16 %v2111, %v2111
        %v2144 = vpack.c.b16 %v2112, %v2112
        %v2145 = vpack.c.b16 %v2113, %v2113
        %v2146 = vpack.c.b16 %v2114, %v2114
        %v2147 = vpack.c.b16 %v2115, %v2115
        %v2148 = vpack.c.b16 %v2116, %v2116
        %v2149 = vpack.c.b16 %v2117, %v2117
        %v2150 = vpack.c.b16 %v2118, %v2118
        %v2151 = vpack.c.b16 %v2119, %v2119
        %v2152 = vpack.c.b16 %v2120, %v2120
        %vm2185 = vcmask 257024
        %2186 = vst.msk [vmem:[%s576] sm:$0xf] %vm2185, %v2121
        %2187 = vst.msk [vmem:[%s576 + $0x4] sm:$0xf] %vm2185, %v2122
        %2188 = vst.msk [vmem:[%s576 + $0x8] sm:$0xf] %vm2185, %v2123
        %2189 = vst.msk [vmem:[%s576 + $0xc] sm:$0xf] %vm2185, %v2124
        %2190 = vst.msk [vmem:[%s576 + $0x10] sm:$0xf] %vm2185, %v2125
        %2191 = vst.msk [vmem:[%s576 + $0x14] sm:$0xf] %vm2185, %v2126
        %2192 = vst.msk [vmem:[%s576 + $0x18] sm:$0xf] %vm2185, %v2127
        %2193 = vst.msk [vmem:[%s576 + $0x1c] sm:$0xf] %vm2185, %v2128
        %2194 = vst.msk [vmem:[%s576 + $0x20] sm:$0xf] %vm2185, %v2129
        %2195 = vst.msk [vmem:[%s576 + $0x24] sm:$0xf] %vm2185, %v2130
        %2196 = vst.msk [vmem:[%s576 + $0x28] sm:$0xf] %vm2185, %v2131
        %2197 = vst.msk [vmem:[%s576 + $0x2c] sm:$0xf] %vm2185, %v2132
        %2198 = vst.msk [vmem:[%s576 + $0x30] sm:$0xf] %vm2185, %v2133
        %2199 = vst.msk [vmem:[%s576 + $0x34] sm:$0xf] %vm2185, %v2134
        %2200 = vst.msk [vmem:[%s576 + $0x38] sm:$0xf] %vm2185, %v2135
        %2201 = vst.msk [vmem:[%s576 + $0x3c] sm:$0xf] %vm2185, %v2136
        %2202 = vst.msk [vmem:[%s576 + $0x40] sm:$0xf] %vm2185, %v2137
        %2203 = vst.msk [vmem:[%s576 + $0x44] sm:$0xf] %vm2185, %v2138
        %2204 = vst.msk [vmem:[%s576 + $0x48] sm:$0xf] %vm2185, %v2139
        %2205 = vst.msk [vmem:[%s576 + $0x4c] sm:$0xf] %vm2185, %v2140
        %2206 = vst.msk [vmem:[%s576 + $0x50] sm:$0xf] %vm2185, %v2141
        %2207 = vst.msk [vmem:[%s576 + $0x54] sm:$0xf] %vm2185, %v2142
        %2208 = vst.msk [vmem:[%s576 + $0x58] sm:$0xf] %vm2185, %v2143
        %2209 = vst.msk [vmem:[%s576 + $0x5c] sm:$0xf] %vm2185, %v2144
        %2210 = vst.msk [vmem:[%s576 + $0x60] sm:$0xf] %vm2185, %v2145
        %2211 = vst.msk [vmem:[%s576 + $0x64] sm:$0xf] %vm2185, %v2146
        %2212 = vst.msk [vmem:[%s576 + $0x68] sm:$0xf] %vm2185, %v2147
        %2213 = vst.msk [vmem:[%s576 + $0x6c] sm:$0xf] %vm2185, %v2148
        %2214 = vst.msk [vmem:[%s576 + $0x70] sm:$0xf] %vm2185, %v2149
        %2215 = vst.msk [vmem:[%s576 + $0x74] sm:$0xf] %vm2185, %v2150
        %2216 = vst.msk [vmem:[%s576 + $0x78] sm:$0xf] %vm2185, %v2151
        %2217 = vst.msk [vmem:[%s576 + $0x7c] sm:$0xf] %vm2185, %v2152
        %s2218 = sand.u32 %s90, 1
        %s2219 = sand.u32 %s90, 1
        %s2220 = smul.addr %s2219, 128
        %s2221 = scalar_lea.vmem [#allocation3], %s2220
        // Predicated region
        $region95: #{simple_cnn_forward.3} parent=89 // pred_check
          %p2222 = pneg %p100
        $region96: #{simple_cnn_forward.3} parent=89 // pred_check_branch
          %2224 = sbr.rel (%p2222) target = $region98
        $region97: #{simple_cnn_forward.3} parent=89 // pred_region
          %s2225 = smul.u32 32, %s14
          %s2226 = ssub.s32 49, %s2225
          %p2227 = scmp.lt.s32.totalorder %s2226, 32
          %s2228 = scalar_select %p2227, %s2226, 32
          %s2229 = smul.u32 64, %s2228
          %p2230 = scmp.ne.s32.totalorder 0, %s2229
          %s2231 = smul.addr %s2225, 4
          %s2232 = scalar_lea.vmem %s3, %s2231
          // Predicated region
          $region99: #{simple_cnn_forward.3} parent=97 // pred_check
            %p2233 = pneg %p2230
          $region100: #{simple_cnn_forward.3} parent=97 // pred_check_branch
            %2235 = sbr.rel (%p2233) target = $region102
          $region101: #{simple_cnn_forward.3} parent=97 // pred_region
            // Predicated region
            $region103: #{simple_cnn_forward.3} parent=101 // pred_check
              _
            $region104: #{simple_cnn_forward.3} parent=101 // pred_check_branch
              %2237 = sbr.rel target = $region106
            $region105: #{simple_cnn_forward.3} parent=101 // pred_region
              // Predicated region
              $region125: #{simple_cnn_forward.3} parent=105 // pred_check
                _
              $region126: #{simple_cnn_forward.3} parent=105 // pred_check_branch
                %2348 = sbr.rel (0) target = $region128
              $region127: #{simple_cnn_forward.3} parent=105 // pred_region
                %s2350 = sshrl.u32 %s2228, 5
                // While loop
                $region129: #{simple_cnn_forward.3} parent=127 // loop_pre_header
                  _
                $region130: #{simple_cnn_forward.3} parent=127 // loop_header
                  %s2352 = sphi 0, %s2354
                  %p2353 = scmp.ge.s32.totalorder %s2352, %s2350
                  %s2357 = sphi 0, %s2426
                  %s2358 = sphi %s2221, %s2429
                  %s2359 = sphi %s2232, %s2430
                $region131: #{simple_cnn_forward.3} parent=127 // loop_header_branch
                  %2356 = sbr.rel (%p2353) target = $region135
                $region132: #{simple_cnn_forward.3} parent=127 // loop_body
                  %v2360 = vld [vmem:[%s2358] sm:$0xf]
                  %2361 = vst [vmem:[%s2359] sm:$0xf] %v2360
                  %v2362 = vld [vmem:[%s2358 + $0x4] sm:$0xf]
                  %2363 = vst [vmem:[%s2359 + $0x4] sm:$0xf] %v2362
                  %v2364 = vld [vmem:[%s2358 + $0x8] sm:$0xf]
                  %2365 = vst [vmem:[%s2359 + $0x8] sm:$0xf] %v2364
                  %v2366 = vld [vmem:[%s2358 + $0xc] sm:$0xf]
                  %2367 = vst [vmem:[%s2359 + $0xc] sm:$0xf] %v2366
                  %v2368 = vld [vmem:[%s2358 + $0x10] sm:$0xf]
                  %2369 = vst [vmem:[%s2359 + $0x10] sm:$0xf] %v2368
                  %v2370 = vld [vmem:[%s2358 + $0x14] sm:$0xf]
                  %2371 = vst [vmem:[%s2359 + $0x14] sm:$0xf] %v2370
                  %v2372 = vld [vmem:[%s2358 + $0x18] sm:$0xf]
                  %2373 = vst [vmem:[%s2359 + $0x18] sm:$0xf] %v2372
                  %v2374 = vld [vmem:[%s2358 + $0x1c] sm:$0xf]
                  %2375 = vst [vmem:[%s2359 + $0x1c] sm:$0xf] %v2374
                  %v2376 = vld [vmem:[%s2358 + $0x20] sm:$0xf]
                  %2377 = vst [vmem:[%s2359 + $0x20] sm:$0xf] %v2376
                  %v2378 = vld [vmem:[%s2358 + $0x24] sm:$0xf]
                  %2379 = vst [vmem:[%s2359 + $0x24] sm:$0xf] %v2378
                  %v2380 = vld [vmem:[%s2358 + $0x28] sm:$0xf]
                  %2381 = vst [vmem:[%s2359 + $0x28] sm:$0xf] %v2380
                  %v2382 = vld [vmem:[%s2358 + $0x2c] sm:$0xf]
                  %2383 = vst [vmem:[%s2359 + $0x2c] sm:$0xf] %v2382
                  %v2384 = vld [vmem:[%s2358 + $0x30] sm:$0xf]
                  %2385 = vst [vmem:[%s2359 + $0x30] sm:$0xf] %v2384
                  %v2386 = vld [vmem:[%s2358 + $0x34] sm:$0xf]
                  %2387 = vst [vmem:[%s2359 + $0x34] sm:$0xf] %v2386
                  %v2388 = vld [vmem:[%s2358 + $0x38] sm:$0xf]
                  %2389 = vst [vmem:[%s2359 + $0x38] sm:$0xf] %v2388
                  %v2390 = vld [vmem:[%s2358 + $0x3c] sm:$0xf]
                  %2391 = vst [vmem:[%s2359 + $0x3c] sm:$0xf] %v2390
                  %v2392 = vld [vmem:[%s2358 + $0x40] sm:$0xf]
                  %2393 = vst [vmem:[%s2359 + $0x40] sm:$0xf] %v2392
                  %v2394 = vld [vmem:[%s2358 + $0x44] sm:$0xf]
                  %2395 = vst [vmem:[%s2359 + $0x44] sm:$0xf] %v2394
                  %v2396 = vld [vmem:[%s2358 + $0x48] sm:$0xf]
                  %2397 = vst [vmem:[%s2359 + $0x48] sm:$0xf] %v2396
                  %v2398 = vld [vmem:[%s2358 + $0x4c] sm:$0xf]
                  %2399 = vst [vmem:[%s2359 + $0x4c] sm:$0xf] %v2398
                  %v2400 = vld [vmem:[%s2358 + $0x50] sm:$0xf]
                  %2401 = vst [vmem:[%s2359 + $0x50] sm:$0xf] %v2400
                  %v2402 = vld [vmem:[%s2358 + $0x54] sm:$0xf]
                  %2403 = vst [vmem:[%s2359 + $0x54] sm:$0xf] %v2402
                  %v2404 = vld [vmem:[%s2358 + $0x58] sm:$0xf]
                  %2405 = vst [vmem:[%s2359 + $0x58] sm:$0xf] %v2404
                  %v2406 = vld [vmem:[%s2358 + $0x5c] sm:$0xf]
                  %2407 = vst [vmem:[%s2359 + $0x5c] sm:$0xf] %v2406
                  %v2408 = vld [vmem:[%s2358 + $0x60] sm:$0xf]
                  %2409 = vst [vmem:[%s2359 + $0x60] sm:$0xf] %v2408
                  %v2410 = vld [vmem:[%s2358 + $0x64] sm:$0xf]
                  %2411 = vst [vmem:[%s2359 + $0x64] sm:$0xf] %v2410
                  %v2412 = vld [vmem:[%s2358 + $0x68] sm:$0xf]
                  %2413 = vst [vmem:[%s2359 + $0x68] sm:$0xf] %v2412
                  %v2414 = vld [vmem:[%s2358 + $0x6c] sm:$0xf]
                  %2415 = vst [vmem:[%s2359 + $0x6c] sm:$0xf] %v2414
                  %v2416 = vld [vmem:[%s2358 + $0x70] sm:$0xf]
                  %2417 = vst [vmem:[%s2359 + $0x70] sm:$0xf] %v2416
                  %v2418 = vld [vmem:[%s2358 + $0x74] sm:$0xf]
                  %2419 = vst [vmem:[%s2359 + $0x74] sm:$0xf] %v2418
                  %v2420 = vld [vmem:[%s2358 + $0x78] sm:$0xf]
                  %2421 = vst [vmem:[%s2359 + $0x78] sm:$0xf] %v2420
                  %v2422 = vld [vmem:[%s2358 + $0x7c] sm:$0xf]
                  %2423 = vst [vmem:[%s2359 + $0x7c] sm:$0xf] %v2422
                  %s2424 = sadd.s32 1, %s2357
                  %p2425 = scmp.ge.s32.totalorder %s2424, %s2350
                  %s2426 = scalar_select %p2425, 0, %s2424
                  %s2427 = smul.u32 %s2426, 128
                  %s2428 = smul.u32 %s2426, 128
                  %s2429 = scalar_lea.vmem %s2221, %s2427 [#allocation3]
                  %s2430 = scalar_lea.vmem %s2232, %s2428
                $region133: #{simple_cnn_forward.3} parent=127 // loop_footer
                  %s2354 = sadd.s32 %s2352, 1
                $region134: #{simple_cnn_forward.3} parent=127 // loop_footer_branch
                  %2351 = sbr.rel target = $region130
                $region135: #{simple_cnn_forward.3} parent=127 // loop_exit
                  _
                %s2431 = sshrl.u32 %s2228, 5
                %s2432 = sand.u32 %s2228, 31
                %s2433 = smul.u32 %s2431, 32
                %s2434 = smul.u32 4, %s2433
                %s2435 = scalar_lea.vmem %s2221, %s2434 [#allocation3]
                %s2436 = smul.u32 4, %s2433
                %s2437 = scalar_lea.vmem %s2232, %s2436
                // While loop
                $region136: #{simple_cnn_forward.3} parent=127 // loop_pre_header
                  _
                $region137: #{simple_cnn_forward.3} parent=127 // loop_header
                  %s2439 = sphi 0, %s2441
                  %p2440 = scmp.ge.s32.totalorder %s2439, %s2432
                  %s2444 = sphi 0, %s2451
                  %s2445 = sphi %s2435, %s2454
                  %s2446 = sphi %s2437, %s2455
                $region138: #{simple_cnn_forward.3} parent=127 // loop_header_branch
                  %2443 = sbr.rel (%p2440) target = $region142
                $region139: #{simple_cnn_forward.3} parent=127 // loop_body
                  %v2447 = vld [vmem:[%s2445] sm:$0xf]
                  %2448 = vst [vmem:[%s2446] sm:$0xf] %v2447
                  %s2449 = sadd.s32 1, %s2444
                  %p2450 = scmp.ge.s32.totalorder %s2449, %s2432
                  %s2451 = scalar_select %p2450, 0, %s2449
                  %s2452 = smul.u32 %s2451, 4
                  %s2453 = smul.u32 %s2451, 4
                  %s2454 = scalar_lea.vmem %s2435, %s2452 [#allocation3]
                  %s2455 = scalar_lea.vmem %s2437, %s2453
                $region140: #{simple_cnn_forward.3} parent=127 // loop_footer
                  %s2441 = sadd.s32 %s2439, 1
                $region141: #{simple_cnn_forward.3} parent=127 // loop_footer_branch
                  %2438 = sbr.rel target = $region137
                $region142: #{simple_cnn_forward.3} parent=127 // loop_exit
                  _
              $region128: #{simple_cnn_forward.3} parent=105 // pred_fallthru
                _
            $region106: #{simple_cnn_forward.3} parent=101 // pred_fallthru
              _
            // Predicated region
            $region107: #{simple_cnn_forward.3} parent=101 // pred_check
              _
            $region108: #{simple_cnn_forward.3} parent=101 // pred_check_branch
              %2239 = sbr.rel (0) target = $region110
            $region109: #{simple_cnn_forward.3} parent=101 // pred_region
              %s2241 = sshrl.u32 %s2228, 5
              // While loop
              $region111: #{simple_cnn_forward.3} parent=109 // loop_pre_header
                _
              $region112: #{simple_cnn_forward.3} parent=109 // loop_header
                %s2243 = sphi 0, %s2245
                %p2244 = scmp.ge.s32.totalorder %s2243, %s2241
                %s2248 = sphi 0, %s2317
                %s2249 = sphi %s2221, %s2320
                %s2250 = sphi %s2232, %s2321
              $region113: #{simple_cnn_forward.3} parent=109 // loop_header_branch
                %2247 = sbr.rel (%p2244) target = $region117
              $region114: #{simple_cnn_forward.3} parent=109 // loop_body
                %v2251 = vld [vmem:[%s2249] sm:$0xf]
                %2252 = vst [vmem:[%s2250] sm:$0xf] %v2251
                %v2253 = vld [vmem:[%s2249 + $0x4] sm:$0xf]
                %2254 = vst [vmem:[%s2250 + $0x4] sm:$0xf] %v2253
                %v2255 = vld [vmem:[%s2249 + $0x8] sm:$0xf]
                %2256 = vst [vmem:[%s2250 + $0x8] sm:$0xf] %v2255
                %v2257 = vld [vmem:[%s2249 + $0xc] sm:$0xf]
                %2258 = vst [vmem:[%s2250 + $0xc] sm:$0xf] %v2257
                %v2259 = vld [vmem:[%s2249 + $0x10] sm:$0xf]
                %2260 = vst [vmem:[%s2250 + $0x10] sm:$0xf] %v2259
                %v2261 = vld [vmem:[%s2249 + $0x14] sm:$0xf]
                %2262 = vst [vmem:[%s2250 + $0x14] sm:$0xf] %v2261
                %v2263 = vld [vmem:[%s2249 + $0x18] sm:$0xf]
                %2264 = vst [vmem:[%s2250 + $0x18] sm:$0xf] %v2263
                %v2265 = vld [vmem:[%s2249 + $0x1c] sm:$0xf]
                %2266 = vst [vmem:[%s2250 + $0x1c] sm:$0xf] %v2265
                %v2267 = vld [vmem:[%s2249 + $0x20] sm:$0xf]
                %2268 = vst [vmem:[%s2250 + $0x20] sm:$0xf] %v2267
                %v2269 = vld [vmem:[%s2249 + $0x24] sm:$0xf]
                %2270 = vst [vmem:[%s2250 + $0x24] sm:$0xf] %v2269
                %v2271 = vld [vmem:[%s2249 + $0x28] sm:$0xf]
                %2272 = vst [vmem:[%s2250 + $0x28] sm:$0xf] %v2271
                %v2273 = vld [vmem:[%s2249 + $0x2c] sm:$0xf]
                %2274 = vst [vmem:[%s2250 + $0x2c] sm:$0xf] %v2273
                %v2275 = vld [vmem:[%s2249 + $0x30] sm:$0xf]
                %2276 = vst [vmem:[%s2250 + $0x30] sm:$0xf] %v2275
                %v2277 = vld [vmem:[%s2249 + $0x34] sm:$0xf]
                %2278 = vst [vmem:[%s2250 + $0x34] sm:$0xf] %v2277
                %v2279 = vld [vmem:[%s2249 + $0x38] sm:$0xf]
                %2280 = vst [vmem:[%s2250 + $0x38] sm:$0xf] %v2279
                %v2281 = vld [vmem:[%s2249 + $0x3c] sm:$0xf]
                %2282 = vst [vmem:[%s2250 + $0x3c] sm:$0xf] %v2281
                %v2283 = vld [vmem:[%s2249 + $0x40] sm:$0xf]
                %2284 = vst [vmem:[%s2250 + $0x40] sm:$0xf] %v2283
                %v2285 = vld [vmem:[%s2249 + $0x44] sm:$0xf]
                %2286 = vst [vmem:[%s2250 + $0x44] sm:$0xf] %v2285
                %v2287 = vld [vmem:[%s2249 + $0x48] sm:$0xf]
                %2288 = vst [vmem:[%s2250 + $0x48] sm:$0xf] %v2287
                %v2289 = vld [vmem:[%s2249 + $0x4c] sm:$0xf]
                %2290 = vst [vmem:[%s2250 + $0x4c] sm:$0xf] %v2289
                %v2291 = vld [vmem:[%s2249 + $0x50] sm:$0xf]
                %2292 = vst [vmem:[%s2250 + $0x50] sm:$0xf] %v2291
                %v2293 = vld [vmem:[%s2249 + $0x54] sm:$0xf]
                %2294 = vst [vmem:[%s2250 + $0x54] sm:$0xf] %v2293
                %v2295 = vld [vmem:[%s2249 + $0x58] sm:$0xf]
                %2296 = vst [vmem:[%s2250 + $0x58] sm:$0xf] %v2295
                %v2297 = vld [vmem:[%s2249 + $0x5c] sm:$0xf]
                %2298 = vst [vmem:[%s2250 + $0x5c] sm:$0xf] %v2297
                %v2299 = vld [vmem:[%s2249 + $0x60] sm:$0xf]
                %2300 = vst [vmem:[%s2250 + $0x60] sm:$0xf] %v2299
                %v2301 = vld [vmem:[%s2249 + $0x64] sm:$0xf]
                %2302 = vst [vmem:[%s2250 + $0x64] sm:$0xf] %v2301
                %v2303 = vld [vmem:[%s2249 + $0x68] sm:$0xf]
                %2304 = vst [vmem:[%s2250 + $0x68] sm:$0xf] %v2303
                %v2305 = vld [vmem:[%s2249 + $0x6c] sm:$0xf]
                %2306 = vst [vmem:[%s2250 + $0x6c] sm:$0xf] %v2305
                %v2307 = vld [vmem:[%s2249 + $0x70] sm:$0xf]
                %2308 = vst [vmem:[%s2250 + $0x70] sm:$0xf] %v2307
                %v2309 = vld [vmem:[%s2249 + $0x74] sm:$0xf]
                %2310 = vst [vmem:[%s2250 + $0x74] sm:$0xf] %v2309
                %v2311 = vld [vmem:[%s2249 + $0x78] sm:$0xf]
                %2312 = vst [vmem:[%s2250 + $0x78] sm:$0xf] %v2311
                %v2313 = vld [vmem:[%s2249 + $0x7c] sm:$0xf]
                %2314 = vst [vmem:[%s2250 + $0x7c] sm:$0xf] %v2313
                %s2315 = sadd.s32 1, %s2248
                %p2316 = scmp.ge.s32.totalorder %s2315, %s2241
                %s2317 = scalar_select %p2316, 0, %s2315
                %s2318 = smul.u32 %s2317, 128
                %s2319 = smul.u32 %s2317, 128
                %s2320 = scalar_lea.vmem %s2221, %s2318 [#allocation3]
                %s2321 = scalar_lea.vmem %s2232, %s2319
              $region115: #{simple_cnn_forward.3} parent=109 // loop_footer
                %s2245 = sadd.s32 %s2243, 1
              $region116: #{simple_cnn_forward.3} parent=109 // loop_footer_branch
                %2242 = sbr.rel target = $region112
              $region117: #{simple_cnn_forward.3} parent=109 // loop_exit
                _
              %s2322 = sshrl.u32 %s2228, 5
              %s2323 = sand.u32 %s2228, 31
              %s2324 = smul.u32 %s2322, 32
              %s2325 = smul.u32 4, %s2324
              %s2326 = scalar_lea.vmem %s2221, %s2325 [#allocation3]
              %s2327 = smul.u32 4, %s2324
              %s2328 = scalar_lea.vmem %s2232, %s2327
              // While loop
              $region118: #{simple_cnn_forward.3} parent=109 // loop_pre_header
                _
              $region119: #{simple_cnn_forward.3} parent=109 // loop_header
                %s2330 = sphi 0, %s2332
                %p2331 = scmp.ge.s32.totalorder %s2330, %s2323
                %s2335 = sphi 0, %s2342
                %s2336 = sphi %s2326, %s2345
                %s2337 = sphi %s2328, %s2346
              $region120: #{simple_cnn_forward.3} parent=109 // loop_header_branch
                %2334 = sbr.rel (%p2331) target = $region124
              $region121: #{simple_cnn_forward.3} parent=109 // loop_body
                %v2338 = vld [vmem:[%s2336] sm:$0xf]
                %2339 = vst [vmem:[%s2337] sm:$0xf] %v2338
                %s2340 = sadd.s32 1, %s2335
                %p2341 = scmp.ge.s32.totalorder %s2340, %s2323
                %s2342 = scalar_select %p2341, 0, %s2340
                %s2343 = smul.u32 %s2342, 4
                %s2344 = smul.u32 %s2342, 4
                %s2345 = scalar_lea.vmem %s2326, %s2343 [#allocation3]
                %s2346 = scalar_lea.vmem %s2328, %s2344
              $region122: #{simple_cnn_forward.3} parent=109 // loop_footer
                %s2332 = sadd.s32 %s2330, 1
              $region123: #{simple_cnn_forward.3} parent=109 // loop_footer_branch
                %2329 = sbr.rel target = $region119
              $region124: #{simple_cnn_forward.3} parent=109 // loop_exit
                _
            $region110: #{simple_cnn_forward.3} parent=101 // pred_fallthru
              _
          $region102: #{simple_cnn_forward.3} parent=97 // pred_fallthru
            _
          %2456 = vnop
        $region98: #{simple_cnn_forward.3} parent=89 // pred_fallthru
          _
      $region90: #{simple_cnn_forward.3} parent=5 // pred_fallthru
        _
      %p2457 = scmp.le.s32.totalorder 2, %s9
      // Predicated region
      $region143: #{simple_cnn_forward.3} parent=5 // pred_check
        %p2458 = pneg %p2457
      $region144: #{simple_cnn_forward.3} parent=5 // pred_check_branch
        %2460 = sbr.rel (%p2458) target = $region146
      $region145: #{simple_cnn_forward.3} parent=5 // pred_region
        %s2461 = ssub.s32 %s9, 2
        // Predicated region
        $region147: #{simple_cnn_forward.3} parent=145 // pred_check
          %p2462 = pneg %p106
        $region148: #{simple_cnn_forward.3} parent=145 // pred_check_branch
          %2464 = sbr.rel (%p2462) target = $region150
        $region149: #{simple_cnn_forward.3} parent=145 // pred_region
          %s2465 = sand.u32 %s91, 1
          %s2466 = sand.u32 %s91, 1
          %s2467 = smul.addr %s2466, 128
          %s2468 = scalar_lea.vmem [#allocation3], %s2467
        $region150: #{simple_cnn_forward.3} parent=145 // pred_fallthru
          _
      $region146: #{simple_cnn_forward.3} parent=5 // pred_fallthru
        _
    $region6: #{simple_cnn_forward.3} parent=1 // loop_footer
      %s13 = sadd.s32 1, %s9
    $region7: #{simple_cnn_forward.3} parent=1 // loop_footer_branch
      %8 = sbr.rel target = $region3
    $region8: #{simple_cnn_forward.3} parent=1 // loop_exit
      _

// kernel: simple_cnn_forward.4
$region0: #{simple_cnn_forward.4}
  #allocation0 [shape = 'u32[]', space=smem, size = 0x4, offset = 0x4, fixed_abs, tag = 'smem constant byte address 0x4 - core index']
  #allocation1 [shape = 'u32[144,128]{1,0:T(1,128)}', space=vmem, size = 0x12000, scoped, tag = 'internal scratch']
  %s0 = inlined_call_operand.vmem [shape: bf16[4,98,288], index: 0, kind: input, shape index: {}]
  %s1 = inlined_call_operand.vmem [shape: bf16[288,64], index: 1, kind: input, shape index: {}]
  %s2 = inlined_call_operand.vmem [shape: f32[1,64], index: 2, kind: input, shape index: {}]
  %s3 = inlined_call_operand.vmem [shape: bf16[98,64], index: 3, kind: output, shape index: {}]
  %s4 = sld [smem:[#allocation0]]
  $region22: #{simple_cnn_forward.4} parent=0
    _
  %s6 = ssub.s32 1, %s4
  %s7 = scalar_select 0, %s6, %s4
  // Predicated region
  $region2: #{simple_cnn_forward.4} parent=0 // pred_check
    _
  $region3: #{simple_cnn_forward.4} parent=0 // pred_check_branch
    %9 = sbr.rel (0) target = $region5
  $region4: #{simple_cnn_forward.4} parent=0 // pred_region
    _
  $region5: #{simple_cnn_forward.4} parent=0 // pred_fallthru
    _
  // Predicated region
  $region6: #{simple_cnn_forward.4} parent=0 // pred_check
    _
  $region7: #{simple_cnn_forward.4} parent=0 // pred_check_branch
    %11 = sbr.rel (0) target = $region9
  $region8: #{simple_cnn_forward.4} parent=0 // pred_region
    _
  $region9: #{simple_cnn_forward.4} parent=0 // pred_fallthru
    _
  // Predicated region
  $region10: #{simple_cnn_forward.4} parent=0 // pred_check
    _
  $region11: #{simple_cnn_forward.4} parent=0 // pred_check_branch
    %13 = sbr.rel (0) target = $region13
  $region12: #{simple_cnn_forward.4} parent=0 // pred_region
    _
  $region13: #{simple_cnn_forward.4} parent=0 // pred_fallthru
    _
  %v15 = vld [vmem:[%s1] sm:$0xf]
  %v16 = vld [vmem:[%s1 + $0x4] sm:$0xf]
  %v17 = vld [vmem:[%s1 + $0x8] sm:$0xf]
  %v18 = vld [vmem:[%s1 + $0xc] sm:$0xf]
  %v19 = vld [vmem:[%s1 + $0x10] sm:$0xf]
  %v20 = vld [vmem:[%s1 + $0x14] sm:$0xf]
  %v21 = vld [vmem:[%s1 + $0x18] sm:$0xf]
  %v22 = vld [vmem:[%s1 + $0x1c] sm:$0xf]
  %v23 = vld [vmem:[%s1 + $0x20] sm:$0xf]
  %v24 = vld [vmem:[%s1 + $0x24] sm:$0xf]
  %v25 = vld [vmem:[%s1 + $0x28] sm:$0xf]
  %v26 = vld [vmem:[%s1 + $0x2c] sm:$0xf]
  %v27 = vld [vmem:[%s1 + $0x30] sm:$0xf]
  %v28 = vld [vmem:[%s1 + $0x34] sm:$0xf]
  %v29 = vld [vmem:[%s1 + $0x38] sm:$0xf]
  %v30 = vld [vmem:[%s1 + $0x3c] sm:$0xf]
  %v31 = vld [vmem:[%s1 + $0x40] sm:$0xf]
  %v32 = vld [vmem:[%s1 + $0x44] sm:$0xf]
  %v33 = vld [vmem:[%s1 + $0x48] sm:$0xf]
  %v34 = vld [vmem:[%s1 + $0x4c] sm:$0xf]
  %v35 = vld [vmem:[%s1 + $0x50] sm:$0xf]
  %v36 = vld [vmem:[%s1 + $0x54] sm:$0xf]
  %v37 = vld [vmem:[%s1 + $0x58] sm:$0xf]
  %v38 = vld [vmem:[%s1 + $0x5c] sm:$0xf]
  %v39 = vld [vmem:[%s1 + $0x60] sm:$0xf]
  %v40 = vld [vmem:[%s1 + $0x64] sm:$0xf]
  %v41 = vld [vmem:[%s1 + $0x68] sm:$0xf]
  %v42 = vld [vmem:[%s1 + $0x6c] sm:$0xf]
  %v43 = vld [vmem:[%s1 + $0x70] sm:$0xf]
  %v44 = vld [vmem:[%s1 + $0x74] sm:$0xf]
  %v45 = vld [vmem:[%s1 + $0x78] sm:$0xf]
  %v46 = vld [vmem:[%s1 + $0x7c] sm:$0xf]
  %v47 = vld [vmem:[%s1 + $0x80] sm:$0xf]
  %v48 = vld [vmem:[%s1 + $0x84] sm:$0xf]
  %v49 = vld [vmem:[%s1 + $0x88] sm:$0xf]
  %v50 = vld [vmem:[%s1 + $0x8c] sm:$0xf]
  %v51 = vld [vmem:[%s0] sm:$0xff]
  %v52 = vld [vmem:[%s0 + $0x8] sm:$0xf]
  %v53 = vld [vmem:[%s0 + $0xc] sm:$0xff]
  %v54 = vld [vmem:[%s0 + $0x14] sm:$0xf]
  %v55 = vld [vmem:[%s0 + $0x18] sm:$0xff]
  %v56 = vld [vmem:[%s0 + $0x20] sm:$0xf]
  %v57 = vld [vmem:[%s0 + $0x24] sm:$0xff]
  %v58 = vld [vmem:[%s0 + $0x2c] sm:$0xf]
  %v59 = vld [vmem:[%s0 + $0x30] sm:$0xff]
  %v60 = vld [vmem:[%s0 + $0x38] sm:$0xf]
  %v61 = vld [vmem:[%s0 + $0x3c] sm:$0xff]
  %v62 = vld [vmem:[%s0 + $0x44] sm:$0xf]
  %v63 = vld [vmem:[%s0 + $0x48] sm:$0xff]
  %v64 = vld [vmem:[%s0 + $0x50] sm:$0xf]
  %v65 = vld [vmem:[%s0 + $0x54] sm:$0xff]
  %v66 = vld [vmem:[%s0 + $0x5c] sm:$0xf]
  %v67 = vld [vmem:[%s0 + $0x60] sm:$0xff]
  %v68 = vld [vmem:[%s0 + $0x68] sm:$0xf]
  %v69 = vld [vmem:[%s0 + $0x6c] sm:$0xff]
  %v70 = vld [vmem:[%s0 + $0x74] sm:$0xf]
  %v71 = vld [vmem:[%s0 + $0x78] sm:$0xff]
  %v72 = vld [vmem:[%s0 + $0x80] sm:$0xf]
  %v73 = vld [vmem:[%s0 + $0x84] sm:$0xff]
  %v74 = vld [vmem:[%s0 + $0x8c] sm:$0xf]
  %v75 = vld [vmem:[%s0 + $0x90] sm:$0x11]
  %v76 = vld [vmem:[%s0 + $0x98] sm:$0x1]
  %v103 = vunpack.c.l.b16 %v51
  %v104 = vunpack.c.h.b16 %v51
  %v105 = vunpack.c.l.b16 %v52
  %v106 = vunpack.c.l.b16 %v53
  %v107 = vunpack.c.h.b16 %v53
  %v108 = vunpack.c.l.b16 %v54
  %v109 = vunpack.c.l.b16 %v55
  %v110 = vunpack.c.h.b16 %v55
  %v111 = vunpack.c.l.b16 %v56
  %v112 = vunpack.c.l.b16 %v57
  %v113 = vunpack.c.h.b16 %v57
  %v114 = vunpack.c.l.b16 %v58
  %v115 = vunpack.c.l.b16 %v59
  %v116 = vunpack.c.h.b16 %v59
  %v117 = vunpack.c.l.b16 %v60
  %v118 = vunpack.c.l.b16 %v61
  %v119 = vunpack.c.h.b16 %v61
  %v120 = vunpack.c.l.b16 %v62
  %v121 = vunpack.c.l.b16 %v63
  %v122 = vunpack.c.h.b16 %v63
  %v123 = vunpack.c.l.b16 %v64
  %v124 = vunpack.c.l.b16 %v65
  %v125 = vunpack.c.h.b16 %v65
  %v126 = vunpack.c.l.b16 %v66
  %v127 = vunpack.c.l.b16 %v67
  %v128 = vunpack.c.h.b16 %v67
  %v129 = vunpack.c.l.b16 %v68
  %v130 = vunpack.c.l.b16 %v69
  %v131 = vunpack.c.h.b16 %v69
  %v132 = vunpack.c.l.b16 %v70
  %v133 = vunpack.c.l.b16 %v71
  %v134 = vunpack.c.h.b16 %v71
  %v135 = vunpack.c.l.b16 %v72
  %v136 = vunpack.c.l.b16 %v73
  %v137 = vunpack.c.h.b16 %v73
  %v138 = vunpack.c.l.b16 %v74
  %v139 = vunpack.c.l.b16 %v75
  %v140 = vunpack.c.h.b16 %v75
  %v141 = vunpack.c.l.b16 %v76
  %v142 = vpack.c.b16 %v106, %v103
  %v143 = vpack.c.b16 %v107, %v104
  %v144 = vpack.c.b16 %v108, %v105
  %v145 = vpack.c.b16 %v112, %v109
  %v146 = vpack.c.b16 %v113, %v110
  %v147 = vpack.c.b16 %v114, %v111
  %v148 = vpack.c.b16 %v118, %v115
  %v149 = vpack.c.b16 %v119, %v116
  %v150 = vpack.c.b16 %v120, %v117
  %v151 = vpack.c.b16 %v124, %v121
  %v152 = vpack.c.b16 %v125, %v122
  %v153 = vpack.c.b16 %v126, %v123
  %v154 = vpack.c.b16 %v130, %v127
  %v155 = vpack.c.b16 %v131, %v128
  %v156 = vpack.c.b16 %v132, %v129
  %v157 = vpack.c.b16 %v136, %v133
  %v158 = vpack.c.b16 %v137, %v134
  %v159 = vpack.c.b16 %v138, %v135
  %v160 = vpack.c.b16 %v139, %v139
  %v161 = vpack.c.b16 %v140, %v140
  %v162 = vpack.c.b16 %v141, %v141
  %v213 = vunpack.c.l.b16 %v15
  %v214 = vunpack.c.l.b16 %v16
  %v215 = vunpack.c.l.b16 %v17
  %v216 = vunpack.c.l.b16 %v18
  %v217 = vunpack.c.l.b16 %v19
  %v218 = vunpack.c.l.b16 %v20
  %v219 = vunpack.c.l.b16 %v21
  %v220 = vunpack.c.l.b16 %v22
  %v221 = vunpack.c.l.b16 %v23
  %v222 = vunpack.c.l.b16 %v24
  %v223 = vunpack.c.l.b16 %v25
  %v224 = vunpack.c.l.b16 %v26
  %v225 = vunpack.c.l.b16 %v27
  %v226 = vunpack.c.l.b16 %v28
  %v227 = vunpack.c.l.b16 %v29
  %v228 = vunpack.c.l.b16 %v30
  %v229 = vunpack.c.l.b16 %v31
  %v230 = vunpack.c.l.b16 %v32
  %v231 = vunpack.c.l.b16 %v33
  %v232 = vunpack.c.l.b16 %v34
  %v233 = vunpack.c.l.b16 %v35
  %v234 = vunpack.c.l.b16 %v36
  %v235 = vunpack.c.l.b16 %v37
  %v236 = vunpack.c.l.b16 %v38
  %v237 = vunpack.c.l.b16 %v39
  %v238 = vunpack.c.l.b16 %v40
  %v239 = vunpack.c.l.b16 %v41
  %v240 = vunpack.c.l.b16 %v42
  %v241 = vunpack.c.l.b16 %v43
  %v242 = vunpack.c.l.b16 %v44
  %v243 = vunpack.c.l.b16 %v45
  %v244 = vunpack.c.l.b16 %v46
  %v245 = vunpack.c.l.b16 %v47
  %v246 = vunpack.c.l.b16 %v48
  %v247 = vunpack.c.l.b16 %v49
  %v248 = vunpack.c.l.b16 %v50
  %v249 = vpack.c.b16 %v214, %v213
  %v250 = vpack.c.b16 %v216, %v215
  %v251 = vpack.c.b16 %v218, %v217
  %v252 = vpack.c.b16 %v220, %v219
  %v253 = vpack.c.b16 %v222, %v221
  %v254 = vpack.c.b16 %v224, %v223
  %v255 = vpack.c.b16 %v226, %v225
  %v256 = vpack.c.b16 %v228, %v227
  %v257 = vpack.c.b16 %v230, %v229
  %v258 = vpack.c.b16 %v232, %v231
  %v259 = vpack.c.b16 %v234, %v233
  %v260 = vpack.c.b16 %v236, %v235
  %v261 = vpack.c.b16 %v238, %v237
  %v262 = vpack.c.b16 %v240, %v239
  %v263 = vpack.c.b16 %v242, %v241
  %v264 = vpack.c.b16 %v244, %v243
  %v265 = vpack.c.b16 %v246, %v245
  %v266 = vpack.c.b16 %v248, %v247
  %vm285 = vcmask 261120
  %v287 = vsel %vm285, %v144, 0
  %v290 = vsel %vm285, %v147, 0
  %v293 = vsel %vm285, %v150, 0
  %v296 = vsel %vm285, %v153, 0
  %v299 = vsel %vm285, %v156, 0
  %v302 = vsel %vm285, %v159, 0
  %v305 = vsel %vm285, %v162, 0
  %307 = vmatprep.subr.bf16.mxu0 0
  %308 = vmatpush1.bf16.msra.mxu0 %v249
  %309 = vmatprep.subr.bf16.mxu0 0
  %310 = vmatpush1.bf16.msra.mxu0 %v250
  %311 = vmatprep.subr.bf16.mxu0 0
  %312 = vmatpush1.bf16.msra.mxu0 %v251
  %313 = vmatprep.subr.bf16.mxu0 0
  %314 = vmatpush1.bf16.msra.mxu0 %v252
  %315 = vmatprep.subr.bf16.mxu0 0
  %316 = vmatpush1.bf16.msra.mxu0 %v253
  %317 = vmatprep.subr.bf16.mxu0 0
  %318 = vmatpush1.bf16.msra.mxu0 %v254
  %319 = vmatprep.subr.bf16.mxu0 0
  %320 = vmatpush1.bf16.msra.mxu0 %v255
  %321 = vmatprep.subr.bf16.mxu0 0
  %322 = vmatpush1.bf16.msra.mxu0 %v256
  %323 = vmatprep.subr.bf16.mxu0 0
  %324 = vmatpush1.bf16.msra.mxu0 %v257
  %325 = vmatprep.subr.bf16.mxu0 0
  %326 = vmatpush1.bf16.msra.mxu0 %v258
  %327 = vmatprep.subr.bf16.mxu0 0
  %328 = vmatpush1.bf16.msra.mxu0 %v259
  %329 = vmatprep.subr.bf16.mxu0 0
  %330 = vmatpush1.bf16.msra.mxu0 %v260
  %331 = vmatprep.subr.bf16.mxu0 0
  %332 = vmatpush1.bf16.msra.mxu0 %v261
  %333 = vmatprep.subr.bf16.mxu0 0
  %334 = vmatpush1.bf16.msra.mxu0 %v262
  %335 = vmatprep.subr.bf16.mxu0 0
  %336 = vmatpush1.bf16.msra.mxu0 %v263
  %337 = vmatprep.subr.bf16.mxu0 0
  %338 = vmatpush1.bf16.msra.mxu0 %v264
  %339 = vmatprep.mubr.bf16.mxu0 %v143
  %340 = vmatmul.mubr.bf16.gmra.mrb[0].mxu0 %v142
  %v341 = vpop.f32.mrb[0].mxu0
  %v342 = vadd.f32 0.0, %v341
  %v343 = vpop.f32.mrb[0].mxu0
  %v344 = vpop.f32.mrb[0].mxu0
  %v345 = vadd.f32 0.0, %v344
  %v346 = vpop.f32.mrb[0].mxu0
  %347 = vmatprep.mubr.bf16.mxu0 %v146
  %348 = vmatmul.mubr.bf16.gmra.mrb[0].mxu0 %v145
  %v349 = vpop.f32.mrb[0].mxu0
  %v350 = vadd.f32 0.0, %v349
  %v351 = vpop.f32.mrb[0].mxu0
  %v352 = vpop.f32.mrb[0].mxu0
  %v353 = vadd.f32 0.0, %v352
  %v354 = vpop.f32.mrb[0].mxu0
  %355 = vmatprep.mubr.bf16.mxu0 %v149
  %356 = vmatmul.mubr.bf16.gmra.mrb[0].mxu0 %v148
  %v357 = vpop.f32.mrb[0].mxu0
  %v358 = vadd.f32 0.0, %v357
  %v359 = vpop.f32.mrb[0].mxu0
  %v360 = vpop.f32.mrb[0].mxu0
  %v361 = vadd.f32 0.0, %v360
  %v362 = vpop.f32.mrb[0].mxu0
  %363 = vmatprep.mubr.bf16.mxu0 %v152
  %364 = vmatmul.mubr.bf16.gmra.mrb[0].mxu0 %v151
  %v365 = vpop.f32.mrb[0].mxu0
  %v366 = vadd.f32 0.0, %v365
  %v367 = vpop.f32.mrb[0].mxu0
  %v368 = vpop.f32.mrb[0].mxu0
  %v369 = vadd.f32 0.0, %v368
  %v370 = vpop.f32.mrb[0].mxu0
  %371 = vmatprep.mubr.bf16.mxu0 %v155
  %372 = vmatmul.mubr.bf16.gmra.mrb[0].mxu0 %v154
  %v373 = vpop.f32.mrb[0].mxu0
  %v374 = vadd.f32 0.0, %v373
  %v375 = vpop.f32.mrb[0].mxu0
  %v376 = vpop.f32.mrb[0].mxu0
  %v377 = vadd.f32 0.0, %v376
  %v378 = vpop.f32.mrb[0].mxu0
  %379 = vmatprep.mubr.bf16.mxu0 %v158
  %380 = vmatmul.mubr.bf16.gmra.mrb[0].mxu0 %v157
  %v381 = vpop.f32.mrb[0].mxu0
  %v382 = vadd.f32 0.0, %v381
  %v383 = vpop.f32.mrb[0].mxu0
  %v384 = vpop.f32.mrb[0].mxu0
  %v385 = vadd.f32 0.0, %v384
  %v386 = vpop.f32.mrb[0].mxu0
  %387 = vmatprep.mubr.bf16.mxu0 %v161
  %388 = vmatmul.mubr.bf16.gmra.mrb[0].mxu0 %v160
  %v389 = vpop.f32.mrb[0].mxu0
  %v390 = vadd.f32 0.0, %v389
  %v391 = vpop.f32.mrb[0].mxu0
  %v392 = vpop.f32.mrb[0].mxu0
  %v393 = vpop.f32.mrb[0].mxu0
  %394 = vdwg.mxu0
  %395 = vmatprep.subr.bf16.mxu0 0
  %396 = vmatpush1.bf16.msra.mxu0 %v265
  %397 = vmatprep.subr.bf16.mxu0 0
  %398 = vmatpush1.bf16.msra.mxu0 %v266
  %399 = vmatprep.subr.bf16.mxu0 0
  %400 = vmatpush1.bf16.msra.mxu0 0
  %401 = vmatprep.subr.bf16.mxu0 0
  %402 = vmatpush1.bf16.msra.mxu0 0
  %403 = vmatprep.subr.bf16.mxu0 0
  %404 = vmatpush1.bf16.msra.mxu0 0
  %405 = vmatprep.subr.bf16.mxu0 0
  %406 = vmatpush1.bf16.msra.mxu0 0
  %407 = vmatprep.subr.bf16.mxu0 0
  %408 = vmatpush1.bf16.msra.mxu0 0
  %409 = vmatprep.subr.bf16.mxu0 0
  %410 = vmatpush1.bf16.msra.mxu0 0
  %411 = vmatprep.subr.bf16.mxu0 0
  %412 = vmatpush1.bf16.msra.mxu0 0
  %413 = vmatprep.subr.bf16.mxu0 0
  %414 = vmatpush1.bf16.msra.mxu0 0
  %415 = vmatprep.subr.bf16.mxu0 0
  %416 = vmatpush1.bf16.msra.mxu0 0
  %417 = vmatprep.subr.bf16.mxu0 0
  %418 = vmatpush1.bf16.msra.mxu0 0
  %419 = vmatprep.subr.bf16.mxu0 0
  %420 = vmatpush1.bf16.msra.mxu0 0
  %421 = vmatprep.subr.bf16.mxu0 0
  %422 = vmatpush1.bf16.msra.mxu0 0
  %423 = vmatprep.subr.bf16.mxu0 0
  %424 = vmatpush1.bf16.msra.mxu0 0
  %425 = vmatprep.subr.bf16.mxu0 0
  %426 = vmatpush1.bf16.msra.mxu0 0
  %427 = vmatprep.mubr.bf16.mxu0 0
  %428 = vmatmul.mubr.bf16.gmra.mrb[0].mxu0 %v287
  %v429 = vpop.f32.mrb[0].mxu0
  %v430 = vadd.f32 %v342, %v429
  %v431 = vpop.f32.mrb[0].mxu0
  %v432 = vpop.f32.mrb[0].mxu0
  %v433 = vadd.f32 %v345, %v432
  %v434 = vpop.f32.mrb[0].mxu0
  %435 = vmatprep.mubr.bf16.mxu0 0
  %436 = vmatmul.mubr.bf16.gmra.mrb[0].mxu0 %v290
  %v437 = vpop.f32.mrb[0].mxu0
  %v438 = vadd.f32 %v350, %v437
  %v439 = vpop.f32.mrb[0].mxu0
  %v440 = vpop.f32.mrb[0].mxu0
  %v441 = vadd.f32 %v353, %v440
  %v442 = vpop.f32.mrb[0].mxu0
  %443 = vmatprep.mubr.bf16.mxu0 0
  %444 = vmatmul.mubr.bf16.gmra.mrb[0].mxu0 %v293
  %v445 = vpop.f32.mrb[0].mxu0
  %v446 = vadd.f32 %v358, %v445
  %v447 = vpop.f32.mrb[0].mxu0
  %v448 = vpop.f32.mrb[0].mxu0
  %v449 = vadd.f32 %v361, %v448
  %v450 = vpop.f32.mrb[0].mxu0
  %451 = vmatprep.mubr.bf16.mxu0 0
  %452 = vmatmul.mubr.bf16.gmra.mrb[0].mxu0 %v296
  %v453 = vpop.f32.mrb[0].mxu0
  %v454 = vadd.f32 %v366, %v453
  %v455 = vpop.f32.mrb[0].mxu0
  %v456 = vpop.f32.mrb[0].mxu0
  %v457 = vadd.f32 %v369, %v456
  %v458 = vpop.f32.mrb[0].mxu0
  %459 = vmatprep.mubr.bf16.mxu0 0
  %460 = vmatmul.mubr.bf16.gmra.mrb[0].mxu0 %v299
  %v461 = vpop.f32.mrb[0].mxu0
  %v462 = vadd.f32 %v374, %v461
  %v463 = vpop.f32.mrb[0].mxu0
  %v464 = vpop.f32.mrb[0].mxu0
  %v465 = vadd.f32 %v377, %v464
  %v466 = vpop.f32.mrb[0].mxu0
  %467 = vmatprep.mubr.bf16.mxu0 0
  %468 = vmatmul.mubr.bf16.gmra.mrb[0].mxu0 %v302
  %v469 = vpop.f32.mrb[0].mxu0
  %v470 = vadd.f32 %v382, %v469
  %v471 = vpop.f32.mrb[0].mxu0
  %v472 = vpop.f32.mrb[0].mxu0
  %v473 = vadd.f32 %v385, %v472
  %v474 = vpop.f32.mrb[0].mxu0
  %475 = vmatprep.mubr.bf16.mxu0 0
  %476 = vmatmul.mubr.bf16.gmra.mrb[0].mxu0 %v305
  %v477 = vpop.f32.mrb[0].mxu0
  %v478 = vadd.f32 %v390, %v477
  %v479 = vpop.f32.mrb[0].mxu0
  %v480 = vpop.f32.mrb[0].mxu0
  %v481 = vpop.f32.mrb[0].mxu0
  %482 = vdwg.mxu0
  %s483 = scalar_lea.vmem %s0, 156
  %v484 = vld [vmem:[%s483] sm:$0xff]
  %v485 = vld [vmem:[%s483 + $0x8] sm:$0xf]
  %v486 = vld [vmem:[%s483 + $0xc] sm:$0xff]
  %v487 = vld [vmem:[%s483 + $0x14] sm:$0xf]
  %v488 = vld [vmem:[%s483 + $0x18] sm:$0xff]
  %v489 = vld [vmem:[%s483 + $0x20] sm:$0xf]
  %v490 = vld [vmem:[%s483 + $0x24] sm:$0xff]
  %v491 = vld [vmem:[%s483 + $0x2c] sm:$0xf]
  %v492 = vld [vmem:[%s483 + $0x30] sm:$0xff]
  %v493 = vld [vmem:[%s483 + $0x38] sm:$0xf]
  %v494 = vld [vmem:[%s483 + $0x3c] sm:$0xff]
  %v495 = vld [vmem:[%s483 + $0x44] sm:$0xf]
  %v496 = vld [vmem:[%s483 + $0x48] sm:$0xff]
  %v497 = vld [vmem:[%s483 + $0x50] sm:$0xf]
  %v498 = vld [vmem:[%s483 + $0x54] sm:$0xff]
  %v499 = vld [vmem:[%s483 + $0x5c] sm:$0xf]
  %v500 = vld [vmem:[%s483 + $0x60] sm:$0xff]
  %v501 = vld [vmem:[%s483 + $0x68] sm:$0xf]
  %v502 = vld [vmem:[%s483 + $0x6c] sm:$0xff]
  %v503 = vld [vmem:[%s483 + $0x74] sm:$0xf]
  %v504 = vld [vmem:[%s483 + $0x78] sm:$0xff]
  %v505 = vld [vmem:[%s483 + $0x80] sm:$0xf]
  %v506 = vld [vmem:[%s483 + $0x84] sm:$0xff]
  %v507 = vld [vmem:[%s483 + $0x8c] sm:$0xf]
  %v508 = vld [vmem:[%s483 + $0x90] sm:$0x11]
  %v509 = vld [vmem:[%s483 + $0x98] sm:$0x1]
  %v536 = vunpack.c.l.b16 %v484
  %v537 = vunpack.c.h.b16 %v484
  %v538 = vunpack.c.l.b16 %v485
  %v539 = vunpack.c.l.b16 %v486
  %v540 = vunpack.c.h.b16 %v486
  %v541 = vunpack.c.l.b16 %v487
  %v542 = vunpack.c.l.b16 %v488
  %v543 = vunpack.c.h.b16 %v488
  %v544 = vunpack.c.l.b16 %v489
  %v545 = vunpack.c.l.b16 %v490
  %v546 = vunpack.c.h.b16 %v490
  %v547 = vunpack.c.l.b16 %v491
  %v548 = vunpack.c.l.b16 %v492
  %v549 = vunpack.c.h.b16 %v492
  %v550 = vunpack.c.l.b16 %v493
  %v551 = vunpack.c.l.b16 %v494
  %v552 = vunpack.c.h.b16 %v494
  %v553 = vunpack.c.l.b16 %v495
  %v554 = vunpack.c.l.b16 %v496
  %v555 = vunpack.c.h.b16 %v496
  %v556 = vunpack.c.l.b16 %v497
  %v557 = vunpack.c.l.b16 %v498
  %v558 = vunpack.c.h.b16 %v498
  %v559 = vunpack.c.l.b16 %v499
  %v560 = vunpack.c.l.b16 %v500
  %v561 = vunpack.c.h.b16 %v500
  %v562 = vunpack.c.l.b16 %v501
  %v563 = vunpack.c.l.b16 %v502
  %v564 = vunpack.c.h.b16 %v502
  %v565 = vunpack.c.l.b16 %v503
  %v566 = vunpack.c.l.b16 %v504
  %v567 = vunpack.c.h.b16 %v504
  %v568 = vunpack.c.l.b16 %v505
  %v569 = vunpack.c.l.b16 %v506
  %v570 = vunpack.c.h.b16 %v506
  %v571 = vunpack.c.l.b16 %v507
  %v572 = vunpack.c.l.b16 %v508
  %v573 = vunpack.c.h.b16 %v508
  %v574 = vunpack.c.l.b16 %v509
  %v575 = vpack.c.b16 %v539, %v536
  %v576 = vpack.c.b16 %v540, %v537
  %v577 = vpack.c.b16 %v541, %v538
  %v578 = vpack.c.b16 %v545, %v542
  %v579 = vpack.c.b16 %v546, %v543
  %v580 = vpack.c.b16 %v547, %v544
  %v581 = vpack.c.b16 %v551, %v548
  %v582 = vpack.c.b16 %v552, %v549
  %v583 = vpack.c.b16 %v553, %v550
  %v584 = vpack.c.b16 %v557, %v554
  %v585 = vpack.c.b16 %v558, %v555
  %v586 = vpack.c.b16 %v559, %v556
  %v587 = vpack.c.b16 %v563, %v560
  %v588 = vpack.c.b16 %v564, %v561
  %v589 = vpack.c.b16 %v565, %v562
  %v590 = vpack.c.b16 %v569, %v566
  %v591 = vpack.c.b16 %v570, %v567
  %v592 = vpack.c.b16 %v571, %v568
  %v593 = vpack.c.b16 %v572, %v572
  %v594 = vpack.c.b16 %v573, %v573
  %v595 = vpack.c.b16 %v574, %v574
  %v611 = vsel %vm285, %v577, 0
  %v614 = vsel %vm285, %v580, 0
  %v617 = vsel %vm285, %v583, 0
  %v620 = vsel %vm285, %v586, 0
  %v623 = vsel %vm285, %v589, 0
  %v626 = vsel %vm285, %v592, 0
  %v629 = vsel %vm285, %v595, 0
  %631 = vmatprep.subr.bf16.mxu0 0
  %632 = vmatpush1.bf16.msra.mxu0 %v249
  %633 = vmatprep.subr.bf16.mxu0 0
  %634 = vmatpush1.bf16.msra.mxu0 %v250
  %635 = vmatprep.subr.bf16.mxu0 0
  %636 = vmatpush1.bf16.msra.mxu0 %v251
  %637 = vmatprep.subr.bf16.mxu0 0
  %638 = vmatpush1.bf16.msra.mxu0 %v252
  %639 = vmatprep.subr.bf16.mxu0 0
  %640 = vmatpush1.bf16.msra.mxu0 %v253
  %641 = vmatprep.subr.bf16.mxu0 0
  %642 = vmatpush1.bf16.msra.mxu0 %v254
  %643 = vmatprep.subr.bf16.mxu0 0
  %644 = vmatpush1.bf16.msra.mxu0 %v255
  %645 = vmatprep.subr.bf16.mxu0 0
  %646 = vmatpush1.bf16.msra.mxu0 %v256
  %647 = vmatprep.subr.bf16.mxu0 0
  %648 = vmatpush1.bf16.msra.mxu0 %v257
  %649 = vmatprep.subr.bf16.mxu0 0
  %650 = vmatpush1.bf16.msra.mxu0 %v258
  %651 = vmatprep.subr.bf16.mxu0 0
  %652 = vmatpush1.bf16.msra.mxu0 %v259
  %653 = vmatprep.subr.bf16.mxu0 0
  %654 = vmatpush1.bf16.msra.mxu0 %v260
  %655 = vmatprep.subr.bf16.mxu0 0
  %656 = vmatpush1.bf16.msra.mxu0 %v261
  %657 = vmatprep.subr.bf16.mxu0 0
  %658 = vmatpush1.bf16.msra.mxu0 %v262
  %659 = vmatprep.subr.bf16.mxu0 0
  %660 = vmatpush1.bf16.msra.mxu0 %v263
  %661 = vmatprep.subr.bf16.mxu0 0
  %662 = vmatpush1.bf16.msra.mxu0 %v264
  %663 = vmatprep.mubr.bf16.mxu0 %v576
  %664 = vmatmul.mubr.bf16.gmra.mrb[0].mxu0 %v575
  %v665 = vpop.f32.mrb[0].mxu0
  %v666 = vadd.f32 0.0, %v665
  %v667 = vpop.f32.mrb[0].mxu0
  %v668 = vpop.f32.mrb[0].mxu0
  %v669 = vadd.f32 0.0, %v668
  %v670 = vpop.f32.mrb[0].mxu0
  %671 = vmatprep.mubr.bf16.mxu0 %v579
  %672 = vmatmul.mubr.bf16.gmra.mrb[0].mxu0 %v578
  %v673 = vpop.f32.mrb[0].mxu0
  %v674 = vadd.f32 0.0, %v673
  %v675 = vpop.f32.mrb[0].mxu0
  %v676 = vpop.f32.mrb[0].mxu0
  %v677 = vadd.f32 0.0, %v676
  %v678 = vpop.f32.mrb[0].mxu0
  %679 = vmatprep.mubr.bf16.mxu0 %v582
  %680 = vmatmul.mubr.bf16.gmra.mrb[0].mxu0 %v581
  %v681 = vpop.f32.mrb[0].mxu0
  %v682 = vadd.f32 0.0, %v681
  %v683 = vpop.f32.mrb[0].mxu0
  %v684 = vpop.f32.mrb[0].mxu0
  %v685 = vadd.f32 0.0, %v684
  %v686 = vpop.f32.mrb[0].mxu0
  %687 = vmatprep.mubr.bf16.mxu0 %v585
  %688 = vmatmul.mubr.bf16.gmra.mrb[0].mxu0 %v584
  %v689 = vpop.f32.mrb[0].mxu0
  %v690 = vadd.f32 0.0, %v689
  %v691 = vpop.f32.mrb[0].mxu0
  %v692 = vpop.f32.mrb[0].mxu0
  %v693 = vadd.f32 0.0, %v692
  %v694 = vpop.f32.mrb[0].mxu0
  %695 = vmatprep.mubr.bf16.mxu0 %v588
  %696 = vmatmul.mubr.bf16.gmra.mrb[0].mxu0 %v587
  %v697 = vpop.f32.mrb[0].mxu0
  %v698 = vadd.f32 0.0, %v697
  %v699 = vpop.f32.mrb[0].mxu0
  %v700 = vpop.f32.mrb[0].mxu0
  %v701 = vadd.f32 0.0, %v700
  %v702 = vpop.f32.mrb[0].mxu0
  %703 = vmatprep.mubr.bf16.mxu0 %v591
  %704 = vmatmul.mubr.bf16.gmra.mrb[0].mxu0 %v590
  %v705 = vpop.f32.mrb[0].mxu0
  %v706 = vadd.f32 0.0, %v705
  %v707 = vpop.f32.mrb[0].mxu0
  %v708 = vpop.f32.mrb[0].mxu0
  %v709 = vadd.f32 0.0, %v708
  %v710 = vpop.f32.mrb[0].mxu0
  %711 = vmatprep.mubr.bf16.mxu0 %v594
  %712 = vmatmul.mubr.bf16.gmra.mrb[0].mxu0 %v593
  %v713 = vpop.f32.mrb[0].mxu0
  %v714 = vadd.f32 0.0, %v713
  %v715 = vpop.f32.mrb[0].mxu0
  %v716 = vpop.f32.mrb[0].mxu0
  %v717 = vpop.f32.mrb[0].mxu0
  %718 = vdwg.mxu0
  %719 = vmatprep.subr.bf16.mxu0 0
  %720 = vmatpush1.bf16.msra.mxu0 %v265
  %721 = vmatprep.subr.bf16.mxu0 0
  %722 = vmatpush1.bf16.msra.mxu0 %v266
  %723 = vmatprep.subr.bf16.mxu0 0
  %724 = vmatpush1.bf16.msra.mxu0 0
  %725 = vmatprep.subr.bf16.mxu0 0
  %726 = vmatpush1.bf16.msra.mxu0 0
  %727 = vmatprep.subr.bf16.mxu0 0
  %728 = vmatpush1.bf16.msra.mxu0 0
  %729 = vmatprep.subr.bf16.mxu0 0
  %730 = vmatpush1.bf16.msra.mxu0 0
  %731 = vmatprep.subr.bf16.mxu0 0
  %732 = vmatpush1.bf16.msra.mxu0 0
  %733 = vmatprep.subr.bf16.mxu0 0
  %734 = vmatpush1.bf16.msra.mxu0 0
  %735 = vmatprep.subr.bf16.mxu0 0
  %736 = vmatpush1.bf16.msra.mxu0 0
  %737 = vmatprep.subr.bf16.mxu0 0
  %738 = vmatpush1.bf16.msra.mxu0 0
  %739 = vmatprep.subr.bf16.mxu0 0
  %740 = vmatpush1.bf16.msra.mxu0 0
  %741 = vmatprep.subr.bf16.mxu0 0
  %742 = vmatpush1.bf16.msra.mxu0 0
  %743 = vmatprep.subr.bf16.mxu0 0
  %744 = vmatpush1.bf16.msra.mxu0 0
  %745 = vmatprep.subr.bf16.mxu0 0
  %746 = vmatpush1.bf16.msra.mxu0 0
  %747 = vmatprep.subr.bf16.mxu0 0
  %748 = vmatpush1.bf16.msra.mxu0 0
  %749 = vmatprep.subr.bf16.mxu0 0
  %750 = vmatpush1.bf16.msra.mxu0 0
  %751 = vmatprep.mubr.bf16.mxu0 0
  %752 = vmatmul.mubr.bf16.gmra.mrb[0].mxu0 %v611
  %v753 = vpop.f32.mrb[0].mxu0
  %v754 = vadd.f32 %v666, %v753
  %v755 = vpop.f32.mrb[0].mxu0
  %v756 = vpop.f32.mrb[0].mxu0
  %v757 = vadd.f32 %v669, %v756
  %v758 = vpop.f32.mrb[0].mxu0
  %759 = vmatprep.mubr.bf16.mxu0 0
  %760 = vmatmul.mubr.bf16.gmra.mrb[0].mxu0 %v614
  %v761 = vpop.f32.mrb[0].mxu0
  %v762 = vadd.f32 %v674, %v761
  %v763 = vpop.f32.mrb[0].mxu0
  %v764 = vpop.f32.mrb[0].mxu0
  %v765 = vadd.f32 %v677, %v764
  %v766 = vpop.f32.mrb[0].mxu0
  %767 = vmatprep.mubr.bf16.mxu0 0
  %768 = vmatmul.mubr.bf16.gmra.mrb[0].mxu0 %v617
  %v769 = vpop.f32.mrb[0].mxu0
  %v770 = vadd.f32 %v682, %v769
  %v771 = vpop.f32.mrb[0].mxu0
  %v772 = vpop.f32.mrb[0].mxu0
  %v773 = vadd.f32 %v685, %v772
  %v774 = vpop.f32.mrb[0].mxu0
  %775 = vmatprep.mubr.bf16.mxu0 0
  %776 = vmatmul.mubr.bf16.gmra.mrb[0].mxu0 %v620
  %v777 = vpop.f32.mrb[0].mxu0
  %v778 = vadd.f32 %v690, %v777
  %v779 = vpop.f32.mrb[0].mxu0
  %v780 = vpop.f32.mrb[0].mxu0
  %v781 = vadd.f32 %v693, %v780
  %v782 = vpop.f32.mrb[0].mxu0
  %783 = vmatprep.mubr.bf16.mxu0 0
  %784 = vmatmul.mubr.bf16.gmra.mrb[0].mxu0 %v623
  %v785 = vpop.f32.mrb[0].mxu0
  %v786 = vadd.f32 %v698, %v785
  %v787 = vpop.f32.mrb[0].mxu0
  %v788 = vpop.f32.mrb[0].mxu0
  %v789 = vadd.f32 %v701, %v788
  %v790 = vpop.f32.mrb[0].mxu0
  %791 = vmatprep.mubr.bf16.mxu0 0
  %792 = vmatmul.mubr.bf16.gmra.mrb[0].mxu0 %v626
  %v793 = vpop.f32.mrb[0].mxu0
  %v794 = vadd.f32 %v706, %v793
  %v795 = vpop.f32.mrb[0].mxu0
  %v796 = vpop.f32.mrb[0].mxu0
  %v797 = vadd.f32 %v709, %v796
  %v798 = vpop.f32.mrb[0].mxu0
  %799 = vmatprep.mubr.bf16.mxu0 0
  %800 = vmatmul.mubr.bf16.gmra.mrb[0].mxu0 %v629
  %v801 = vpop.f32.mrb[0].mxu0
  %v802 = vadd.f32 %v714, %v801
  %v803 = vpop.f32.mrb[0].mxu0
  %v804 = vpop.f32.mrb[0].mxu0
  %v805 = vpop.f32.mrb[0].mxu0
  %806 = vdwg.mxu0
  %v807 = vmax.f32 %v430, %v754
  %v808 = vmax.f32 %v433, %v757
  %v809 = vmax.f32 %v438, %v762
  %v810 = vmax.f32 %v441, %v765
  %v811 = vmax.f32 %v446, %v770
  %v812 = vmax.f32 %v449, %v773
  %v813 = vmax.f32 %v454, %v778
  %v814 = vmax.f32 %v457, %v781
  %v815 = vmax.f32 %v462, %v786
  %v816 = vmax.f32 %v465, %v789
  %v817 = vmax.f32 %v470, %v794
  %v818 = vmax.f32 %v473, %v797
  %v819 = vmax.f32 %v478, %v802
  %s820 = scalar_lea.vmem %s0, 312
  %v821 = vld [vmem:[%s820] sm:$0xff]
  %v822 = vld [vmem:[%s820 + $0x8] sm:$0xf]
  %v823 = vld [vmem:[%s820 + $0xc] sm:$0xff]
  %v824 = vld [vmem:[%s820 + $0x14] sm:$0xf]
  %v825 = vld [vmem:[%s820 + $0x18] sm:$0xff]
  %v826 = vld [vmem:[%s820 + $0x20] sm:$0xf]
  %v827 = vld [vmem:[%s820 + $0x24] sm:$0xff]
  %v828 = vld [vmem:[%s820 + $0x2c] sm:$0xf]
  %v829 = vld [vmem:[%s820 + $0x30] sm:$0xff]
  %v830 = vld [vmem:[%s820 + $0x38] sm:$0xf]
  %v831 = vld [vmem:[%s820 + $0x3c] sm:$0xff]
  %v832 = vld [vmem:[%s820 + $0x44] sm:$0xf]
  %v833 = vld [vmem:[%s820 + $0x48] sm:$0xff]
  %v834 = vld [vmem:[%s820 + $0x50] sm:$0xf]
  %v835 = vld [vmem:[%s820 + $0x54] sm:$0xff]
  %v836 = vld [vmem:[%s820 + $0x5c] sm:$0xf]
  %v837 = vld [vmem:[%s820 + $0x60] sm:$0xff]
  %v838 = vld [vmem:[%s820 + $0x68] sm:$0xf]
  %v839 = vld [vmem:[%s820 + $0x6c] sm:$0xff]
  %v840 = vld [vmem:[%s820 + $0x74] sm:$0xf]
  %v841 = vld [vmem:[%s820 + $0x78] sm:$0xff]
  %v842 = vld [vmem:[%s820 + $0x80] sm:$0xf]
  %v843 = vld [vmem:[%s820 + $0x84] sm:$0xff]
  %v844 = vld [vmem:[%s820 + $0x8c] sm:$0xf]
  %v845 = vld [vmem:[%s820 + $0x90] sm:$0x11]
  %v846 = vld [vmem:[%s820 + $0x98] sm:$0x1]
  %v873 = vunpack.c.l.b16 %v821
  %v874 = vunpack.c.h.b16 %v821
  %v875 = vunpack.c.l.b16 %v822
  %v876 = vunpack.c.l.b16 %v823
  %v877 = vunpack.c.h.b16 %v823
  %v878 = vunpack.c.l.b16 %v824
  %v879 = vunpack.c.l.b16 %v825
  %v880 = vunpack.c.h.b16 %v825
  %v881 = vunpack.c.l.b16 %v826
  %v882 = vunpack.c.l.b16 %v827
  %v883 = vunpack.c.h.b16 %v827
  %v884 = vunpack.c.l.b16 %v828
  %v885 = vunpack.c.l.b16 %v829
  %v886 = vunpack.c.h.b16 %v829
  %v887 = vunpack.c.l.b16 %v830
  %v888 = vunpack.c.l.b16 %v831
  %v889 = vunpack.c.h.b16 %v831
  %v890 = vunpack.c.l.b16 %v832
  %v891 = vunpack.c.l.b16 %v833
  %v892 = vunpack.c.h.b16 %v833
  %v893 = vunpack.c.l.b16 %v834
  %v894 = vunpack.c.l.b16 %v835
  %v895 = vunpack.c.h.b16 %v835
  %v896 = vunpack.c.l.b16 %v836
  %v897 = vunpack.c.l.b16 %v837
  %v898 = vunpack.c.h.b16 %v837
  %v899 = vunpack.c.l.b16 %v838
  %v900 = vunpack.c.l.b16 %v839
  %v901 = vunpack.c.h.b16 %v839
  %v902 = vunpack.c.l.b16 %v840
  %v903 = vunpack.c.l.b16 %v841
  %v904 = vunpack.c.h.b16 %v841
  %v905 = vunpack.c.l.b16 %v842
  %v906 = vunpack.c.l.b16 %v843
  %v907 = vunpack.c.h.b16 %v843
  %v908 = vunpack.c.l.b16 %v844
  %v909 = vunpack.c.l.b16 %v845
  %v910 = vunpack.c.h.b16 %v845
  %v911 = vunpack.c.l.b16 %v846
  %v912 = vpack.c.b16 %v876, %v873
  %v913 = vpack.c.b16 %v877, %v874
  %v914 = vpack.c.b16 %v878, %v875
  %v915 = vpack.c.b16 %v882, %v879
  %v916 = vpack.c.b16 %v883, %v880
  %v917 = vpack.c.b16 %v884, %v881
  %v918 = vpack.c.b16 %v888, %v885
  %v919 = vpack.c.b16 %v889, %v886
  %v920 = vpack.c.b16 %v890, %v887
  %v921 = vpack.c.b16 %v894, %v891
  %v922 = vpack.c.b16 %v895, %v892
  %v923 = vpack.c.b16 %v896, %v893
  %v924 = vpack.c.b16 %v900, %v897
  %v925 = vpack.c.b16 %v901, %v898
  %v926 = vpack.c.b16 %v902, %v899
  %v927 = vpack.c.b16 %v906, %v903
  %v928 = vpack.c.b16 %v907, %v904
  %v929 = vpack.c.b16 %v908, %v905
  %v930 = vpack.c.b16 %v909, %v909
  %v931 = vpack.c.b16 %v910, %v910
  %v932 = vpack.c.b16 %v911, %v911
  %v948 = vsel %vm285, %v914, 0
  %v951 = vsel %vm285, %v917, 0
  %v954 = vsel %vm285, %v920, 0
  %v957 = vsel %vm285, %v923, 0
  %v960 = vsel %vm285, %v926, 0
  %v963 = vsel %vm285, %v929, 0
  %v966 = vsel %vm285, %v932, 0
  %968 = vmatprep.subr.bf16.mxu0 0
  %969 = vmatpush1.bf16.msra.mxu0 %v249
  %970 = vmatprep.subr.bf16.mxu0 0
  %971 = vmatpush1.bf16.msra.mxu0 %v250
  %972 = vmatprep.subr.bf16.mxu0 0
  %973 = vmatpush1.bf16.msra.mxu0 %v251
  %974 = vmatprep.subr.bf16.mxu0 0
  %975 = vmatpush1.bf16.msra.mxu0 %v252
  %976 = vmatprep.subr.bf16.mxu0 0
  %977 = vmatpush1.bf16.msra.mxu0 %v253
  %978 = vmatprep.subr.bf16.mxu0 0
  %979 = vmatpush1.bf16.msra.mxu0 %v254
  %980 = vmatprep.subr.bf16.mxu0 0
  %981 = vmatpush1.bf16.msra.mxu0 %v255
  %982 = vmatprep.subr.bf16.mxu0 0
  %983 = vmatpush1.bf16.msra.mxu0 %v256
  %984 = vmatprep.subr.bf16.mxu0 0
  %985 = vmatpush1.bf16.msra.mxu0 %v257
  %986 = vmatprep.subr.bf16.mxu0 0
  %987 = vmatpush1.bf16.msra.mxu0 %v258
  %988 = vmatprep.subr.bf16.mxu0 0
  %989 = vmatpush1.bf16.msra.mxu0 %v259
  %990 = vmatprep.subr.bf16.mxu0 0
  %991 = vmatpush1.bf16.msra.mxu0 %v260
  %992 = vmatprep.subr.bf16.mxu0 0
  %993 = vmatpush1.bf16.msra.mxu0 %v261
  %994 = vmatprep.subr.bf16.mxu0 0
  %995 = vmatpush1.bf16.msra.mxu0 %v262
  %996 = vmatprep.subr.bf16.mxu0 0
  %997 = vmatpush1.bf16.msra.mxu0 %v263
  %998 = vmatprep.subr.bf16.mxu0 0
  %999 = vmatpush1.bf16.msra.mxu0 %v264
  %1000 = vmatprep.mubr.bf16.mxu0 %v913
  %1001 = vmatmul.mubr.bf16.gmra.mrb[0].mxu0 %v912
  %v1002 = vpop.f32.mrb[0].mxu0
  %v1003 = vadd.f32 0.0, %v1002
  %v1004 = vpop.f32.mrb[0].mxu0
  %v1005 = vpop.f32.mrb[0].mxu0
  %v1006 = vadd.f32 0.0, %v1005
  %v1007 = vpop.f32.mrb[0].mxu0
  %1008 = vmatprep.mubr.bf16.mxu0 %v916
  %1009 = vmatmul.mubr.bf16.gmra.mrb[0].mxu0 %v915
  %v1010 = vpop.f32.mrb[0].mxu0
  %v1011 = vadd.f32 0.0, %v1010
  %v1012 = vpop.f32.mrb[0].mxu0
  %v1013 = vpop.f32.mrb[0].mxu0
  %v1014 = vadd.f32 0.0, %v1013
  %v1015 = vpop.f32.mrb[0].mxu0
  %1016 = vmatprep.mubr.bf16.mxu0 %v919
  %1017 = vmatmul.mubr.bf16.gmra.mrb[0].mxu0 %v918
  %v1018 = vpop.f32.mrb[0].mxu0
  %v1019 = vadd.f32 0.0, %v1018
  %v1020 = vpop.f32.mrb[0].mxu0
  %v1021 = vpop.f32.mrb[0].mxu0
  %v1022 = vadd.f32 0.0, %v1021
  %v1023 = vpop.f32.mrb[0].mxu0
  %1024 = vmatprep.mubr.bf16.mxu0 %v922
  %1025 = vmatmul.mubr.bf16.gmra.mrb[0].mxu0 %v921
  %v1026 = vpop.f32.mrb[0].mxu0
  %v1027 = vadd.f32 0.0, %v1026
  %v1028 = vpop.f32.mrb[0].mxu0
  %v1029 = vpop.f32.mrb[0].mxu0
  %v1030 = vadd.f32 0.0, %v1029
  %v1031 = vpop.f32.mrb[0].mxu0
  %1032 = vmatprep.mubr.bf16.mxu0 %v925
  %1033 = vmatmul.mubr.bf16.gmra.mrb[0].mxu0 %v924
  %v1034 = vpop.f32.mrb[0].mxu0
  %v1035 = vadd.f32 0.0, %v1034
  %v1036 = vpop.f32.mrb[0].mxu0
  %v1037 = vpop.f32.mrb[0].mxu0
  %v1038 = vadd.f32 0.0, %v1037
  %v1039 = vpop.f32.mrb[0].mxu0
  %1040 = vmatprep.mubr.bf16.mxu0 %v928
  %1041 = vmatmul.mubr.bf16.gmra.mrb[0].mxu0 %v927
  %v1042 = vpop.f32.mrb[0].mxu0
  %v1043 = vadd.f32 0.0, %v1042
  %v1044 = vpop.f32.mrb[0].mxu0
  %v1045 = vpop.f32.mrb[0].mxu0
  %v1046 = vadd.f32 0.0, %v1045
  %v1047 = vpop.f32.mrb[0].mxu0
  %1048 = vmatprep.mubr.bf16.mxu0 %v931
  %1049 = vmatmul.mubr.bf16.gmra.mrb[0].mxu0 %v930
  %v1050 = vpop.f32.mrb[0].mxu0
  %v1051 = vadd.f32 0.0, %v1050
  %v1052 = vpop.f32.mrb[0].mxu0
  %v1053 = vpop.f32.mrb[0].mxu0
  %v1054 = vpop.f32.mrb[0].mxu0
  %1055 = vdwg.mxu0
  %1056 = vmatprep.subr.bf16.mxu0 0
  %1057 = vmatpush1.bf16.msra.mxu0 %v265
  %1058 = vmatprep.subr.bf16.mxu0 0
  %1059 = vmatpush1.bf16.msra.mxu0 %v266
  %1060 = vmatprep.subr.bf16.mxu0 0
  %1061 = vmatpush1.bf16.msra.mxu0 0
  %1062 = vmatprep.subr.bf16.mxu0 0
  %1063 = vmatpush1.bf16.msra.mxu0 0
  %1064 = vmatprep.subr.bf16.mxu0 0
  %1065 = vmatpush1.bf16.msra.mxu0 0
  %1066 = vmatprep.subr.bf16.mxu0 0
  %1067 = vmatpush1.bf16.msra.mxu0 0
  %1068 = vmatprep.subr.bf16.mxu0 0
  %1069 = vmatpush1.bf16.msra.mxu0 0
  %1070 = vmatprep.subr.bf16.mxu0 0
  %1071 = vmatpush1.bf16.msra.mxu0 0
  %1072 = vmatprep.subr.bf16.mxu0 0
  %1073 = vmatpush1.bf16.msra.mxu0 0
  %1074 = vmatprep.subr.bf16.mxu0 0
  %1075 = vmatpush1.bf16.msra.mxu0 0
  %1076 = vmatprep.subr.bf16.mxu0 0
  %1077 = vmatpush1.bf16.msra.mxu0 0
  %1078 = vmatprep.subr.bf16.mxu0 0
  %1079 = vmatpush1.bf16.msra.mxu0 0
  %1080 = vmatprep.subr.bf16.mxu0 0
  %1081 = vmatpush1.bf16.msra.mxu0 0
  %1082 = vmatprep.subr.bf16.mxu0 0
  %1083 = vmatpush1.bf16.msra.mxu0 0
  %1084 = vmatprep.subr.bf16.mxu0 0
  %1085 = vmatpush1.bf16.msra.mxu0 0
  %1086 = vmatprep.subr.bf16.mxu0 0
  %1087 = vmatpush1.bf16.msra.mxu0 0
  %1088 = vmatprep.mubr.bf16.mxu0 0
  %1089 = vmatmul.mubr.bf16.gmra.mrb[0].mxu0 %v948
  %v1090 = vpop.f32.mrb[0].mxu0
  %v1091 = vadd.f32 %v1003, %v1090
  %v1092 = vpop.f32.mrb[0].mxu0
  %v1093 = vpop.f32.mrb[0].mxu0
  %v1094 = vadd.f32 %v1006, %v1093
  %v1095 = vpop.f32.mrb[0].mxu0
  %1096 = vmatprep.mubr.bf16.mxu0 0
  %1097 = vmatmul.mubr.bf16.gmra.mrb[0].mxu0 %v951
  %v1098 = vpop.f32.mrb[0].mxu0
  %v1099 = vadd.f32 %v1011, %v1098
  %v1100 = vpop.f32.mrb[0].mxu0
  %v1101 = vpop.f32.mrb[0].mxu0
  %v1102 = vadd.f32 %v1014, %v1101
  %v1103 = vpop.f32.mrb[0].mxu0
  %1104 = vmatprep.mubr.bf16.mxu0 0
  %1105 = vmatmul.mubr.bf16.gmra.mrb[0].mxu0 %v954
  %v1106 = vpop.f32.mrb[0].mxu0
  %v1107 = vadd.f32 %v1019, %v1106
  %v1108 = vpop.f32.mrb[0].mxu0
  %v1109 = vpop.f32.mrb[0].mxu0
  %v1110 = vadd.f32 %v1022, %v1109
  %v1111 = vpop.f32.mrb[0].mxu0
  %1112 = vmatprep.mubr.bf16.mxu0 0
  %1113 = vmatmul.mubr.bf16.gmra.mrb[0].mxu0 %v957
  %v1114 = vpop.f32.mrb[0].mxu0
  %v1115 = vadd.f32 %v1027, %v1114
  %v1116 = vpop.f32.mrb[0].mxu0
  %v1117 = vpop.f32.mrb[0].mxu0
  %v1118 = vadd.f32 %v1030, %v1117
  %v1119 = vpop.f32.mrb[0].mxu0
  %1120 = vmatprep.mubr.bf16.mxu0 0
  %1121 = vmatmul.mubr.bf16.gmra.mrb[0].mxu0 %v960
  %v1122 = vpop.f32.mrb[0].mxu0
  %v1123 = vadd.f32 %v1035, %v1122
  %v1124 = vpop.f32.mrb[0].mxu0
  %v1125 = vpop.f32.mrb[0].mxu0
  %v1126 = vadd.f32 %v1038, %v1125
  %v1127 = vpop.f32.mrb[0].mxu0
  %1128 = vmatprep.mubr.bf16.mxu0 0
  %1129 = vmatmul.mubr.bf16.gmra.mrb[0].mxu0 %v963
  %v1130 = vpop.f32.mrb[0].mxu0
  %v1131 = vadd.f32 %v1043, %v1130
  %v1132 = vpop.f32.mrb[0].mxu0
  %v1133 = vpop.f32.mrb[0].mxu0
  %v1134 = vadd.f32 %v1046, %v1133
  %v1135 = vpop.f32.mrb[0].mxu0
  %1136 = vmatprep.mubr.bf16.mxu0 0
  %1137 = vmatmul.mubr.bf16.gmra.mrb[0].mxu0 %v966
  %v1138 = vpop.f32.mrb[0].mxu0
  %v1139 = vadd.f32 %v1051, %v1138
  %v1140 = vpop.f32.mrb[0].mxu0
  %v1141 = vpop.f32.mrb[0].mxu0
  %v1142 = vpop.f32.mrb[0].mxu0
  %1143 = vdwg.mxu0
  %v1144 = vmax.f32 %v807, %v1091
  %v1145 = vmax.f32 %v808, %v1094
  %v1146 = vmax.f32 %v809, %v1099
  %v1147 = vmax.f32 %v810, %v1102
  %v1148 = vmax.f32 %v811, %v1107
  %v1149 = vmax.f32 %v812, %v1110
  %v1150 = vmax.f32 %v813, %v1115
  %v1151 = vmax.f32 %v814, %v1118
  %v1152 = vmax.f32 %v815, %v1123
  %v1153 = vmax.f32 %v816, %v1126
  %v1154 = vmax.f32 %v817, %v1131
  %v1155 = vmax.f32 %v818, %v1134
  %v1156 = vmax.f32 %v819, %v1139
  %s1157 = scalar_lea.vmem %s0, 468
  %v1158 = vld [vmem:[%s1157] sm:$0xff]
  %v1159 = vld [vmem:[%s1157 + $0x8] sm:$0xf]
  %v1160 = vld [vmem:[%s1157 + $0xc] sm:$0xff]
  %v1161 = vld [vmem:[%s1157 + $0x14] sm:$0xf]
  %v1162 = vld [vmem:[%s1157 + $0x18] sm:$0xff]
  %v1163 = vld [vmem:[%s1157 + $0x20] sm:$0xf]
  %v1164 = vld [vmem:[%s1157 + $0x24] sm:$0xff]
  %v1165 = vld [vmem:[%s1157 + $0x2c] sm:$0xf]
  %v1166 = vld [vmem:[%s1157 + $0x30] sm:$0xff]
  %v1167 = vld [vmem:[%s1157 + $0x38] sm:$0xf]
  %v1168 = vld [vmem:[%s1157 + $0x3c] sm:$0xff]
  %v1169 = vld [vmem:[%s1157 + $0x44] sm:$0xf]
  %v1170 = vld [vmem:[%s1157 + $0x48] sm:$0xff]
  %v1171 = vld [vmem:[%s1157 + $0x50] sm:$0xf]
  %v1172 = vld [vmem:[%s1157 + $0x54] sm:$0xff]
  %v1173 = vld [vmem:[%s1157 + $0x5c] sm:$0xf]
  %v1174 = vld [vmem:[%s1157 + $0x60] sm:$0xff]
  %v1175 = vld [vmem:[%s1157 + $0x68] sm:$0xf]
  %v1176 = vld [vmem:[%s1157 + $0x6c] sm:$0xff]
  %v1177 = vld [vmem:[%s1157 + $0x74] sm:$0xf]
  %v1178 = vld [vmem:[%s1157 + $0x78] sm:$0xff]
  %v1179 = vld [vmem:[%s1157 + $0x80] sm:$0xf]
  %v1180 = vld [vmem:[%s1157 + $0x84] sm:$0xff]
  %v1181 = vld [vmem:[%s1157 + $0x8c] sm:$0xf]
  %v1182 = vld [vmem:[%s1157 + $0x90] sm:$0x11]
  %v1183 = vld [vmem:[%s1157 + $0x98] sm:$0x1]
  %v1210 = vunpack.c.l.b16 %v1158
  %v1211 = vunpack.c.h.b16 %v1158
  %v1212 = vunpack.c.l.b16 %v1159
  %v1213 = vunpack.c.l.b16 %v1160
  %v1214 = vunpack.c.h.b16 %v1160
  %v1215 = vunpack.c.l.b16 %v1161
  %v1216 = vunpack.c.l.b16 %v1162
  %v1217 = vunpack.c.h.b16 %v1162
  %v1218 = vunpack.c.l.b16 %v1163
  %v1219 = vunpack.c.l.b16 %v1164
  %v1220 = vunpack.c.h.b16 %v1164
  %v1221 = vunpack.c.l.b16 %v1165
  %v1222 = vunpack.c.l.b16 %v1166
  %v1223 = vunpack.c.h.b16 %v1166
  %v1224 = vunpack.c.l.b16 %v1167
  %v1225 = vunpack.c.l.b16 %v1168
  %v1226 = vunpack.c.h.b16 %v1168
  %v1227 = vunpack.c.l.b16 %v1169
  %v1228 = vunpack.c.l.b16 %v1170
  %v1229 = vunpack.c.h.b16 %v1170
  %v1230 = vunpack.c.l.b16 %v1171
  %v1231 = vunpack.c.l.b16 %v1172
  %v1232 = vunpack.c.h.b16 %v1172
  %v1233 = vunpack.c.l.b16 %v1173
  %v1234 = vunpack.c.l.b16 %v1174
  %v1235 = vunpack.c.h.b16 %v1174
  %v1236 = vunpack.c.l.b16 %v1175
  %v1237 = vunpack.c.l.b16 %v1176
  %v1238 = vunpack.c.h.b16 %v1176
  %v1239 = vunpack.c.l.b16 %v1177
  %v1240 = vunpack.c.l.b16 %v1178
  %v1241 = vunpack.c.h.b16 %v1178
  %v1242 = vunpack.c.l.b16 %v1179
  %v1243 = vunpack.c.l.b16 %v1180
  %v1244 = vunpack.c.h.b16 %v1180
  %v1245 = vunpack.c.l.b16 %v1181
  %v1246 = vunpack.c.l.b16 %v1182
  %v1247 = vunpack.c.h.b16 %v1182
  %v1248 = vunpack.c.l.b16 %v1183
  %v1249 = vpack.c.b16 %v1213, %v1210
  %v1250 = vpack.c.b16 %v1214, %v1211
  %v1251 = vpack.c.b16 %v1215, %v1212
  %v1252 = vpack.c.b16 %v1219, %v1216
  %v1253 = vpack.c.b16 %v1220, %v1217
  %v1254 = vpack.c.b16 %v1221, %v1218
  %v1255 = vpack.c.b16 %v1225, %v1222
  %v1256 = vpack.c.b16 %v1226, %v1223
  %v1257 = vpack.c.b16 %v1227, %v1224
  %v1258 = vpack.c.b16 %v1231, %v1228
  %v1259 = vpack.c.b16 %v1232, %v1229
  %v1260 = vpack.c.b16 %v1233, %v1230
  %v1261 = vpack.c.b16 %v1237, %v1234
  %v1262 = vpack.c.b16 %v1238, %v1235
  %v1263 = vpack.c.b16 %v1239, %v1236
  %v1264 = vpack.c.b16 %v1243, %v1240
  %v1265 = vpack.c.b16 %v1244, %v1241
  %v1266 = vpack.c.b16 %v1245, %v1242
  %v1267 = vpack.c.b16 %v1246, %v1246
  %v1268 = vpack.c.b16 %v1247, %v1247
  %v1269 = vpack.c.b16 %v1248, %v1248
  %v1285 = vsel %vm285, %v1251, 0
  %v1288 = vsel %vm285, %v1254, 0
  %v1291 = vsel %vm285, %v1257, 0
  %v1294 = vsel %vm285, %v1260, 0
  %v1297 = vsel %vm285, %v1263, 0
  %v1300 = vsel %vm285, %v1266, 0
  %v1303 = vsel %vm285, %v1269, 0
  %1305 = vmatprep.subr.bf16.mxu0 0
  %1306 = vmatpush1.bf16.msra.mxu0 %v249
  %1307 = vmatprep.subr.bf16.mxu0 0
  %1308 = vmatpush1.bf16.msra.mxu0 %v250
  %1309 = vmatprep.subr.bf16.mxu0 0
  %1310 = vmatpush1.bf16.msra.mxu0 %v251
  %1311 = vmatprep.subr.bf16.mxu0 0
  %1312 = vmatpush1.bf16.msra.mxu0 %v252
  %1313 = vmatprep.subr.bf16.mxu0 0
  %1314 = vmatpush1.bf16.msra.mxu0 %v253
  %1315 = vmatprep.subr.bf16.mxu0 0
  %1316 = vmatpush1.bf16.msra.mxu0 %v254
  %1317 = vmatprep.subr.bf16.mxu0 0
  %1318 = vmatpush1.bf16.msra.mxu0 %v255
  %1319 = vmatprep.subr.bf16.mxu0 0
  %1320 = vmatpush1.bf16.msra.mxu0 %v256
  %1321 = vmatprep.subr.bf16.mxu0 0
  %1322 = vmatpush1.bf16.msra.mxu0 %v257
  %1323 = vmatprep.subr.bf16.mxu0 0
  %1324 = vmatpush1.bf16.msra.mxu0 %v258
  %1325 = vmatprep.subr.bf16.mxu0 0
  %1326 = vmatpush1.bf16.msra.mxu0 %v259
  %1327 = vmatprep.subr.bf16.mxu0 0
  %1328 = vmatpush1.bf16.msra.mxu0 %v260
  %1329 = vmatprep.subr.bf16.mxu0 0
  %1330 = vmatpush1.bf16.msra.mxu0 %v261
  %1331 = vmatprep.subr.bf16.mxu0 0
  %1332 = vmatpush1.bf16.msra.mxu0 %v262
  %1333 = vmatprep.subr.bf16.mxu0 0
  %1334 = vmatpush1.bf16.msra.mxu0 %v263
  %1335 = vmatprep.subr.bf16.mxu0 0
  %1336 = vmatpush1.bf16.msra.mxu0 %v264
  %1337 = vmatprep.mubr.bf16.mxu0 %v1250
  %1338 = vmatmul.mubr.bf16.gmra.mrb[0].mxu0 %v1249
  %v1339 = vpop.f32.mrb[0].mxu0
  %v1340 = vadd.f32 0.0, %v1339
  %v1341 = vpop.f32.mrb[0].mxu0
  %v1342 = vpop.f32.mrb[0].mxu0
  %v1343 = vadd.f32 0.0, %v1342
  %v1344 = vpop.f32.mrb[0].mxu0
  %1345 = vmatprep.mubr.bf16.mxu0 %v1253
  %1346 = vmatmul.mubr.bf16.gmra.mrb[0].mxu0 %v1252
  %v1347 = vpop.f32.mrb[0].mxu0
  %v1348 = vadd.f32 0.0, %v1347
  %v1349 = vpop.f32.mrb[0].mxu0
  %v1350 = vpop.f32.mrb[0].mxu0
  %v1351 = vadd.f32 0.0, %v1350
  %v1352 = vpop.f32.mrb[0].mxu0
  %1353 = vmatprep.mubr.bf16.mxu0 %v1256
  %1354 = vmatmul.mubr.bf16.gmra.mrb[0].mxu0 %v1255
  %v1355 = vpop.f32.mrb[0].mxu0
  %v1356 = vadd.f32 0.0, %v1355
  %v1357 = vpop.f32.mrb[0].mxu0
  %v1358 = vpop.f32.mrb[0].mxu0
  %v1359 = vadd.f32 0.0, %v1358
  %v1360 = vpop.f32.mrb[0].mxu0
  %1361 = vmatprep.mubr.bf16.mxu0 %v1259
  %1362 = vmatmul.mubr.bf16.gmra.mrb[0].mxu0 %v1258
  %v1363 = vpop.f32.mrb[0].mxu0
  %v1364 = vadd.f32 0.0, %v1363
  %v1365 = vpop.f32.mrb[0].mxu0
  %v1366 = vpop.f32.mrb[0].mxu0
  %v1367 = vadd.f32 0.0, %v1366
  %v1368 = vpop.f32.mrb[0].mxu0
  %1369 = vmatprep.mubr.bf16.mxu0 %v1262
  %1370 = vmatmul.mubr.bf16.gmra.mrb[0].mxu0 %v1261
  %v1371 = vpop.f32.mrb[0].mxu0
  %v1372 = vadd.f32 0.0, %v1371
  %v1373 = vpop.f32.mrb[0].mxu0
  %v1374 = vpop.f32.mrb[0].mxu0
  %v1375 = vadd.f32 0.0, %v1374
  %v1376 = vpop.f32.mrb[0].mxu0
  %1377 = vmatprep.mubr.bf16.mxu0 %v1265
  %1378 = vmatmul.mubr.bf16.gmra.mrb[0].mxu0 %v1264
  %v1379 = vpop.f32.mrb[0].mxu0
  %v1380 = vadd.f32 0.0, %v1379
  %v1381 = vpop.f32.mrb[0].mxu0
  %v1382 = vpop.f32.mrb[0].mxu0
  %v1383 = vadd.f32 0.0, %v1382
  %v1384 = vpop.f32.mrb[0].mxu0
  %1385 = vmatprep.mubr.bf16.mxu0 %v1268
  %1386 = vmatmul.mubr.bf16.gmra.mrb[0].mxu0 %v1267
  %v1387 = vpop.f32.mrb[0].mxu0
  %v1388 = vadd.f32 0.0, %v1387
  %v1389 = vpop.f32.mrb[0].mxu0
  %v1390 = vpop.f32.mrb[0].mxu0
  %v1391 = vpop.f32.mrb[0].mxu0
  %1392 = vdwg.mxu0
  %1393 = vmatprep.subr.bf16.mxu0 0
  %1394 = vmatpush1.bf16.msra.mxu0 %v265
  %1395 = vmatprep.subr.bf16.mxu0 0
  %1396 = vmatpush1.bf16.msra.mxu0 %v266
  %1397 = vmatprep.subr.bf16.mxu0 0
  %1398 = vmatpush1.bf16.msra.mxu0 0
  %1399 = vmatprep.subr.bf16.mxu0 0
  %1400 = vmatpush1.bf16.msra.mxu0 0
  %1401 = vmatprep.subr.bf16.mxu0 0
  %1402 = vmatpush1.bf16.msra.mxu0 0
  %1403 = vmatprep.subr.bf16.mxu0 0
  %1404 = vmatpush1.bf16.msra.mxu0 0
  %1405 = vmatprep.subr.bf16.mxu0 0
  %1406 = vmatpush1.bf16.msra.mxu0 0
  %1407 = vmatprep.subr.bf16.mxu0 0
  %1408 = vmatpush1.bf16.msra.mxu0 0
  %1409 = vmatprep.subr.bf16.mxu0 0
  %1410 = vmatpush1.bf16.msra.mxu0 0
  %1411 = vmatprep.subr.bf16.mxu0 0
  %1412 = vmatpush1.bf16.msra.mxu0 0
  %1413 = vmatprep.subr.bf16.mxu0 0
  %1414 = vmatpush1.bf16.msra.mxu0 0
  %1415 = vmatprep.subr.bf16.mxu0 0
  %1416 = vmatpush1.bf16.msra.mxu0 0
  %1417 = vmatprep.subr.bf16.mxu0 0
  %1418 = vmatpush1.bf16.msra.mxu0 0
  %1419 = vmatprep.subr.bf16.mxu0 0
  %1420 = vmatpush1.bf16.msra.mxu0 0
  %1421 = vmatprep.subr.bf16.mxu0 0
  %1422 = vmatpush1.bf16.msra.mxu0 0
  %1423 = vmatprep.subr.bf16.mxu0 0
  %1424 = vmatpush1.bf16.msra.mxu0 0
  %1425 = vmatprep.mubr.bf16.mxu0 0
  %1426 = vmatmul.mubr.bf16.gmra.mrb[0].mxu0 %v1285
  %v1427 = vpop.f32.mrb[0].mxu0
  %v1428 = vadd.f32 %v1340, %v1427
  %v1429 = vpop.f32.mrb[0].mxu0
  %v1430 = vpop.f32.mrb[0].mxu0
  %v1431 = vadd.f32 %v1343, %v1430
  %v1432 = vpop.f32.mrb[0].mxu0
  %1433 = vmatprep.mubr.bf16.mxu0 0
  %1434 = vmatmul.mubr.bf16.gmra.mrb[0].mxu0 %v1288
  %v1435 = vpop.f32.mrb[0].mxu0
  %v1436 = vadd.f32 %v1348, %v1435
  %v1437 = vpop.f32.mrb[0].mxu0
  %v1438 = vpop.f32.mrb[0].mxu0
  %v1439 = vadd.f32 %v1351, %v1438
  %v1440 = vpop.f32.mrb[0].mxu0
  %1441 = vmatprep.mubr.bf16.mxu0 0
  %1442 = vmatmul.mubr.bf16.gmra.mrb[0].mxu0 %v1291
  %v1443 = vpop.f32.mrb[0].mxu0
  %v1444 = vadd.f32 %v1356, %v1443
  %v1445 = vpop.f32.mrb[0].mxu0
  %v1446 = vpop.f32.mrb[0].mxu0
  %v1447 = vadd.f32 %v1359, %v1446
  %v1448 = vpop.f32.mrb[0].mxu0
  %1449 = vmatprep.mubr.bf16.mxu0 0
  %1450 = vmatmul.mubr.bf16.gmra.mrb[0].mxu0 %v1294
  %v1451 = vpop.f32.mrb[0].mxu0
  %v1452 = vadd.f32 %v1364, %v1451
  %v1453 = vpop.f32.mrb[0].mxu0
  %v1454 = vpop.f32.mrb[0].mxu0
  %v1455 = vadd.f32 %v1367, %v1454
  %v1456 = vpop.f32.mrb[0].mxu0
  %1457 = vmatprep.mubr.bf16.mxu0 0
  %1458 = vmatmul.mubr.bf16.gmra.mrb[0].mxu0 %v1297
  %v1459 = vpop.f32.mrb[0].mxu0
  %v1460 = vadd.f32 %v1372, %v1459
  %v1461 = vpop.f32.mrb[0].mxu0
  %v1462 = vpop.f32.mrb[0].mxu0
  %v1463 = vadd.f32 %v1375, %v1462
  %v1464 = vpop.f32.mrb[0].mxu0
  %1465 = vmatprep.mubr.bf16.mxu0 0
  %1466 = vmatmul.mubr.bf16.gmra.mrb[0].mxu0 %v1300
  %v1467 = vpop.f32.mrb[0].mxu0
  %v1468 = vadd.f32 %v1380, %v1467
  %v1469 = vpop.f32.mrb[0].mxu0
  %v1470 = vpop.f32.mrb[0].mxu0
  %v1471 = vadd.f32 %v1383, %v1470
  %v1472 = vpop.f32.mrb[0].mxu0
  %1473 = vmatprep.mubr.bf16.mxu0 0
  %1474 = vmatmul.mubr.bf16.gmra.mrb[0].mxu0 %v1303
  %v1475 = vpop.f32.mrb[0].mxu0
  %v1476 = vadd.f32 %v1388, %v1475
  %v1477 = vpop.f32.mrb[0].mxu0
  %v1478 = vpop.f32.mrb[0].mxu0
  %v1479 = vpop.f32.mrb[0].mxu0
  %1480 = vdwg.mxu0
  %v1481 = vmax.f32 %v1144, %v1428
  %v1482 = vmax.f32 %v1145, %v1431
  %v1483 = vmax.f32 %v1146, %v1436
  %v1484 = vmax.f32 %v1147, %v1439
  %v1485 = vmax.f32 %v1148, %v1444
  %v1486 = vmax.f32 %v1149, %v1447
  %v1487 = vmax.f32 %v1150, %v1452
  %v1488 = vmax.f32 %v1151, %v1455
  %v1489 = vmax.f32 %v1152, %v1460
  %v1490 = vmax.f32 %v1153, %v1463
  %v1491 = vmax.f32 %v1154, %v1468
  %v1492 = vmax.f32 %v1155, %v1471
  %v1493 = vmax.f32 %v1156, %v1476
  %v1494 = vld [vmem:[%s2] sm:$0x1]
  %v1496 = vlaneseq
  %v1497 = vshrl.u32 %v1496, 7
  %v1498 = vsub.s32 0, %v1497
  %v1499 = vrot.slane %v1494, %v1498
  %v1501 = vadd.f32 %v1481, %v1499
  %v1502 = vadd.f32 %v1482, %v1499
  %v1503 = vadd.f32 %v1483, %v1499
  %v1504 = vadd.f32 %v1484, %v1499
  %v1505 = vadd.f32 %v1485, %v1499
  %v1506 = vadd.f32 %v1486, %v1499
  %v1507 = vadd.f32 %v1487, %v1499
  %v1508 = vadd.f32 %v1488, %v1499
  %v1509 = vadd.f32 %v1489, %v1499
  %v1510 = vadd.f32 %v1490, %v1499
  %v1511 = vadd.f32 %v1491, %v1499
  %v1512 = vadd.f32 %v1492, %v1499
  %v1513 = vadd.f32 %v1493, %v1499
  %v1514 = vmax.f32 %v1501, 0.0
  %v1515 = vmax.f32 %v1502, 0.0
  %v1516 = vmax.f32 %v1503, 0.0
  %v1517 = vmax.f32 %v1504, 0.0
  %v1518 = vmax.f32 %v1505, 0.0
  %v1519 = vmax.f32 %v1506, 0.0
  %v1520 = vmax.f32 %v1507, 0.0
  %v1521 = vmax.f32 %v1508, 0.0
  %v1522 = vmax.f32 %v1509, 0.0
  %v1523 = vmax.f32 %v1510, 0.0
  %v1524 = vmax.f32 %v1511, 0.0
  %v1525 = vmax.f32 %v1512, 0.0
  %v1526 = vmax.f32 %v1513, 0.0
  %v1527 = vpack.c.bf16 %v1515, %v1514
  %v1528 = vpack.c.bf16 %v1517, %v1516
  %v1529 = vpack.c.bf16 %v1519, %v1518
  %v1530 = vpack.c.bf16 %v1521, %v1520
  %v1531 = vpack.c.bf16 %v1523, %v1522
  %v1532 = vpack.c.bf16 %v1525, %v1524
  %v1533 = vpack.c.bf16 %v1526, %v1526
  %v1541 = vunpack.c.l.b16 %v1527
  %v1542 = vunpack.c.h.b16 %v1527
  %v1543 = vunpack.c.l.b16 %v1528
  %v1544 = vunpack.c.h.b16 %v1528
  %v1545 = vunpack.c.l.b16 %v1529
  %v1546 = vunpack.c.h.b16 %v1529
  %v1547 = vunpack.c.l.b16 %v1530
  %v1548 = vunpack.c.h.b16 %v1530
  %v1549 = vunpack.c.l.b16 %v1531
  %v1550 = vunpack.c.h.b16 %v1531
  %v1551 = vunpack.c.l.b16 %v1532
  %v1552 = vunpack.c.h.b16 %v1532
  %v1553 = vunpack.c.l.b16 %v1533
  %v1554 = vpack.c.b16 %v1541, %v1541
  %v1555 = vpack.c.b16 %v1542, %v1542
  %v1556 = vpack.c.b16 %v1543, %v1543
  %v1557 = vpack.c.b16 %v1544, %v1544
  %v1558 = vpack.c.b16 %v1545, %v1545
  %v1559 = vpack.c.b16 %v1546, %v1546
  %v1560 = vpack.c.b16 %v1547, %v1547
  %v1561 = vpack.c.b16 %v1548, %v1548
  %v1562 = vpack.c.b16 %v1549, %v1549
  %v1563 = vpack.c.b16 %v1550, %v1550
  %v1564 = vpack.c.b16 %v1551, %v1551
  %v1565 = vpack.c.b16 %v1552, %v1552
  %v1566 = vpack.c.b16 %v1553, %v1553
  %vm1580 = vcmask 519168
  %1581 = vst.msk [vmem:[%s3] sm:$0xf] %vm1580, %v1554
  %1582 = vst.msk [vmem:[%s3 + $0x4] sm:$0xf] %vm1580, %v1555
  %1583 = vst.msk [vmem:[%s3 + $0x8] sm:$0xf] %vm1580, %v1556
  %1584 = vst.msk [vmem:[%s3 + $0xc] sm:$0xf] %vm1580, %v1557
  %1585 = vst.msk [vmem:[%s3 + $0x10] sm:$0xf] %vm1580, %v1558
  %1586 = vst.msk [vmem:[%s3 + $0x14] sm:$0xf] %vm1580, %v1559
  %1587 = vst.msk [vmem:[%s3 + $0x18] sm:$0xf] %vm1580, %v1560
  %1588 = vst.msk [vmem:[%s3 + $0x1c] sm:$0xf] %vm1580, %v1561
  %1589 = vst.msk [vmem:[%s3 + $0x20] sm:$0xf] %vm1580, %v1562
  %1590 = vst.msk [vmem:[%s3 + $0x24] sm:$0xf] %vm1580, %v1563
  %1591 = vst.msk [vmem:[%s3 + $0x28] sm:$0xf] %vm1580, %v1564
  %1592 = vst.msk [vmem:[%s3 + $0x2c] sm:$0xf] %vm1580, %v1565
  %vm1593 = vcmask 516096
  %1594 = vst.msk [vmem:[%s3 + $0x30] sm:$0x1] %vm1593, %v1566
  // Predicated region
  $region14: #{simple_cnn_forward.4} parent=0 // pred_check
    _
  $region15: #{simple_cnn_forward.4} parent=0 // pred_check_branch
    %1596 = sbr.rel (0) target = $region17
  $region16: #{simple_cnn_forward.4} parent=0 // pred_region
    _
  $region17: #{simple_cnn_forward.4} parent=0 // pred_fallthru
    _
  // Predicated region
  $region18: #{simple_cnn_forward.4} parent=0 // pred_check
    _
  $region19: #{simple_cnn_forward.4} parent=0 // pred_check_branch
    %1598 = sbr.rel (0) target = $region21
  $region20: #{simple_cnn_forward.4} parent=0 // pred_region
    _
  $region21: #{simple_cnn_forward.4} parent=0 // pred_fallthru
    _

// kernel: simple_cnn_forward.5
$region0: #{simple_cnn_forward.5}
  #allocation0 [shape = 'u32[]', space=smem, size = 0x4, offset = 0x4, fixed_abs, tag = 'smem constant byte address 0x4 - core index']
  #allocation1 [shape = 'u32[144,128]{1,0:T(1,128)}', space=vmem, size = 0x12000, scoped, tag = 'internal scratch']
  %s0 = inlined_call_operand.vmem [shape: bf16[2,3136], index: 0, kind: input, shape index: {}]
  %s1 = inlined_call_operand.vmem [shape: bf16[3136,128], index: 1, kind: input, shape index: {}]
  %s2 = inlined_call_operand.vmem [shape: f32[1,128], index: 2, kind: input, shape index: {}]
  %s3 = inlined_call_operand.vmem [shape: bf16[128,128], index: 3, kind: input, shape index: {}]
  %s4 = inlined_call_operand.vmem [shape: f32[1,128], index: 4, kind: input, shape index: {}]
  %s5 = inlined_call_operand.hbm [shape: f32[2,128], index: 5, kind: output, shape index: {}]
  %s6 = sld [smem:[#allocation0]]
  $region30: #{simple_cnn_forward.5} parent=0
    _
  %s8 = ssub.s32 1, %s6
  %s9 = scalar_select 0, %s8, %s6
  $region1: #{simple_cnn_forward.5} parent=0
    #allocation2 [shape = 'u8[1024]{0}', space=vmem, size = 0x400, scoped, tag = 'output window, operand 0, single buffered']
    #allocation3 [shape = 's32[1]{0}', space=sflag, size = 0x4, scoped, tag = 'scoped memory for simple_cnn_forward.5']
    %10 = vsyncpa [#allocation3], 0
    // Predicated region
    $region2: #{simple_cnn_forward.5} parent=1 // pred_check
      _
    $region3: #{simple_cnn_forward.5} parent=1 // pred_check_branch
      %12 = sbr.rel (0) target = $region5
    $region4: #{simple_cnn_forward.5} parent=1 // pred_region
      _
    $region5: #{simple_cnn_forward.5} parent=1 // pred_fallthru
      _
    // Predicated region
    $region6: #{simple_cnn_forward.5} parent=1 // pred_check
      _
    $region7: #{simple_cnn_forward.5} parent=1 // pred_check_branch
      %14 = sbr.rel (0) target = $region9
    $region8: #{simple_cnn_forward.5} parent=1 // pred_region
      _
    $region9: #{simple_cnn_forward.5} parent=1 // pred_fallthru
      _
    // Predicated region
    $region10: #{simple_cnn_forward.5} parent=1 // pred_check
      _
    $region11: #{simple_cnn_forward.5} parent=1 // pred_check_branch
      %16 = sbr.rel (0) target = $region13
    $region12: #{simple_cnn_forward.5} parent=1 // pred_region
      _
    $region13: #{simple_cnn_forward.5} parent=1 // pred_fallthru
      _
    // Predicated region
    $region14: #{simple_cnn_forward.5} parent=1 // pred_check
      _
    $region15: #{simple_cnn_forward.5} parent=1 // pred_check_branch
      %18 = sbr.rel (0) target = $region17
    $region16: #{simple_cnn_forward.5} parent=1 // pred_region
      _
    $region17: #{simple_cnn_forward.5} parent=1 // pred_fallthru
      _
    // Predicated region
    $region18: #{simple_cnn_forward.5} parent=1 // pred_check
      _
    $region19: #{simple_cnn_forward.5} parent=1 // pred_check_branch
      %20 = sbr.rel (0) target = $region21
    $region20: #{simple_cnn_forward.5} parent=1 // pred_region
      _
    $region21: #{simple_cnn_forward.5} parent=1 // pred_fallthru
      _
    %v22 = vld [vmem:[%s0] sm:$0xff]
    %v23 = vld [vmem:[%s0 + $0x8] sm:$0xff]
    %v24 = vld [vmem:[%s0 + $0x10] sm:$0xff]
    %v25 = vld [vmem:[%s0 + $0x18] sm:$0x1]
    %v26 = vld [vmem:[%s1] sm:$0xf]
    %v27 = vld [vmem:[%s1 + $0x4] sm:$0xf]
    %v28 = vld [vmem:[%s1 + $0x8] sm:$0xf]
    %v29 = vld [vmem:[%s1 + $0xc] sm:$0xf]
    %v30 = vld [vmem:[%s1 + $0x10] sm:$0xf]
    %v31 = vld [vmem:[%s1 + $0x14] sm:$0xf]
    %v32 = vld [vmem:[%s1 + $0x18] sm:$0xf]
    %v33 = vld [vmem:[%s1 + $0x1c] sm:$0xf]
    %v34 = vld [vmem:[%s1 + $0x20] sm:$0xf]
    %v35 = vld [vmem:[%s1 + $0x24] sm:$0xf]
    %v36 = vld [vmem:[%s1 + $0x28] sm:$0xf]
    %v37 = vld [vmem:[%s1 + $0x2c] sm:$0xf]
    %v38 = vld [vmem:[%s1 + $0x30] sm:$0xf]
    %v39 = vld [vmem:[%s1 + $0x34] sm:$0xf]
    %v40 = vld [vmem:[%s1 + $0x38] sm:$0xf]
    %v41 = vld [vmem:[%s1 + $0x3c] sm:$0xf]
    %v42 = vld [vmem:[%s1 + $0x40] sm:$0xf]
    %v43 = vld [vmem:[%s1 + $0x44] sm:$0xf]
    %v44 = vld [vmem:[%s1 + $0x48] sm:$0xf]
    %v45 = vld [vmem:[%s1 + $0x4c] sm:$0xf]
    %v46 = vld [vmem:[%s1 + $0x50] sm:$0xf]
    %v47 = vld [vmem:[%s1 + $0x54] sm:$0xf]
    %v48 = vld [vmem:[%s1 + $0x58] sm:$0xf]
    %v49 = vld [vmem:[%s1 + $0x5c] sm:$0xf]
    %v50 = vld [vmem:[%s1 + $0x60] sm:$0xf]
    %v51 = vld [vmem:[%s1 + $0x64] sm:$0xf]
    %v52 = vld [vmem:[%s1 + $0x68] sm:$0xf]
    %v53 = vld [vmem:[%s1 + $0x6c] sm:$0xf]
    %v54 = vld [vmem:[%s1 + $0x70] sm:$0xf]
    %v55 = vld [vmem:[%s1 + $0x74] sm:$0xf]
    %v56 = vld [vmem:[%s1 + $0x78] sm:$0xf]
    %v57 = vld [vmem:[%s1 + $0x7c] sm:$0xf]
    %v58 = vld [vmem:[%s1 + $0x80] sm:$0xf]
    %v59 = vld [vmem:[%s1 + $0x84] sm:$0xf]
    %v60 = vld [vmem:[%s1 + $0x88] sm:$0xf]
    %v61 = vld [vmem:[%s1 + $0x8c] sm:$0xf]
    %v62 = vld [vmem:[%s1 + $0x90] sm:$0xf]
    %v63 = vld [vmem:[%s1 + $0x94] sm:$0xf]
    %v64 = vld [vmem:[%s1 + $0x98] sm:$0xf]
    %v65 = vld [vmem:[%s1 + $0x9c] sm:$0xf]
    %v66 = vld [vmem:[%s1 + $0xa0] sm:$0xf]
    %v67 = vld [vmem:[%s1 + $0xa4] sm:$0xf]
    %v68 = vld [vmem:[%s1 + $0xa8] sm:$0xf]
    %v69 = vld [vmem:[%s1 + $0xac] sm:$0xf]
    %v70 = vld [vmem:[%s1 + $0xb0] sm:$0xf]
    %v71 = vld [vmem:[%s1 + $0xb4] sm:$0xf]
    %v72 = vld [vmem:[%s1 + $0xb8] sm:$0xf]
    %v73 = vld [vmem:[%s1 + $0xbc] sm:$0xf]
    %v74 = vld [vmem:[%s1 + $0xc0] sm:$0xf]
    %v75 = vld [vmem:[%s1 + $0xc4] sm:$0xf]
    %v76 = vld [vmem:[%s1 + $0xc8] sm:$0xf]
    %v77 = vld [vmem:[%s1 + $0xcc] sm:$0xf]
    %v78 = vld [vmem:[%s1 + $0xd0] sm:$0xf]
    %v79 = vld [vmem:[%s1 + $0xd4] sm:$0xf]
    %v80 = vld [vmem:[%s1 + $0xd8] sm:$0xf]
    %v81 = vld [vmem:[%s1 + $0xdc] sm:$0xf]
    %v82 = vld [vmem:[%s1 + $0xe0] sm:$0xf]
    %v83 = vld [vmem:[%s1 + $0xe4] sm:$0xf]
    %v84 = vld [vmem:[%s1 + $0xe8] sm:$0xf]
    %v85 = vld [vmem:[%s1 + $0xec] sm:$0xf]
    %v86 = vld [vmem:[%s1 + $0xf0] sm:$0xf]
    %v87 = vld [vmem:[%s1 + $0xf4] sm:$0xf]
    %v88 = vld [vmem:[%s1 + $0xf8] sm:$0xf]
    %v89 = vld [vmem:[%s1 + $0xfc] sm:$0xf]
    %v90 = vld [vmem:[%s1 + $0x100] sm:$0xf]
    %v91 = vld [vmem:[%s1 + $0x104] sm:$0xf]
    %v92 = vld [vmem:[%s1 + $0x108] sm:$0xf]
    %v93 = vld [vmem:[%s1 + $0x10c] sm:$0xf]
    %v94 = vld [vmem:[%s1 + $0x110] sm:$0xf]
    %v95 = vld [vmem:[%s1 + $0x114] sm:$0xf]
    %v96 = vld [vmem:[%s1 + $0x118] sm:$0xf]
    %v97 = vld [vmem:[%s1 + $0x11c] sm:$0xf]
    %v98 = vld [vmem:[%s1 + $0x120] sm:$0xf]
    %v99 = vld [vmem:[%s1 + $0x124] sm:$0xf]
    %v100 = vld [vmem:[%s1 + $0x128] sm:$0xf]
    %v101 = vld [vmem:[%s1 + $0x12c] sm:$0xf]
    %v102 = vld [vmem:[%s1 + $0x130] sm:$0xf]
    %v103 = vld [vmem:[%s1 + $0x134] sm:$0xf]
    %v104 = vld [vmem:[%s1 + $0x138] sm:$0xf]
    %v105 = vld [vmem:[%s1 + $0x13c] sm:$0xf]
    %v106 = vld [vmem:[%s1 + $0x140] sm:$0xf]
    %v107 = vld [vmem:[%s1 + $0x144] sm:$0xf]
    %v108 = vld [vmem:[%s1 + $0x148] sm:$0xf]
    %v109 = vld [vmem:[%s1 + $0x14c] sm:$0xf]
    %v110 = vld [vmem:[%s1 + $0x150] sm:$0xf]
    %v111 = vld [vmem:[%s1 + $0x154] sm:$0xf]
    %v112 = vld [vmem:[%s1 + $0x158] sm:$0xf]
    %v113 = vld [vmem:[%s1 + $0x15c] sm:$0xf]
    %v114 = vld [vmem:[%s1 + $0x160] sm:$0xf]
    %v115 = vld [vmem:[%s1 + $0x164] sm:$0xf]
    %v116 = vld [vmem:[%s1 + $0x168] sm:$0xf]
    %v117 = vld [vmem:[%s1 + $0x16c] sm:$0xf]
    %v118 = vld [vmem:[%s1 + $0x170] sm:$0xf]
    %v119 = vld [vmem:[%s1 + $0x174] sm:$0xf]
    %v120 = vld [vmem:[%s1 + $0x178] sm:$0xf]
    %v121 = vld [vmem:[%s1 + $0x17c] sm:$0xf]
    %v122 = vld [vmem:[%s1 + $0x180] sm:$0xf]
    %v123 = vld [vmem:[%s1 + $0x184] sm:$0xf]
    %v124 = vld [vmem:[%s1 + $0x188] sm:$0xf]
    %v125 = vld [vmem:[%s1 + $0x18c] sm:$0xf]
    %v126 = vld [vmem:[%s1 + $0x190] sm:$0xf]
    %v127 = vld [vmem:[%s1 + $0x194] sm:$0xf]
    %v128 = vld [vmem:[%s1 + $0x198] sm:$0xf]
    %v129 = vld [vmem:[%s1 + $0x19c] sm:$0xf]
    %v130 = vld [vmem:[%s1 + $0x1a0] sm:$0xf]
    %v131 = vld [vmem:[%s1 + $0x1a4] sm:$0xf]
    %v132 = vld [vmem:[%s1 + $0x1a8] sm:$0xf]
    %v133 = vld [vmem:[%s1 + $0x1ac] sm:$0xf]
    %v134 = vld [vmem:[%s1 + $0x1b0] sm:$0xf]
    %v135 = vld [vmem:[%s1 + $0x1b4] sm:$0xf]
    %v136 = vld [vmem:[%s1 + $0x1b8] sm:$0xf]
    %v137 = vld [vmem:[%s1 + $0x1bc] sm:$0xf]
    %v138 = vld [vmem:[%s1 + $0x1c0] sm:$0xf]
    %v139 = vld [vmem:[%s1 + $0x1c4] sm:$0xf]
    %v140 = vld [vmem:[%s1 + $0x1c8] sm:$0xf]
    %v141 = vld [vmem:[%s1 + $0x1cc] sm:$0xf]
    %v142 = vld [vmem:[%s1 + $0x1d0] sm:$0xf]
    %v143 = vld [vmem:[%s1 + $0x1d4] sm:$0xf]
    %v144 = vld [vmem:[%s1 + $0x1d8] sm:$0xf]
    %v145 = vld [vmem:[%s1 + $0x1dc] sm:$0xf]
    %v146 = vld [vmem:[%s1 + $0x1e0] sm:$0xf]
    %v147 = vld [vmem:[%s1 + $0x1e4] sm:$0xf]
    %v148 = vld [vmem:[%s1 + $0x1e8] sm:$0xf]
    %v149 = vld [vmem:[%s1 + $0x1ec] sm:$0xf]
    %v150 = vld [vmem:[%s1 + $0x1f0] sm:$0xf]
    %v151 = vld [vmem:[%s1 + $0x1f4] sm:$0xf]
    %v152 = vld [vmem:[%s1 + $0x1f8] sm:$0xf]
    %v153 = vld [vmem:[%s1 + $0x1fc] sm:$0xf]
    %v154 = vld [vmem:[%s1 + $0x200] sm:$0xf]
    %v155 = vld [vmem:[%s1 + $0x204] sm:$0xf]
    %v156 = vld [vmem:[%s1 + $0x208] sm:$0xf]
    %v157 = vld [vmem:[%s1 + $0x20c] sm:$0xf]
    %v158 = vld [vmem:[%s1 + $0x210] sm:$0xf]
    %v159 = vld [vmem:[%s1 + $0x214] sm:$0xf]
    %v160 = vld [vmem:[%s1 + $0x218] sm:$0xf]
    %v161 = vld [vmem:[%s1 + $0x21c] sm:$0xf]
    %v162 = vld [vmem:[%s1 + $0x220] sm:$0xf]
    %v163 = vld [vmem:[%s1 + $0x224] sm:$0xf]
    %v164 = vld [vmem:[%s1 + $0x228] sm:$0xf]
    %v165 = vld [vmem:[%s1 + $0x22c] sm:$0xf]
    %v166 = vld [vmem:[%s1 + $0x230] sm:$0xf]
    %v167 = vld [vmem:[%s1 + $0x234] sm:$0xf]
    %v168 = vld [vmem:[%s1 + $0x238] sm:$0xf]
    %v169 = vld [vmem:[%s1 + $0x23c] sm:$0xf]
    %v170 = vld [vmem:[%s1 + $0x240] sm:$0xf]
    %v171 = vld [vmem:[%s1 + $0x244] sm:$0xf]
    %v172 = vld [vmem:[%s1 + $0x248] sm:$0xf]
    %v173 = vld [vmem:[%s1 + $0x24c] sm:$0xf]
    %v174 = vld [vmem:[%s1 + $0x250] sm:$0xf]
    %v175 = vld [vmem:[%s1 + $0x254] sm:$0xf]
    %v176 = vld [vmem:[%s1 + $0x258] sm:$0xf]
    %v177 = vld [vmem:[%s1 + $0x25c] sm:$0xf]
    %v178 = vld [vmem:[%s1 + $0x260] sm:$0xf]
    %v179 = vld [vmem:[%s1 + $0x264] sm:$0xf]
    %v180 = vld [vmem:[%s1 + $0x268] sm:$0xf]
    %v181 = vld [vmem:[%s1 + $0x26c] sm:$0xf]
    %v182 = vld [vmem:[%s1 + $0x270] sm:$0xf]
    %v183 = vld [vmem:[%s1 + $0x274] sm:$0xf]
    %v184 = vld [vmem:[%s1 + $0x278] sm:$0xf]
    %v185 = vld [vmem:[%s1 + $0x27c] sm:$0xf]
    %v186 = vld [vmem:[%s1 + $0x280] sm:$0xf]
    %v187 = vld [vmem:[%s1 + $0x284] sm:$0xf]
    %v188 = vld [vmem:[%s1 + $0x288] sm:$0xf]
    %v189 = vld [vmem:[%s1 + $0x28c] sm:$0xf]
    %v190 = vld [vmem:[%s1 + $0x290] sm:$0xf]
    %v191 = vld [vmem:[%s1 + $0x294] sm:$0xf]
    %v192 = vld [vmem:[%s1 + $0x298] sm:$0xf]
    %v193 = vld [vmem:[%s1 + $0x29c] sm:$0xf]
    %v194 = vld [vmem:[%s1 + $0x2a0] sm:$0xf]
    %v195 = vld [vmem:[%s1 + $0x2a4] sm:$0xf]
    %v196 = vld [vmem:[%s1 + $0x2a8] sm:$0xf]
    %v197 = vld [vmem:[%s1 + $0x2ac] sm:$0xf]
    %v198 = vld [vmem:[%s1 + $0x2b0] sm:$0xf]
    %v199 = vld [vmem:[%s1 + $0x2b4] sm:$0xf]
    %v200 = vld [vmem:[%s1 + $0x2b8] sm:$0xf]
    %v201 = vld [vmem:[%s1 + $0x2bc] sm:$0xf]
    %v202 = vld [vmem:[%s1 + $0x2c0] sm:$0xf]
    %v203 = vld [vmem:[%s1 + $0x2c4] sm:$0xf]
    %v204 = vld [vmem:[%s1 + $0x2c8] sm:$0xf]
    %v205 = vld [vmem:[%s1 + $0x2cc] sm:$0xf]
    %v206 = vld [vmem:[%s1 + $0x2d0] sm:$0xf]
    %v207 = vld [vmem:[%s1 + $0x2d4] sm:$0xf]
    %v208 = vld [vmem:[%s1 + $0x2d8] sm:$0xf]
    %v209 = vld [vmem:[%s1 + $0x2dc] sm:$0xf]
    %v210 = vld [vmem:[%s1 + $0x2e0] sm:$0xf]
    %v211 = vld [vmem:[%s1 + $0x2e4] sm:$0xf]
    %v212 = vld [vmem:[%s1 + $0x2e8] sm:$0xf]
    %v213 = vld [vmem:[%s1 + $0x2ec] sm:$0xf]
    %v214 = vld [vmem:[%s1 + $0x2f0] sm:$0xf]
    %v215 = vld [vmem:[%s1 + $0x2f4] sm:$0xf]
    %v216 = vld [vmem:[%s1 + $0x2f8] sm:$0xf]
    %v217 = vld [vmem:[%s1 + $0x2fc] sm:$0xf]
    %v218 = vld [vmem:[%s1 + $0x300] sm:$0xf]
    %v219 = vld [vmem:[%s1 + $0x304] sm:$0xf]
    %v220 = vld [vmem:[%s1 + $0x308] sm:$0xf]
    %v221 = vld [vmem:[%s1 + $0x30c] sm:$0xf]
    %v222 = vld [vmem:[%s1 + $0x310] sm:$0xf]
    %v223 = vld [vmem:[%s1 + $0x314] sm:$0xf]
    %v224 = vld [vmem:[%s1 + $0x318] sm:$0xf]
    %v225 = vld [vmem:[%s1 + $0x31c] sm:$0xf]
    %v226 = vld [vmem:[%s1 + $0x320] sm:$0xf]
    %v227 = vld [vmem:[%s1 + $0x324] sm:$0xf]
    %v228 = vld [vmem:[%s1 + $0x328] sm:$0xf]
    %v229 = vld [vmem:[%s1 + $0x32c] sm:$0xf]
    %v230 = vld [vmem:[%s1 + $0x330] sm:$0xf]
    %v231 = vld [vmem:[%s1 + $0x334] sm:$0xf]
    %v232 = vld [vmem:[%s1 + $0x338] sm:$0xf]
    %v233 = vld [vmem:[%s1 + $0x33c] sm:$0xf]
    %v234 = vld [vmem:[%s1 + $0x340] sm:$0xf]
    %v235 = vld [vmem:[%s1 + $0x344] sm:$0xf]
    %v236 = vld [vmem:[%s1 + $0x348] sm:$0xf]
    %v237 = vld [vmem:[%s1 + $0x34c] sm:$0xf]
    %v238 = vld [vmem:[%s1 + $0x350] sm:$0xf]
    %v239 = vld [vmem:[%s1 + $0x354] sm:$0xf]
    %v240 = vld [vmem:[%s1 + $0x358] sm:$0xf]
    %v241 = vld [vmem:[%s1 + $0x35c] sm:$0xf]
    %v242 = vld [vmem:[%s1 + $0x360] sm:$0xf]
    %v243 = vld [vmem:[%s1 + $0x364] sm:$0xf]
    %v244 = vld [vmem:[%s1 + $0x368] sm:$0xf]
    %v245 = vld [vmem:[%s1 + $0x36c] sm:$0xf]
    %v246 = vld [vmem:[%s1 + $0x370] sm:$0xf]
    %v247 = vld [vmem:[%s1 + $0x374] sm:$0xf]
    %v248 = vld [vmem:[%s1 + $0x378] sm:$0xf]
    %v249 = vld [vmem:[%s1 + $0x37c] sm:$0xf]
    %v250 = vld [vmem:[%s1 + $0x380] sm:$0xf]
    %v251 = vld [vmem:[%s1 + $0x384] sm:$0xf]
    %v252 = vld [vmem:[%s1 + $0x388] sm:$0xf]
    %v253 = vld [vmem:[%s1 + $0x38c] sm:$0xf]
    %v254 = vld [vmem:[%s1 + $0x390] sm:$0xf]
    %v255 = vld [vmem:[%s1 + $0x394] sm:$0xf]
    %v256 = vld [vmem:[%s1 + $0x398] sm:$0xf]
    %v257 = vld [vmem:[%s1 + $0x39c] sm:$0xf]
    %v258 = vld [vmem:[%s1 + $0x3a0] sm:$0xf]
    %v259 = vld [vmem:[%s1 + $0x3a4] sm:$0xf]
    %v260 = vld [vmem:[%s1 + $0x3a8] sm:$0xf]
    %v261 = vld [vmem:[%s1 + $0x3ac] sm:$0xf]
    %v262 = vld [vmem:[%s1 + $0x3b0] sm:$0xf]
    %v263 = vld [vmem:[%s1 + $0x3b4] sm:$0xf]
    %v264 = vld [vmem:[%s1 + $0x3b8] sm:$0xf]
    %v265 = vld [vmem:[%s1 + $0x3bc] sm:$0xf]
    %v266 = vld [vmem:[%s1 + $0x3c0] sm:$0xf]
    %v267 = vld [vmem:[%s1 + $0x3c4] sm:$0xf]
    %v268 = vld [vmem:[%s1 + $0x3c8] sm:$0xf]
    %v269 = vld [vmem:[%s1 + $0x3cc] sm:$0xf]
    %v270 = vld [vmem:[%s1 + $0x3d0] sm:$0xf]
    %v271 = vld [vmem:[%s1 + $0x3d4] sm:$0xf]
    %v272 = vld [vmem:[%s1 + $0x3d8] sm:$0xf]
    %v273 = vld [vmem:[%s1 + $0x3dc] sm:$0xf]
    %v274 = vld [vmem:[%s1 + $0x3e0] sm:$0xf]
    %v275 = vld [vmem:[%s1 + $0x3e4] sm:$0xf]
    %v276 = vld [vmem:[%s1 + $0x3e8] sm:$0xf]
    %v277 = vld [vmem:[%s1 + $0x3ec] sm:$0xf]
    %v278 = vld [vmem:[%s1 + $0x3f0] sm:$0xf]
    %v279 = vld [vmem:[%s1 + $0x3f4] sm:$0xf]
    %v280 = vld [vmem:[%s1 + $0x3f8] sm:$0xf]
    %v281 = vld [vmem:[%s1 + $0x3fc] sm:$0xf]
    %v282 = vld [vmem:[%s1 + $0x400] sm:$0xf]
    %v283 = vld [vmem:[%s1 + $0x404] sm:$0xf]
    %v284 = vld [vmem:[%s1 + $0x408] sm:$0xf]
    %v285 = vld [vmem:[%s1 + $0x40c] sm:$0xf]
    %v286 = vld [vmem:[%s1 + $0x410] sm:$0xf]
    %v287 = vld [vmem:[%s1 + $0x414] sm:$0xf]
    %v288 = vld [vmem:[%s1 + $0x418] sm:$0xf]
    %v289 = vld [vmem:[%s1 + $0x41c] sm:$0xf]
    %v290 = vld [vmem:[%s1 + $0x420] sm:$0xf]
    %v291 = vld [vmem:[%s1 + $0x424] sm:$0xf]
    %v292 = vld [vmem:[%s1 + $0x428] sm:$0xf]
    %v293 = vld [vmem:[%s1 + $0x42c] sm:$0xf]
    %v294 = vld [vmem:[%s1 + $0x430] sm:$0xf]
    %v295 = vld [vmem:[%s1 + $0x434] sm:$0xf]
    %v296 = vld [vmem:[%s1 + $0x438] sm:$0xf]
    %v297 = vld [vmem:[%s1 + $0x43c] sm:$0xf]
    %v298 = vld [vmem:[%s1 + $0x440] sm:$0xf]
    %v299 = vld [vmem:[%s1 + $0x444] sm:$0xf]
    %v300 = vld [vmem:[%s1 + $0x448] sm:$0xf]
    %v301 = vld [vmem:[%s1 + $0x44c] sm:$0xf]
    %v302 = vld [vmem:[%s1 + $0x450] sm:$0xf]
    %v303 = vld [vmem:[%s1 + $0x454] sm:$0xf]
    %v304 = vld [vmem:[%s1 + $0x458] sm:$0xf]
    %v305 = vld [vmem:[%s1 + $0x45c] sm:$0xf]
    %v306 = vld [vmem:[%s1 + $0x460] sm:$0xf]
    %v307 = vld [vmem:[%s1 + $0x464] sm:$0xf]
    %v308 = vld [vmem:[%s1 + $0x468] sm:$0xf]
    %v309 = vld [vmem:[%s1 + $0x46c] sm:$0xf]
    %v310 = vld [vmem:[%s1 + $0x470] sm:$0xf]
    %v311 = vld [vmem:[%s1 + $0x474] sm:$0xf]
    %v312 = vld [vmem:[%s1 + $0x478] sm:$0xf]
    %v313 = vld [vmem:[%s1 + $0x47c] sm:$0xf]
    %v314 = vld [vmem:[%s1 + $0x480] sm:$0xf]
    %v315 = vld [vmem:[%s1 + $0x484] sm:$0xf]
    %v316 = vld [vmem:[%s1 + $0x488] sm:$0xf]
    %v317 = vld [vmem:[%s1 + $0x48c] sm:$0xf]
    %v318 = vld [vmem:[%s1 + $0x490] sm:$0xf]
    %v319 = vld [vmem:[%s1 + $0x494] sm:$0xf]
    %v320 = vld [vmem:[%s1 + $0x498] sm:$0xf]
    %v321 = vld [vmem:[%s1 + $0x49c] sm:$0xf]
    %v322 = vld [vmem:[%s1 + $0x4a0] sm:$0xf]
    %v323 = vld [vmem:[%s1 + $0x4a4] sm:$0xf]
    %v324 = vld [vmem:[%s1 + $0x4a8] sm:$0xf]
    %v325 = vld [vmem:[%s1 + $0x4ac] sm:$0xf]
    %v326 = vld [vmem:[%s1 + $0x4b0] sm:$0xf]
    %v327 = vld [vmem:[%s1 + $0x4b4] sm:$0xf]
    %v328 = vld [vmem:[%s1 + $0x4b8] sm:$0xf]
    %v329 = vld [vmem:[%s1 + $0x4bc] sm:$0xf]
    %v330 = vld [vmem:[%s1 + $0x4c0] sm:$0xf]
    %v331 = vld [vmem:[%s1 + $0x4c4] sm:$0xf]
    %v332 = vld [vmem:[%s1 + $0x4c8] sm:$0xf]
    %v333 = vld [vmem:[%s1 + $0x4cc] sm:$0xf]
    %v334 = vld [vmem:[%s1 + $0x4d0] sm:$0xf]
    %v335 = vld [vmem:[%s1 + $0x4d4] sm:$0xf]
    %v336 = vld [vmem:[%s1 + $0x4d8] sm:$0xf]
    %v337 = vld [vmem:[%s1 + $0x4dc] sm:$0xf]
    %v338 = vld [vmem:[%s1 + $0x4e0] sm:$0xf]
    %v339 = vld [vmem:[%s1 + $0x4e4] sm:$0xf]
    %v340 = vld [vmem:[%s1 + $0x4e8] sm:$0xf]
    %v341 = vld [vmem:[%s1 + $0x4ec] sm:$0xf]
    %v342 = vld [vmem:[%s1 + $0x4f0] sm:$0xf]
    %v343 = vld [vmem:[%s1 + $0x4f4] sm:$0xf]
    %v344 = vld [vmem:[%s1 + $0x4f8] sm:$0xf]
    %v345 = vld [vmem:[%s1 + $0x4fc] sm:$0xf]
    %v346 = vld [vmem:[%s1 + $0x500] sm:$0xf]
    %v347 = vld [vmem:[%s1 + $0x504] sm:$0xf]
    %v348 = vld [vmem:[%s1 + $0x508] sm:$0xf]
    %v349 = vld [vmem:[%s1 + $0x50c] sm:$0xf]
    %v350 = vld [vmem:[%s1 + $0x510] sm:$0xf]
    %v351 = vld [vmem:[%s1 + $0x514] sm:$0xf]
    %v352 = vld [vmem:[%s1 + $0x518] sm:$0xf]
    %v353 = vld [vmem:[%s1 + $0x51c] sm:$0xf]
    %v354 = vld [vmem:[%s1 + $0x520] sm:$0xf]
    %v355 = vld [vmem:[%s1 + $0x524] sm:$0xf]
    %v356 = vld [vmem:[%s1 + $0x528] sm:$0xf]
    %v357 = vld [vmem:[%s1 + $0x52c] sm:$0xf]
    %v358 = vld [vmem:[%s1 + $0x530] sm:$0xf]
    %v359 = vld [vmem:[%s1 + $0x534] sm:$0xf]
    %v360 = vld [vmem:[%s1 + $0x538] sm:$0xf]
    %v361 = vld [vmem:[%s1 + $0x53c] sm:$0xf]
    %v362 = vld [vmem:[%s1 + $0x540] sm:$0xf]
    %v363 = vld [vmem:[%s1 + $0x544] sm:$0xf]
    %v364 = vld [vmem:[%s1 + $0x548] sm:$0xf]
    %v365 = vld [vmem:[%s1 + $0x54c] sm:$0xf]
    %v366 = vld [vmem:[%s1 + $0x550] sm:$0xf]
    %v367 = vld [vmem:[%s1 + $0x554] sm:$0xf]
    %v368 = vld [vmem:[%s1 + $0x558] sm:$0xf]
    %v369 = vld [vmem:[%s1 + $0x55c] sm:$0xf]
    %v370 = vld [vmem:[%s1 + $0x560] sm:$0xf]
    %v371 = vld [vmem:[%s1 + $0x564] sm:$0xf]
    %v372 = vld [vmem:[%s1 + $0x568] sm:$0xf]
    %v373 = vld [vmem:[%s1 + $0x56c] sm:$0xf]
    %v374 = vld [vmem:[%s1 + $0x570] sm:$0xf]
    %v375 = vld [vmem:[%s1 + $0x574] sm:$0xf]
    %v376 = vld [vmem:[%s1 + $0x578] sm:$0xf]
    %v377 = vld [vmem:[%s1 + $0x57c] sm:$0xf]
    %v378 = vld [vmem:[%s1 + $0x580] sm:$0xf]
    %v379 = vld [vmem:[%s1 + $0x584] sm:$0xf]
    %v380 = vld [vmem:[%s1 + $0x588] sm:$0xf]
    %v381 = vld [vmem:[%s1 + $0x58c] sm:$0xf]
    %v382 = vld [vmem:[%s1 + $0x590] sm:$0xf]
    %v383 = vld [vmem:[%s1 + $0x594] sm:$0xf]
    %v384 = vld [vmem:[%s1 + $0x598] sm:$0xf]
    %v385 = vld [vmem:[%s1 + $0x59c] sm:$0xf]
    %v386 = vld [vmem:[%s1 + $0x5a0] sm:$0xf]
    %v387 = vld [vmem:[%s1 + $0x5a4] sm:$0xf]
    %v388 = vld [vmem:[%s1 + $0x5a8] sm:$0xf]
    %v389 = vld [vmem:[%s1 + $0x5ac] sm:$0xf]
    %v390 = vld [vmem:[%s1 + $0x5b0] sm:$0xf]
    %v391 = vld [vmem:[%s1 + $0x5b4] sm:$0xf]
    %v392 = vld [vmem:[%s1 + $0x5b8] sm:$0xf]
    %v393 = vld [vmem:[%s1 + $0x5bc] sm:$0xf]
    %v394 = vld [vmem:[%s1 + $0x5c0] sm:$0xf]
    %v395 = vld [vmem:[%s1 + $0x5c4] sm:$0xf]
    %v396 = vld [vmem:[%s1 + $0x5c8] sm:$0xf]
    %v397 = vld [vmem:[%s1 + $0x5cc] sm:$0xf]
    %v398 = vld [vmem:[%s1 + $0x5d0] sm:$0xf]
    %v399 = vld [vmem:[%s1 + $0x5d4] sm:$0xf]
    %v400 = vld [vmem:[%s1 + $0x5d8] sm:$0xf]
    %v401 = vld [vmem:[%s1 + $0x5dc] sm:$0xf]
    %v402 = vld [vmem:[%s1 + $0x5e0] sm:$0xf]
    %v403 = vld [vmem:[%s1 + $0x5e4] sm:$0xf]
    %v404 = vld [vmem:[%s1 + $0x5e8] sm:$0xf]
    %v405 = vld [vmem:[%s1 + $0x5ec] sm:$0xf]
    %v406 = vld [vmem:[%s1 + $0x5f0] sm:$0xf]
    %v407 = vld [vmem:[%s1 + $0x5f4] sm:$0xf]
    %v408 = vld [vmem:[%s1 + $0x5f8] sm:$0xf]
    %v409 = vld [vmem:[%s1 + $0x5fc] sm:$0xf]
    %v410 = vld [vmem:[%s1 + $0x600] sm:$0xf]
    %v411 = vld [vmem:[%s1 + $0x604] sm:$0xf]
    %v412 = vld [vmem:[%s1 + $0x608] sm:$0xf]
    %v413 = vld [vmem:[%s1 + $0x60c] sm:$0xf]
    %v414 = vld [vmem:[%s1 + $0x610] sm:$0xf]
    %v415 = vld [vmem:[%s1 + $0x614] sm:$0xf]
    %v416 = vld [vmem:[%s1 + $0x618] sm:$0xf]
    %v417 = vld [vmem:[%s1 + $0x61c] sm:$0xf]
    %v418 = vld [vmem:[%s2] sm:$0x1]
    %v420 = vlaneseq
    %v421 = vshrl.u32 %v420, 7
    %v422 = vsub.s32 0, %v421
    %v423 = vrot.slane %v418, %v422
    %v429 = vcombine.high %v22, %v22
    %v431 = vunpack.c.l.s4 1966171168
    %v432 = vunpack.c.0.s8 %v431
    %v433 = vlaneseq
    %v434 = vshrl.u32 %v433, 7
    %v435 = vsub.s32 %v432, %v434
    %v436 = vrot.slane %v22, %v435
    %v438 = vunpack.c.l.s4 1966171168
    %v439 = vunpack.c.0.s8 %v438
    %v440 = vlaneseq
    %v441 = vshrl.u32 %v440, 7
    %v442 = vsub.s32 %v439, %v441
    %v443 = vrot.slane %v429, %v442
    %v444 = vcombine.high %v436, %v436
    %v445 = vcombine.high %v443, %v443
    %v447 = vunpack.c.l.s4 1966171168
    %v448 = vunpack.c.0.s8 %v447
    %v449 = vlaneseq
    %v450 = vshrl.u32 %v449, 7
    %v451 = vsub.s32 %v448, %v450
    %v452 = vrot.slane %v436, %v451
    %v454 = vunpack.c.l.s4 1966171168
    %v455 = vunpack.c.0.s8 %v454
    %v456 = vlaneseq
    %v457 = vshrl.u32 %v456, 7
    %v458 = vsub.s32 %v455, %v457
    %v459 = vrot.slane %v443, %v458
    %v461 = vunpack.c.l.s4 1966171168
    %v462 = vunpack.c.0.s8 %v461
    %v463 = vlaneseq
    %v464 = vshrl.u32 %v463, 7
    %v465 = vsub.s32 %v462, %v464
    %v466 = vrot.slane %v444, %v465
    %v468 = vunpack.c.l.s4 1966171168
    %v469 = vunpack.c.0.s8 %v468
    %v470 = vlaneseq
    %v471 = vshrl.u32 %v470, 7
    %v472 = vsub.s32 %v469, %v471
    %v473 = vrot.slane %v445, %v472
    %v474 = vcombine.high %v452, %v452
    %v475 = vcombine.high %v459, %v459
    %v476 = vcombine.high %v466, %v466
    %v477 = vcombine.high %v473, %v473
    %v478 = vcombine.high %v23, %v23
    %v480 = vunpack.c.l.s4 1966171168
    %v481 = vunpack.c.0.s8 %v480
    %v482 = vlaneseq
    %v483 = vshrl.u32 %v482, 7
    %v484 = vsub.s32 %v481, %v483
    %v485 = vrot.slane %v23, %v484
    %v487 = vunpack.c.l.s4 1966171168
    %v488 = vunpack.c.0.s8 %v487
    %v489 = vlaneseq
    %v490 = vshrl.u32 %v489, 7
    %v491 = vsub.s32 %v488, %v490
    %v492 = vrot.slane %v478, %v491
    %v493 = vcombine.high %v485, %v485
    %v494 = vcombine.high %v492, %v492
    %v496 = vunpack.c.l.s4 1966171168
    %v497 = vunpack.c.0.s8 %v496
    %v498 = vlaneseq
    %v499 = vshrl.u32 %v498, 7
    %v500 = vsub.s32 %v497, %v499
    %v501 = vrot.slane %v485, %v500
    %v503 = vunpack.c.l.s4 1966171168
    %v504 = vunpack.c.0.s8 %v503
    %v505 = vlaneseq
    %v506 = vshrl.u32 %v505, 7
    %v507 = vsub.s32 %v504, %v506
    %v508 = vrot.slane %v492, %v507
    %v510 = vunpack.c.l.s4 1966171168
    %v511 = vunpack.c.0.s8 %v510
    %v512 = vlaneseq
    %v513 = vshrl.u32 %v512, 7
    %v514 = vsub.s32 %v511, %v513
    %v515 = vrot.slane %v493, %v514
    %v517 = vunpack.c.l.s4 1966171168
    %v518 = vunpack.c.0.s8 %v517
    %v519 = vlaneseq
    %v520 = vshrl.u32 %v519, 7
    %v521 = vsub.s32 %v518, %v520
    %v522 = vrot.slane %v494, %v521
    %v523 = vcombine.high %v501, %v501
    %v524 = vcombine.high %v508, %v508
    %v525 = vcombine.high %v515, %v515
    %v526 = vcombine.high %v522, %v522
    %v527 = vcombine.high %v24, %v24
    %v529 = vunpack.c.l.s4 1966171168
    %v530 = vunpack.c.0.s8 %v529
    %v531 = vlaneseq
    %v532 = vshrl.u32 %v531, 7
    %v533 = vsub.s32 %v530, %v532
    %v534 = vrot.slane %v24, %v533
    %v536 = vunpack.c.l.s4 1966171168
    %v537 = vunpack.c.0.s8 %v536
    %v538 = vlaneseq
    %v539 = vshrl.u32 %v538, 7
    %v540 = vsub.s32 %v537, %v539
    %v541 = vrot.slane %v527, %v540
    %v542 = vcombine.high %v534, %v534
    %v543 = vcombine.high %v541, %v541
    %v545 = vunpack.c.l.s4 1966171168
    %v546 = vunpack.c.0.s8 %v545
    %v547 = vlaneseq
    %v548 = vshrl.u32 %v547, 7
    %v549 = vsub.s32 %v546, %v548
    %v550 = vrot.slane %v534, %v549
    %v552 = vunpack.c.l.s4 1966171168
    %v553 = vunpack.c.0.s8 %v552
    %v554 = vlaneseq
    %v555 = vshrl.u32 %v554, 7
    %v556 = vsub.s32 %v553, %v555
    %v557 = vrot.slane %v541, %v556
    %v559 = vunpack.c.l.s4 1966171168
    %v560 = vunpack.c.0.s8 %v559
    %v561 = vlaneseq
    %v562 = vshrl.u32 %v561, 7
    %v563 = vsub.s32 %v560, %v562
    %v564 = vrot.slane %v542, %v563
    %v566 = vunpack.c.l.s4 1966171168
    %v567 = vunpack.c.0.s8 %v566
    %v568 = vlaneseq
    %v569 = vshrl.u32 %v568, 7
    %v570 = vsub.s32 %v567, %v569
    %v571 = vrot.slane %v543, %v570
    %v572 = vcombine.high %v550, %v550
    %v573 = vcombine.high %v557, %v557
    %v574 = vcombine.high %v564, %v564
    %v575 = vcombine.high %v571, %v571
    %v577 = vunpack.c.l.s4 1966171168
    %v578 = vunpack.c.0.s8 %v577
    %v579 = vlaneseq
    %v580 = vshrl.u32 %v579, 7
    %v581 = vsub.s32 %v578, %v580
    %v582 = vrot.slane %v25, %v581
    %v584 = vunpack.c.l.s4 1966171168
    %v585 = vunpack.c.0.s8 %v584
    %v586 = vlaneseq
    %v587 = vshrl.u32 %v586, 7
    %v588 = vsub.s32 %v585, %v587
    %v589 = vrot.slane %v582, %v588
    %v1006 = vunpack.c.l.b16 %v26
    %v1007 = vunpack.c.l.b16 %v27
    %v1008 = vunpack.c.l.b16 %v28
    %v1009 = vunpack.c.l.b16 %v29
    %v1010 = vunpack.c.l.b16 %v30
    %v1011 = vunpack.c.l.b16 %v31
    %v1012 = vunpack.c.l.b16 %v32
    %v1013 = vunpack.c.l.b16 %v33
    %v1014 = vunpack.c.l.b16 %v34
    %v1015 = vunpack.c.l.b16 %v35
    %v1016 = vunpack.c.l.b16 %v36
    %v1017 = vunpack.c.l.b16 %v37
    %v1018 = vunpack.c.l.b16 %v38
    %v1019 = vunpack.c.l.b16 %v39
    %v1020 = vunpack.c.l.b16 %v40
    %v1021 = vunpack.c.l.b16 %v41
    %v1022 = vunpack.c.l.b16 %v42
    %v1023 = vunpack.c.l.b16 %v43
    %v1024 = vunpack.c.l.b16 %v44
    %v1025 = vunpack.c.l.b16 %v45
    %v1026 = vunpack.c.l.b16 %v46
    %v1027 = vunpack.c.l.b16 %v47
    %v1028 = vunpack.c.l.b16 %v48
    %v1029 = vunpack.c.l.b16 %v49
    %v1030 = vunpack.c.l.b16 %v50
    %v1031 = vunpack.c.l.b16 %v51
    %v1032 = vunpack.c.l.b16 %v52
    %v1033 = vunpack.c.l.b16 %v53
    %v1034 = vunpack.c.l.b16 %v54
    %v1035 = vunpack.c.l.b16 %v55
    %v1036 = vunpack.c.l.b16 %v56
    %v1037 = vunpack.c.l.b16 %v57
    %v1038 = vunpack.c.l.b16 %v58
    %v1039 = vunpack.c.l.b16 %v59
    %v1040 = vunpack.c.l.b16 %v60
    %v1041 = vunpack.c.l.b16 %v61
    %v1042 = vunpack.c.l.b16 %v62
    %v1043 = vunpack.c.l.b16 %v63
    %v1044 = vunpack.c.l.b16 %v64
    %v1045 = vunpack.c.l.b16 %v65
    %v1046 = vunpack.c.l.b16 %v66
    %v1047 = vunpack.c.l.b16 %v67
    %v1048 = vunpack.c.l.b16 %v68
    %v1049 = vunpack.c.l.b16 %v69
    %v1050 = vunpack.c.l.b16 %v70
    %v1051 = vunpack.c.l.b16 %v71
    %v1052 = vunpack.c.l.b16 %v72
    %v1053 = vunpack.c.l.b16 %v73
    %v1054 = vunpack.c.l.b16 %v74
    %v1055 = vunpack.c.l.b16 %v75
    %v1056 = vunpack.c.l.b16 %v76
    %v1057 = vunpack.c.l.b16 %v77
    %v1058 = vunpack.c.l.b16 %v78
    %v1059 = vunpack.c.l.b16 %v79
    %v1060 = vunpack.c.l.b16 %v80
    %v1061 = vunpack.c.l.b16 %v81
    %v1062 = vunpack.c.l.b16 %v82
    %v1063 = vunpack.c.l.b16 %v83
    %v1064 = vunpack.c.l.b16 %v84
    %v1065 = vunpack.c.l.b16 %v85
    %v1066 = vunpack.c.l.b16 %v86
    %v1067 = vunpack.c.l.b16 %v87
    %v1068 = vunpack.c.l.b16 %v88
    %v1069 = vunpack.c.l.b16 %v89
    %v1070 = vunpack.c.l.b16 %v90
    %v1071 = vunpack.c.l.b16 %v91
    %v1072 = vunpack.c.l.b16 %v92
    %v1073 = vunpack.c.l.b16 %v93
    %v1074 = vunpack.c.l.b16 %v94
    %v1075 = vunpack.c.l.b16 %v95
    %v1076 = vunpack.c.l.b16 %v96
    %v1077 = vunpack.c.l.b16 %v97
    %v1078 = vunpack.c.l.b16 %v98
    %v1079 = vunpack.c.l.b16 %v99
    %v1080 = vunpack.c.l.b16 %v100
    %v1081 = vunpack.c.l.b16 %v101
    %v1082 = vunpack.c.l.b16 %v102
    %v1083 = vunpack.c.l.b16 %v103
    %v1084 = vunpack.c.l.b16 %v104
    %v1085 = vunpack.c.l.b16 %v105
    %v1086 = vunpack.c.l.b16 %v106
    %v1087 = vunpack.c.l.b16 %v107
    %v1088 = vunpack.c.l.b16 %v108
    %v1089 = vunpack.c.l.b16 %v109
    %v1090 = vunpack.c.l.b16 %v110
    %v1091 = vunpack.c.l.b16 %v111
    %v1092 = vunpack.c.l.b16 %v112
    %v1093 = vunpack.c.l.b16 %v113
    %v1094 = vunpack.c.l.b16 %v114
    %v1095 = vunpack.c.l.b16 %v115
    %v1096 = vunpack.c.l.b16 %v116
    %v1097 = vunpack.c.l.b16 %v117
    %v1098 = vunpack.c.l.b16 %v118
    %v1099 = vunpack.c.l.b16 %v119
    %v1100 = vunpack.c.l.b16 %v120
    %v1101 = vunpack.c.l.b16 %v121
    %v1102 = vunpack.c.l.b16 %v122
    %v1103 = vunpack.c.l.b16 %v123
    %v1104 = vunpack.c.l.b16 %v124
    %v1105 = vunpack.c.l.b16 %v125
    %v1106 = vunpack.c.l.b16 %v126
    %v1107 = vunpack.c.l.b16 %v127
    %v1108 = vunpack.c.l.b16 %v128
    %v1109 = vunpack.c.l.b16 %v129
    %v1110 = vunpack.c.l.b16 %v130
    %v1111 = vunpack.c.l.b16 %v131
    %v1112 = vunpack.c.l.b16 %v132
    %v1113 = vunpack.c.l.b16 %v133
    %v1114 = vunpack.c.l.b16 %v134
    %v1115 = vunpack.c.l.b16 %v135
    %v1116 = vunpack.c.l.b16 %v136
    %v1117 = vunpack.c.l.b16 %v137
    %v1118 = vunpack.c.l.b16 %v138
    %v1119 = vunpack.c.l.b16 %v139
    %v1120 = vunpack.c.l.b16 %v140
    %v1121 = vunpack.c.l.b16 %v141
    %v1122 = vunpack.c.l.b16 %v142
    %v1123 = vunpack.c.l.b16 %v143
    %v1124 = vunpack.c.l.b16 %v144
    %v1125 = vunpack.c.l.b16 %v145
    %v1126 = vunpack.c.l.b16 %v146
    %v1127 = vunpack.c.l.b16 %v147
    %v1128 = vunpack.c.l.b16 %v148
    %v1129 = vunpack.c.l.b16 %v149
    %v1130 = vunpack.c.l.b16 %v150
    %v1131 = vunpack.c.l.b16 %v151
    %v1132 = vunpack.c.l.b16 %v152
    %v1133 = vunpack.c.l.b16 %v153
    %v1134 = vunpack.c.l.b16 %v154
    %v1135 = vunpack.c.l.b16 %v155
    %v1136 = vunpack.c.l.b16 %v156
    %v1137 = vunpack.c.l.b16 %v157
    %v1138 = vunpack.c.l.b16 %v158
    %v1139 = vunpack.c.l.b16 %v159
    %v1140 = vunpack.c.l.b16 %v160
    %v1141 = vunpack.c.l.b16 %v161
    %v1142 = vunpack.c.l.b16 %v162
    %v1143 = vunpack.c.l.b16 %v163
    %v1144 = vunpack.c.l.b16 %v164
    %v1145 = vunpack.c.l.b16 %v165
    %v1146 = vunpack.c.l.b16 %v166
    %v1147 = vunpack.c.l.b16 %v167
    %v1148 = vunpack.c.l.b16 %v168
    %v1149 = vunpack.c.l.b16 %v169
    %v1150 = vunpack.c.l.b16 %v170
    %v1151 = vunpack.c.l.b16 %v171
    %v1152 = vunpack.c.l.b16 %v172
    %v1153 = vunpack.c.l.b16 %v173
    %v1154 = vunpack.c.l.b16 %v174
    %v1155 = vunpack.c.l.b16 %v175
    %v1156 = vunpack.c.l.b16 %v176
    %v1157 = vunpack.c.l.b16 %v177
    %v1158 = vunpack.c.l.b16 %v178
    %v1159 = vunpack.c.l.b16 %v179
    %v1160 = vunpack.c.l.b16 %v180
    %v1161 = vunpack.c.l.b16 %v181
    %v1162 = vunpack.c.l.b16 %v182
    %v1163 = vunpack.c.l.b16 %v183
    %v1164 = vunpack.c.l.b16 %v184
    %v1165 = vunpack.c.l.b16 %v185
    %v1166 = vunpack.c.l.b16 %v186
    %v1167 = vunpack.c.l.b16 %v187
    %v1168 = vunpack.c.l.b16 %v188
    %v1169 = vunpack.c.l.b16 %v189
    %v1170 = vunpack.c.l.b16 %v190
    %v1171 = vunpack.c.l.b16 %v191
    %v1172 = vunpack.c.l.b16 %v192
    %v1173 = vunpack.c.l.b16 %v193
    %v1174 = vunpack.c.l.b16 %v194
    %v1175 = vunpack.c.l.b16 %v195
    %v1176 = vunpack.c.l.b16 %v196
    %v1177 = vunpack.c.l.b16 %v197
    %v1178 = vunpack.c.l.b16 %v198
    %v1179 = vunpack.c.l.b16 %v199
    %v1180 = vunpack.c.l.b16 %v200
    %v1181 = vunpack.c.l.b16 %v201
    %v1182 = vunpack.c.l.b16 %v202
    %v1183 = vunpack.c.l.b16 %v203
    %v1184 = vunpack.c.l.b16 %v204
    %v1185 = vunpack.c.l.b16 %v205
    %v1186 = vunpack.c.l.b16 %v206
    %v1187 = vunpack.c.l.b16 %v207
    %v1188 = vunpack.c.l.b16 %v208
    %v1189 = vunpack.c.l.b16 %v209
    %v1190 = vunpack.c.l.b16 %v210
    %v1191 = vunpack.c.l.b16 %v211
    %v1192 = vunpack.c.l.b16 %v212
    %v1193 = vunpack.c.l.b16 %v213
    %v1194 = vunpack.c.l.b16 %v214
    %v1195 = vunpack.c.l.b16 %v215
    %v1196 = vunpack.c.l.b16 %v216
    %v1197 = vunpack.c.l.b16 %v217
    %v1198 = vunpack.c.l.b16 %v218
    %v1199 = vunpack.c.l.b16 %v219
    %v1200 = vunpack.c.l.b16 %v220
    %v1201 = vunpack.c.l.b16 %v221
    %v1202 = vunpack.c.l.b16 %v222
    %v1203 = vunpack.c.l.b16 %v223
    %v1204 = vunpack.c.l.b16 %v224
    %v1205 = vunpack.c.l.b16 %v225
    %v1206 = vunpack.c.l.b16 %v226
    %v1207 = vunpack.c.l.b16 %v227
    %v1208 = vunpack.c.l.b16 %v228
    %v1209 = vunpack.c.l.b16 %v229
    %v1210 = vunpack.c.l.b16 %v230
    %v1211 = vunpack.c.l.b16 %v231
    %v1212 = vunpack.c.l.b16 %v232
    %v1213 = vunpack.c.l.b16 %v233
    %v1214 = vunpack.c.l.b16 %v234
    %v1215 = vunpack.c.l.b16 %v235
    %v1216 = vunpack.c.l.b16 %v236
    %v1217 = vunpack.c.l.b16 %v237
    %v1218 = vunpack.c.l.b16 %v238
    %v1219 = vunpack.c.l.b16 %v239
    %v1220 = vunpack.c.l.b16 %v240
    %v1221 = vunpack.c.l.b16 %v241
    %v1222 = vunpack.c.l.b16 %v242
    %v1223 = vunpack.c.l.b16 %v243
    %v1224 = vunpack.c.l.b16 %v244
    %v1225 = vunpack.c.l.b16 %v245
    %v1226 = vunpack.c.l.b16 %v246
    %v1227 = vunpack.c.l.b16 %v247
    %v1228 = vunpack.c.l.b16 %v248
    %v1229 = vunpack.c.l.b16 %v249
    %v1230 = vunpack.c.l.b16 %v250
    %v1231 = vunpack.c.l.b16 %v251
    %v1232 = vunpack.c.l.b16 %v252
    %v1233 = vunpack.c.l.b16 %v253
    %v1234 = vunpack.c.l.b16 %v254
    %v1235 = vunpack.c.l.b16 %v255
    %v1236 = vunpack.c.l.b16 %v256
    %v1237 = vunpack.c.l.b16 %v257
    %v1238 = vunpack.c.l.b16 %v258
    %v1239 = vunpack.c.l.b16 %v259
    %v1240 = vunpack.c.l.b16 %v260
    %v1241 = vunpack.c.l.b16 %v261
    %v1242 = vunpack.c.l.b16 %v262
    %v1243 = vunpack.c.l.b16 %v263
    %v1244 = vunpack.c.l.b16 %v264
    %v1245 = vunpack.c.l.b16 %v265
    %v1246 = vunpack.c.l.b16 %v266
    %v1247 = vunpack.c.l.b16 %v267
    %v1248 = vunpack.c.l.b16 %v268
    %v1249 = vunpack.c.l.b16 %v269
    %v1250 = vunpack.c.l.b16 %v270
    %v1251 = vunpack.c.l.b16 %v271
    %v1252 = vunpack.c.l.b16 %v272
    %v1253 = vunpack.c.l.b16 %v273
    %v1254 = vunpack.c.l.b16 %v274
    %v1255 = vunpack.c.l.b16 %v275
    %v1256 = vunpack.c.l.b16 %v276
    %v1257 = vunpack.c.l.b16 %v277
    %v1258 = vunpack.c.l.b16 %v278
    %v1259 = vunpack.c.l.b16 %v279
    %v1260 = vunpack.c.l.b16 %v280
    %v1261 = vunpack.c.l.b16 %v281
    %v1262 = vunpack.c.l.b16 %v282
    %v1263 = vunpack.c.l.b16 %v283
    %v1264 = vunpack.c.l.b16 %v284
    %v1265 = vunpack.c.l.b16 %v285
    %v1266 = vunpack.c.l.b16 %v286
    %v1267 = vunpack.c.l.b16 %v287
    %v1268 = vunpack.c.l.b16 %v288
    %v1269 = vunpack.c.l.b16 %v289
    %v1270 = vunpack.c.l.b16 %v290
    %v1271 = vunpack.c.l.b16 %v291
    %v1272 = vunpack.c.l.b16 %v292
    %v1273 = vunpack.c.l.b16 %v293
    %v1274 = vunpack.c.l.b16 %v294
    %v1275 = vunpack.c.l.b16 %v295
    %v1276 = vunpack.c.l.b16 %v296
    %v1277 = vunpack.c.l.b16 %v297
    %v1278 = vunpack.c.l.b16 %v298
    %v1279 = vunpack.c.l.b16 %v299
    %v1280 = vunpack.c.l.b16 %v300
    %v1281 = vunpack.c.l.b16 %v301
    %v1282 = vunpack.c.l.b16 %v302
    %v1283 = vunpack.c.l.b16 %v303
    %v1284 = vunpack.c.l.b16 %v304
    %v1285 = vunpack.c.l.b16 %v305
    %v1286 = vunpack.c.l.b16 %v306
    %v1287 = vunpack.c.l.b16 %v307
    %v1288 = vunpack.c.l.b16 %v308
    %v1289 = vunpack.c.l.b16 %v309
    %v1290 = vunpack.c.l.b16 %v310
    %v1291 = vunpack.c.l.b16 %v311
    %v1292 = vunpack.c.l.b16 %v312
    %v1293 = vunpack.c.l.b16 %v313
    %v1294 = vunpack.c.l.b16 %v314
    %v1295 = vunpack.c.l.b16 %v315
    %v1296 = vunpack.c.l.b16 %v316
    %v1297 = vunpack.c.l.b16 %v317
    %v1298 = vunpack.c.l.b16 %v318
    %v1299 = vunpack.c.l.b16 %v319
    %v1300 = vunpack.c.l.b16 %v320
    %v1301 = vunpack.c.l.b16 %v321
    %v1302 = vunpack.c.l.b16 %v322
    %v1303 = vunpack.c.l.b16 %v323
    %v1304 = vunpack.c.l.b16 %v324
    %v1305 = vunpack.c.l.b16 %v325
    %v1306 = vunpack.c.l.b16 %v326
    %v1307 = vunpack.c.l.b16 %v327
    %v1308 = vunpack.c.l.b16 %v328
    %v1309 = vunpack.c.l.b16 %v329
    %v1310 = vunpack.c.l.b16 %v330
    %v1311 = vunpack.c.l.b16 %v331
    %v1312 = vunpack.c.l.b16 %v332
    %v1313 = vunpack.c.l.b16 %v333
    %v1314 = vunpack.c.l.b16 %v334
    %v1315 = vunpack.c.l.b16 %v335
    %v1316 = vunpack.c.l.b16 %v336
    %v1317 = vunpack.c.l.b16 %v337
    %v1318 = vunpack.c.l.b16 %v338
    %v1319 = vunpack.c.l.b16 %v339
    %v1320 = vunpack.c.l.b16 %v340
    %v1321 = vunpack.c.l.b16 %v341
    %v1322 = vunpack.c.l.b16 %v342
    %v1323 = vunpack.c.l.b16 %v343
    %v1324 = vunpack.c.l.b16 %v344
    %v1325 = vunpack.c.l.b16 %v345
    %v1326 = vunpack.c.l.b16 %v346
    %v1327 = vunpack.c.l.b16 %v347
    %v1328 = vunpack.c.l.b16 %v348
    %v1329 = vunpack.c.l.b16 %v349
    %v1330 = vunpack.c.l.b16 %v350
    %v1331 = vunpack.c.l.b16 %v351
    %v1332 = vunpack.c.l.b16 %v352
    %v1333 = vunpack.c.l.b16 %v353
    %v1334 = vunpack.c.l.b16 %v354
    %v1335 = vunpack.c.l.b16 %v355
    %v1336 = vunpack.c.l.b16 %v356
    %v1337 = vunpack.c.l.b16 %v357
    %v1338 = vunpack.c.l.b16 %v358
    %v1339 = vunpack.c.l.b16 %v359
    %v1340 = vunpack.c.l.b16 %v360
    %v1341 = vunpack.c.l.b16 %v361
    %v1342 = vunpack.c.l.b16 %v362
    %v1343 = vunpack.c.l.b16 %v363
    %v1344 = vunpack.c.l.b16 %v364
    %v1345 = vunpack.c.l.b16 %v365
    %v1346 = vunpack.c.l.b16 %v366
    %v1347 = vunpack.c.l.b16 %v367
    %v1348 = vunpack.c.l.b16 %v368
    %v1349 = vunpack.c.l.b16 %v369
    %v1350 = vunpack.c.l.b16 %v370
    %v1351 = vunpack.c.l.b16 %v371
    %v1352 = vunpack.c.l.b16 %v372
    %v1353 = vunpack.c.l.b16 %v373
    %v1354 = vunpack.c.l.b16 %v374
    %v1355 = vunpack.c.l.b16 %v375
    %v1356 = vunpack.c.l.b16 %v376
    %v1357 = vunpack.c.l.b16 %v377
    %v1358 = vunpack.c.l.b16 %v378
    %v1359 = vunpack.c.l.b16 %v379
    %v1360 = vunpack.c.l.b16 %v380
    %v1361 = vunpack.c.l.b16 %v381
    %v1362 = vunpack.c.l.b16 %v382
    %v1363 = vunpack.c.l.b16 %v383
    %v1364 = vunpack.c.l.b16 %v384
    %v1365 = vunpack.c.l.b16 %v385
    %v1366 = vunpack.c.l.b16 %v386
    %v1367 = vunpack.c.l.b16 %v387
    %v1368 = vunpack.c.l.b16 %v388
    %v1369 = vunpack.c.l.b16 %v389
    %v1370 = vunpack.c.l.b16 %v390
    %v1371 = vunpack.c.l.b16 %v391
    %v1372 = vunpack.c.l.b16 %v392
    %v1373 = vunpack.c.l.b16 %v393
    %v1374 = vunpack.c.l.b16 %v394
    %v1375 = vunpack.c.l.b16 %v395
    %v1376 = vunpack.c.l.b16 %v396
    %v1377 = vunpack.c.l.b16 %v397
    %v1378 = vunpack.c.l.b16 %v398
    %v1379 = vunpack.c.l.b16 %v399
    %v1380 = vunpack.c.l.b16 %v400
    %v1381 = vunpack.c.l.b16 %v401
    %v1382 = vunpack.c.l.b16 %v402
    %v1383 = vunpack.c.l.b16 %v403
    %v1384 = vunpack.c.l.b16 %v404
    %v1385 = vunpack.c.l.b16 %v405
    %v1386 = vunpack.c.l.b16 %v406
    %v1387 = vunpack.c.l.b16 %v407
    %v1388 = vunpack.c.l.b16 %v408
    %v1389 = vunpack.c.l.b16 %v409
    %v1390 = vunpack.c.l.b16 %v410
    %v1391 = vunpack.c.l.b16 %v411
    %v1392 = vunpack.c.l.b16 %v412
    %v1393 = vunpack.c.l.b16 %v413
    %v1394 = vunpack.c.l.b16 %v414
    %v1395 = vunpack.c.l.b16 %v415
    %v1396 = vunpack.c.l.b16 %v416
    %v1397 = vunpack.c.l.b16 %v417
    %v1398 = vpack.c.b16 %v1007, %v1006
    %v1399 = vpack.c.b16 %v1009, %v1008
    %v1400 = vpack.c.b16 %v1011, %v1010
    %v1401 = vpack.c.b16 %v1013, %v1012
    %v1402 = vpack.c.b16 %v1015, %v1014
    %v1403 = vpack.c.b16 %v1017, %v1016
    %v1404 = vpack.c.b16 %v1019, %v1018
    %v1405 = vpack.c.b16 %v1021, %v1020
    %v1406 = vpack.c.b16 %v1023, %v1022
    %v1407 = vpack.c.b16 %v1025, %v1024
    %v1408 = vpack.c.b16 %v1027, %v1026
    %v1409 = vpack.c.b16 %v1029, %v1028
    %v1410 = vpack.c.b16 %v1031, %v1030
    %v1411 = vpack.c.b16 %v1033, %v1032
    %v1412 = vpack.c.b16 %v1035, %v1034
    %v1413 = vpack.c.b16 %v1037, %v1036
    %v1414 = vpack.c.b16 %v1039, %v1038
    %v1415 = vpack.c.b16 %v1041, %v1040
    %v1416 = vpack.c.b16 %v1043, %v1042
    %v1417 = vpack.c.b16 %v1045, %v1044
    %v1418 = vpack.c.b16 %v1047, %v1046
    %v1419 = vpack.c.b16 %v1049, %v1048
    %v1420 = vpack.c.b16 %v1051, %v1050
    %v1421 = vpack.c.b16 %v1053, %v1052
    %v1422 = vpack.c.b16 %v1055, %v1054
    %v1423 = vpack.c.b16 %v1057, %v1056
    %v1424 = vpack.c.b16 %v1059, %v1058
    %v1425 = vpack.c.b16 %v1061, %v1060
    %v1426 = vpack.c.b16 %v1063, %v1062
    %v1427 = vpack.c.b16 %v1065, %v1064
    %v1428 = vpack.c.b16 %v1067, %v1066
    %v1429 = vpack.c.b16 %v1069, %v1068
    %v1430 = vpack.c.b16 %v1071, %v1070
    %v1431 = vpack.c.b16 %v1073, %v1072
    %v1432 = vpack.c.b16 %v1075, %v1074
    %v1433 = vpack.c.b16 %v1077, %v1076
    %v1434 = vpack.c.b16 %v1079, %v1078
    %v1435 = vpack.c.b16 %v1081, %v1080
    %v1436 = vpack.c.b16 %v1083, %v1082
    %v1437 = vpack.c.b16 %v1085, %v1084
    %v1438 = vpack.c.b16 %v1087, %v1086
    %v1439 = vpack.c.b16 %v1089, %v1088
    %v1440 = vpack.c.b16 %v1091, %v1090
    %v1441 = vpack.c.b16 %v1093, %v1092
    %v1442 = vpack.c.b16 %v1095, %v1094
    %v1443 = vpack.c.b16 %v1097, %v1096
    %v1444 = vpack.c.b16 %v1099, %v1098
    %v1445 = vpack.c.b16 %v1101, %v1100
    %v1446 = vpack.c.b16 %v1103, %v1102
    %v1447 = vpack.c.b16 %v1105, %v1104
    %v1448 = vpack.c.b16 %v1107, %v1106
    %v1449 = vpack.c.b16 %v1109, %v1108
    %v1450 = vpack.c.b16 %v1111, %v1110
    %v1451 = vpack.c.b16 %v1113, %v1112
    %v1452 = vpack.c.b16 %v1115, %v1114
    %v1453 = vpack.c.b16 %v1117, %v1116
    %v1454 = vpack.c.b16 %v1119, %v1118
    %v1455 = vpack.c.b16 %v1121, %v1120
    %v1456 = vpack.c.b16 %v1123, %v1122
    %v1457 = vpack.c.b16 %v1125, %v1124
    %v1458 = vpack.c.b16 %v1127, %v1126
    %v1459 = vpack.c.b16 %v1129, %v1128
    %v1460 = vpack.c.b16 %v1131, %v1130
    %v1461 = vpack.c.b16 %v1133, %v1132
    %v1462 = vpack.c.b16 %v1135, %v1134
    %v1463 = vpack.c.b16 %v1137, %v1136
    %v1464 = vpack.c.b16 %v1139, %v1138
    %v1465 = vpack.c.b16 %v1141, %v1140
    %v1466 = vpack.c.b16 %v1143, %v1142
    %v1467 = vpack.c.b16 %v1145, %v1144
    %v1468 = vpack.c.b16 %v1147, %v1146
    %v1469 = vpack.c.b16 %v1149, %v1148
    %v1470 = vpack.c.b16 %v1151, %v1150
    %v1471 = vpack.c.b16 %v1153, %v1152
    %v1472 = vpack.c.b16 %v1155, %v1154
    %v1473 = vpack.c.b16 %v1157, %v1156
    %v1474 = vpack.c.b16 %v1159, %v1158
    %v1475 = vpack.c.b16 %v1161, %v1160
    %v1476 = vpack.c.b16 %v1163, %v1162
    %v1477 = vpack.c.b16 %v1165, %v1164
    %v1478 = vpack.c.b16 %v1167, %v1166
    %v1479 = vpack.c.b16 %v1169, %v1168
    %v1480 = vpack.c.b16 %v1171, %v1170
    %v1481 = vpack.c.b16 %v1173, %v1172
    %v1482 = vpack.c.b16 %v1175, %v1174
    %v1483 = vpack.c.b16 %v1177, %v1176
    %v1484 = vpack.c.b16 %v1179, %v1178
    %v1485 = vpack.c.b16 %v1181, %v1180
    %v1486 = vpack.c.b16 %v1183, %v1182
    %v1487 = vpack.c.b16 %v1185, %v1184
    %v1488 = vpack.c.b16 %v1187, %v1186
    %v1489 = vpack.c.b16 %v1189, %v1188
    %v1490 = vpack.c.b16 %v1191, %v1190
    %v1491 = vpack.c.b16 %v1193, %v1192
    %v1492 = vpack.c.b16 %v1195, %v1194
    %v1493 = vpack.c.b16 %v1197, %v1196
    %v1494 = vpack.c.b16 %v1199, %v1198
    %v1495 = vpack.c.b16 %v1201, %v1200
    %v1496 = vpack.c.b16 %v1203, %v1202
    %v1497 = vpack.c.b16 %v1205, %v1204
    %v1498 = vpack.c.b16 %v1207, %v1206
    %v1499 = vpack.c.b16 %v1209, %v1208
    %v1500 = vpack.c.b16 %v1211, %v1210
    %v1501 = vpack.c.b16 %v1213, %v1212
    %v1502 = vpack.c.b16 %v1215, %v1214
    %v1503 = vpack.c.b16 %v1217, %v1216
    %v1504 = vpack.c.b16 %v1219, %v1218
    %v1505 = vpack.c.b16 %v1221, %v1220
    %v1506 = vpack.c.b16 %v1223, %v1222
    %v1507 = vpack.c.b16 %v1225, %v1224
    %v1508 = vpack.c.b16 %v1227, %v1226
    %v1509 = vpack.c.b16 %v1229, %v1228
    %v1510 = vpack.c.b16 %v1231, %v1230
    %v1511 = vpack.c.b16 %v1233, %v1232
    %v1512 = vpack.c.b16 %v1235, %v1234
    %v1513 = vpack.c.b16 %v1237, %v1236
    %v1514 = vpack.c.b16 %v1239, %v1238
    %v1515 = vpack.c.b16 %v1241, %v1240
    %v1516 = vpack.c.b16 %v1243, %v1242
    %v1517 = vpack.c.b16 %v1245, %v1244
    %v1518 = vpack.c.b16 %v1247, %v1246
    %v1519 = vpack.c.b16 %v1249, %v1248
    %v1520 = vpack.c.b16 %v1251, %v1250
    %v1521 = vpack.c.b16 %v1253, %v1252
    %v1522 = vpack.c.b16 %v1255, %v1254
    %v1523 = vpack.c.b16 %v1257, %v1256
    %v1524 = vpack.c.b16 %v1259, %v1258
    %v1525 = vpack.c.b16 %v1261, %v1260
    %v1526 = vpack.c.b16 %v1263, %v1262
    %v1527 = vpack.c.b16 %v1265, %v1264
    %v1528 = vpack.c.b16 %v1267, %v1266
    %v1529 = vpack.c.b16 %v1269, %v1268
    %v1530 = vpack.c.b16 %v1271, %v1270
    %v1531 = vpack.c.b16 %v1273, %v1272
    %v1532 = vpack.c.b16 %v1275, %v1274
    %v1533 = vpack.c.b16 %v1277, %v1276
    %v1534 = vpack.c.b16 %v1279, %v1278
    %v1535 = vpack.c.b16 %v1281, %v1280
    %v1536 = vpack.c.b16 %v1283, %v1282
    %v1537 = vpack.c.b16 %v1285, %v1284
    %v1538 = vpack.c.b16 %v1287, %v1286
    %v1539 = vpack.c.b16 %v1289, %v1288
    %v1540 = vpack.c.b16 %v1291, %v1290
    %v1541 = vpack.c.b16 %v1293, %v1292
    %v1542 = vpack.c.b16 %v1295, %v1294
    %v1543 = vpack.c.b16 %v1297, %v1296
    %v1544 = vpack.c.b16 %v1299, %v1298
    %v1545 = vpack.c.b16 %v1301, %v1300
    %v1546 = vpack.c.b16 %v1303, %v1302
    %v1547 = vpack.c.b16 %v1305, %v1304
    %v1548 = vpack.c.b16 %v1307, %v1306
    %v1549 = vpack.c.b16 %v1309, %v1308
    %v1550 = vpack.c.b16 %v1311, %v1310
    %v1551 = vpack.c.b16 %v1313, %v1312
    %v1552 = vpack.c.b16 %v1315, %v1314
    %v1553 = vpack.c.b16 %v1317, %v1316
    %v1554 = vpack.c.b16 %v1319, %v1318
    %v1555 = vpack.c.b16 %v1321, %v1320
    %v1556 = vpack.c.b16 %v1323, %v1322
    %v1557 = vpack.c.b16 %v1325, %v1324
    %v1558 = vpack.c.b16 %v1327, %v1326
    %v1559 = vpack.c.b16 %v1329, %v1328
    %v1560 = vpack.c.b16 %v1331, %v1330
    %v1561 = vpack.c.b16 %v1333, %v1332
    %v1562 = vpack.c.b16 %v1335, %v1334
    %v1563 = vpack.c.b16 %v1337, %v1336
    %v1564 = vpack.c.b16 %v1339, %v1338
    %v1565 = vpack.c.b16 %v1341, %v1340
    %v1566 = vpack.c.b16 %v1343, %v1342
    %v1567 = vpack.c.b16 %v1345, %v1344
    %v1568 = vpack.c.b16 %v1347, %v1346
    %v1569 = vpack.c.b16 %v1349, %v1348
    %v1570 = vpack.c.b16 %v1351, %v1350
    %v1571 = vpack.c.b16 %v1353, %v1352
    %v1572 = vpack.c.b16 %v1355, %v1354
    %v1573 = vpack.c.b16 %v1357, %v1356
    %v1574 = vpack.c.b16 %v1359, %v1358
    %v1575 = vpack.c.b16 %v1361, %v1360
    %v1576 = vpack.c.b16 %v1363, %v1362
    %v1577 = vpack.c.b16 %v1365, %v1364
    %v1578 = vpack.c.b16 %v1367, %v1366
    %v1579 = vpack.c.b16 %v1369, %v1368
    %v1580 = vpack.c.b16 %v1371, %v1370
    %v1581 = vpack.c.b16 %v1373, %v1372
    %v1582 = vpack.c.b16 %v1375, %v1374
    %v1583 = vpack.c.b16 %v1377, %v1376
    %v1584 = vpack.c.b16 %v1379, %v1378
    %v1585 = vpack.c.b16 %v1381, %v1380
    %v1586 = vpack.c.b16 %v1383, %v1382
    %v1587 = vpack.c.b16 %v1385, %v1384
    %v1588 = vpack.c.b16 %v1387, %v1386
    %v1589 = vpack.c.b16 %v1389, %v1388
    %v1590 = vpack.c.b16 %v1391, %v1390
    %v1591 = vpack.c.b16 %v1393, %v1392
    %v1592 = vpack.c.b16 %v1395, %v1394
    %v1593 = vpack.c.b16 %v1397, %v1396
    %vm1790 = vcmask 523264
    %v1792 = vsel %vm1790, %v589, 0
    %1794 = vmatprep.subr.bf16.mxu0 0
    %1795 = vmatpush1.bf16.msra.mxu0 %v1398
    %1796 = vmatprep.subr.bf16.mxu0 0
    %1797 = vmatpush1.bf16.msra.mxu0 %v1399
    %1798 = vmatprep.subr.bf16.mxu0 0
    %1799 = vmatpush1.bf16.msra.mxu0 %v1400
    %1800 = vmatprep.subr.bf16.mxu0 0
    %1801 = vmatpush1.bf16.msra.mxu0 %v1401
    %1802 = vmatprep.subr.bf16.mxu0 0
    %1803 = vmatpush1.bf16.msra.mxu0 %v1402
    %1804 = vmatprep.subr.bf16.mxu0 0
    %1805 = vmatpush1.bf16.msra.mxu0 %v1403
    %1806 = vmatprep.subr.bf16.mxu0 0
    %1807 = vmatpush1.bf16.msra.mxu0 %v1404
    %1808 = vmatprep.subr.bf16.mxu0 0
    %1809 = vmatpush1.bf16.msra.mxu0 %v1405
    %1810 = vmatprep.subr.bf16.mxu0 0
    %1811 = vmatpush1.bf16.msra.mxu0 %v1406
    %1812 = vmatprep.subr.bf16.mxu0 0
    %1813 = vmatpush1.bf16.msra.mxu0 %v1407
    %1814 = vmatprep.subr.bf16.mxu0 0
    %1815 = vmatpush1.bf16.msra.mxu0 %v1408
    %1816 = vmatprep.subr.bf16.mxu0 0
    %1817 = vmatpush1.bf16.msra.mxu0 %v1409
    %1818 = vmatprep.subr.bf16.mxu0 0
    %1819 = vmatpush1.bf16.msra.mxu0 %v1410
    %1820 = vmatprep.subr.bf16.mxu0 0
    %1821 = vmatpush1.bf16.msra.mxu0 %v1411
    %1822 = vmatprep.subr.bf16.mxu0 0
    %1823 = vmatpush1.bf16.msra.mxu0 %v1412
    %1824 = vmatprep.subr.bf16.mxu0 0
    %1825 = vmatpush1.bf16.msra.mxu0 %v1413
    %1826 = vmatprep.mubr.bf16.mxu0 %v466
    %1827 = vmatmul.mubr.bf16.gmra.mrb[0].mxu0 %v452
    %v1828 = vpop.f32.mrb[0].mxu0
    %v1829 = vadd.f32 %v423, %v1828
    %v1830 = vpop.f32.mrb[0].mxu0
    %v1831 = vpop.f32.mrb[0].mxu0
    %v1832 = vpop.f32.mrb[0].mxu0
    %1833 = vdwg.mxu0
    %1834 = vmatprep.subr.bf16.mxu0 0
    %1835 = vmatpush1.bf16.msra.mxu0 %v1414
    %1836 = vmatprep.subr.bf16.mxu0 0
    %1837 = vmatpush1.bf16.msra.mxu0 %v1415
    %1838 = vmatprep.subr.bf16.mxu0 0
    %1839 = vmatpush1.bf16.msra.mxu0 %v1416
    %1840 = vmatprep.subr.bf16.mxu0 0
    %1841 = vmatpush1.bf16.msra.mxu0 %v1417
    %1842 = vmatprep.subr.bf16.mxu0 0
    %1843 = vmatpush1.bf16.msra.mxu0 %v1418
    %1844 = vmatprep.subr.bf16.mxu0 0
    %1845 = vmatpush1.bf16.msra.mxu0 %v1419
    %1846 = vmatprep.subr.bf16.mxu0 0
    %1847 = vmatpush1.bf16.msra.mxu0 %v1420
    %1848 = vmatprep.subr.bf16.mxu0 0
    %1849 = vmatpush1.bf16.msra.mxu0 %v1421
    %1850 = vmatprep.subr.bf16.mxu0 0
    %1851 = vmatpush1.bf16.msra.mxu0 %v1422
    %1852 = vmatprep.subr.bf16.mxu0 0
    %1853 = vmatpush1.bf16.msra.mxu0 %v1423
    %1854 = vmatprep.subr.bf16.mxu0 0
    %1855 = vmatpush1.bf16.msra.mxu0 %v1424
    %1856 = vmatprep.subr.bf16.mxu0 0
    %1857 = vmatpush1.bf16.msra.mxu0 %v1425
    %1858 = vmatprep.subr.bf16.mxu0 0
    %1859 = vmatpush1.bf16.msra.mxu0 %v1426
    %1860 = vmatprep.subr.bf16.mxu0 0
    %1861 = vmatpush1.bf16.msra.mxu0 %v1427
    %1862 = vmatprep.subr.bf16.mxu0 0
    %1863 = vmatpush1.bf16.msra.mxu0 %v1428
    %1864 = vmatprep.subr.bf16.mxu0 0
    %1865 = vmatpush1.bf16.msra.mxu0 %v1429
    %1866 = vmatprep.mubr.bf16.mxu0 %v476
    %1867 = vmatmul.mubr.bf16.gmra.mrb[0].mxu0 %v474
    %v1868 = vpop.f32.mrb[0].mxu0
    %v1869 = vadd.f32 %v1829, %v1868
    %v1870 = vpop.f32.mrb[0].mxu0
    %v1871 = vpop.f32.mrb[0].mxu0
    %v1872 = vpop.f32.mrb[0].mxu0
    %1873 = vdwg.mxu0
    %1874 = vmatprep.subr.bf16.mxu0 0
    %1875 = vmatpush1.bf16.msra.mxu0 %v1430
    %1876 = vmatprep.subr.bf16.mxu0 0
    %1877 = vmatpush1.bf16.msra.mxu0 %v1431
    %1878 = vmatprep.subr.bf16.mxu0 0
    %1879 = vmatpush1.bf16.msra.mxu0 %v1432
    %1880 = vmatprep.subr.bf16.mxu0 0
    %1881 = vmatpush1.bf16.msra.mxu0 %v1433
    %1882 = vmatprep.subr.bf16.mxu0 0
    %1883 = vmatpush1.bf16.msra.mxu0 %v1434
    %1884 = vmatprep.subr.bf16.mxu0 0
    %1885 = vmatpush1.bf16.msra.mxu0 %v1435
    %1886 = vmatprep.subr.bf16.mxu0 0
    %1887 = vmatpush1.bf16.msra.mxu0 %v1436
    %1888 = vmatprep.subr.bf16.mxu0 0
    %1889 = vmatpush1.bf16.msra.mxu0 %v1437
    %1890 = vmatprep.subr.bf16.mxu0 0
    %1891 = vmatpush1.bf16.msra.mxu0 %v1438
    %1892 = vmatprep.subr.bf16.mxu0 0
    %1893 = vmatpush1.bf16.msra.mxu0 %v1439
    %1894 = vmatprep.subr.bf16.mxu0 0
    %1895 = vmatpush1.bf16.msra.mxu0 %v1440
    %1896 = vmatprep.subr.bf16.mxu0 0
    %1897 = vmatpush1.bf16.msra.mxu0 %v1441
    %1898 = vmatprep.subr.bf16.mxu0 0
    %1899 = vmatpush1.bf16.msra.mxu0 %v1442
    %1900 = vmatprep.subr.bf16.mxu0 0
    %1901 = vmatpush1.bf16.msra.mxu0 %v1443
    %1902 = vmatprep.subr.bf16.mxu0 0
    %1903 = vmatpush1.bf16.msra.mxu0 %v1444
    %1904 = vmatprep.subr.bf16.mxu0 0
    %1905 = vmatpush1.bf16.msra.mxu0 %v1445
    %1906 = vmatprep.mubr.bf16.mxu0 %v473
    %1907 = vmatmul.mubr.bf16.gmra.mrb[0].mxu0 %v459
    %v1908 = vpop.f32.mrb[0].mxu0
    %v1909 = vadd.f32 %v1869, %v1908
    %v1910 = vpop.f32.mrb[0].mxu0
    %v1911 = vpop.f32.mrb[0].mxu0
    %v1912 = vpop.f32.mrb[0].mxu0
    %1913 = vdwg.mxu0
    %1914 = vmatprep.subr.bf16.mxu0 0
    %1915 = vmatpush1.bf16.msra.mxu0 %v1446
    %1916 = vmatprep.subr.bf16.mxu0 0
    %1917 = vmatpush1.bf16.msra.mxu0 %v1447
    %1918 = vmatprep.subr.bf16.mxu0 0
    %1919 = vmatpush1.bf16.msra.mxu0 %v1448
    %1920 = vmatprep.subr.bf16.mxu0 0
    %1921 = vmatpush1.bf16.msra.mxu0 %v1449
    %1922 = vmatprep.subr.bf16.mxu0 0
    %1923 = vmatpush1.bf16.msra.mxu0 %v1450
    %1924 = vmatprep.subr.bf16.mxu0 0
    %1925 = vmatpush1.bf16.msra.mxu0 %v1451
    %1926 = vmatprep.subr.bf16.mxu0 0
    %1927 = vmatpush1.bf16.msra.mxu0 %v1452
    %1928 = vmatprep.subr.bf16.mxu0 0
    %1929 = vmatpush1.bf16.msra.mxu0 %v1453
    %1930 = vmatprep.subr.bf16.mxu0 0
    %1931 = vmatpush1.bf16.msra.mxu0 %v1454
    %1932 = vmatprep.subr.bf16.mxu0 0
    %1933 = vmatpush1.bf16.msra.mxu0 %v1455
    %1934 = vmatprep.subr.bf16.mxu0 0
    %1935 = vmatpush1.bf16.msra.mxu0 %v1456
    %1936 = vmatprep.subr.bf16.mxu0 0
    %1937 = vmatpush1.bf16.msra.mxu0 %v1457
    %1938 = vmatprep.subr.bf16.mxu0 0
    %1939 = vmatpush1.bf16.msra.mxu0 %v1458
    %1940 = vmatprep.subr.bf16.mxu0 0
    %1941 = vmatpush1.bf16.msra.mxu0 %v1459
    %1942 = vmatprep.subr.bf16.mxu0 0
    %1943 = vmatpush1.bf16.msra.mxu0 %v1460
    %1944 = vmatprep.subr.bf16.mxu0 0
    %1945 = vmatpush1.bf16.msra.mxu0 %v1461
    %1946 = vmatprep.mubr.bf16.mxu0 %v477
    %1947 = vmatmul.mubr.bf16.gmra.mrb[0].mxu0 %v475
    %v1948 = vpop.f32.mrb[0].mxu0
    %v1949 = vadd.f32 %v1909, %v1948
    %v1950 = vpop.f32.mrb[0].mxu0
    %v1951 = vpop.f32.mrb[0].mxu0
    %v1952 = vpop.f32.mrb[0].mxu0
    %1953 = vdwg.mxu0
    %1954 = vmatprep.subr.bf16.mxu0 0
    %1955 = vmatpush1.bf16.msra.mxu0 %v1462
    %1956 = vmatprep.subr.bf16.mxu0 0
    %1957 = vmatpush1.bf16.msra.mxu0 %v1463
    %1958 = vmatprep.subr.bf16.mxu0 0
    %1959 = vmatpush1.bf16.msra.mxu0 %v1464
    %1960 = vmatprep.subr.bf16.mxu0 0
    %1961 = vmatpush1.bf16.msra.mxu0 %v1465
    %1962 = vmatprep.subr.bf16.mxu0 0
    %1963 = vmatpush1.bf16.msra.mxu0 %v1466
    %1964 = vmatprep.subr.bf16.mxu0 0
    %1965 = vmatpush1.bf16.msra.mxu0 %v1467
    %1966 = vmatprep.subr.bf16.mxu0 0
    %1967 = vmatpush1.bf16.msra.mxu0 %v1468
    %1968 = vmatprep.subr.bf16.mxu0 0
    %1969 = vmatpush1.bf16.msra.mxu0 %v1469
    %1970 = vmatprep.subr.bf16.mxu0 0
    %1971 = vmatpush1.bf16.msra.mxu0 %v1470
    %1972 = vmatprep.subr.bf16.mxu0 0
    %1973 = vmatpush1.bf16.msra.mxu0 %v1471
    %1974 = vmatprep.subr.bf16.mxu0 0
    %1975 = vmatpush1.bf16.msra.mxu0 %v1472
    %1976 = vmatprep.subr.bf16.mxu0 0
    %1977 = vmatpush1.bf16.msra.mxu0 %v1473
    %1978 = vmatprep.subr.bf16.mxu0 0
    %1979 = vmatpush1.bf16.msra.mxu0 %v1474
    %1980 = vmatprep.subr.bf16.mxu0 0
    %1981 = vmatpush1.bf16.msra.mxu0 %v1475
    %1982 = vmatprep.subr.bf16.mxu0 0
    %1983 = vmatpush1.bf16.msra.mxu0 %v1476
    %1984 = vmatprep.subr.bf16.mxu0 0
    %1985 = vmatpush1.bf16.msra.mxu0 %v1477
    %1986 = vmatprep.mubr.bf16.mxu0 %v515
    %1987 = vmatmul.mubr.bf16.gmra.mrb[0].mxu0 %v501
    %v1988 = vpop.f32.mrb[0].mxu0
    %v1989 = vadd.f32 %v1949, %v1988
    %v1990 = vpop.f32.mrb[0].mxu0
    %v1991 = vpop.f32.mrb[0].mxu0
    %v1992 = vpop.f32.mrb[0].mxu0
    %1993 = vdwg.mxu0
    %1994 = vmatprep.subr.bf16.mxu0 0
    %1995 = vmatpush1.bf16.msra.mxu0 %v1478
    %1996 = vmatprep.subr.bf16.mxu0 0
    %1997 = vmatpush1.bf16.msra.mxu0 %v1479
    %1998 = vmatprep.subr.bf16.mxu0 0
    %1999 = vmatpush1.bf16.msra.mxu0 %v1480
    %2000 = vmatprep.subr.bf16.mxu0 0
    %2001 = vmatpush1.bf16.msra.mxu0 %v1481
    %2002 = vmatprep.subr.bf16.mxu0 0
    %2003 = vmatpush1.bf16.msra.mxu0 %v1482
    %2004 = vmatprep.subr.bf16.mxu0 0
    %2005 = vmatpush1.bf16.msra.mxu0 %v1483
    %2006 = vmatprep.subr.bf16.mxu0 0
    %2007 = vmatpush1.bf16.msra.mxu0 %v1484
    %2008 = vmatprep.subr.bf16.mxu0 0
    %2009 = vmatpush1.bf16.msra.mxu0 %v1485
    %2010 = vmatprep.subr.bf16.mxu0 0
    %2011 = vmatpush1.bf16.msra.mxu0 %v1486
    %2012 = vmatprep.subr.bf16.mxu0 0
    %2013 = vmatpush1.bf16.msra.mxu0 %v1487
    %2014 = vmatprep.subr.bf16.mxu0 0
    %2015 = vmatpush1.bf16.msra.mxu0 %v1488
    %2016 = vmatprep.subr.bf16.mxu0 0
    %2017 = vmatpush1.bf16.msra.mxu0 %v1489
    %2018 = vmatprep.subr.bf16.mxu0 0
    %2019 = vmatpush1.bf16.msra.mxu0 %v1490
    %2020 = vmatprep.subr.bf16.mxu0 0
    %2021 = vmatpush1.bf16.msra.mxu0 %v1491
    %2022 = vmatprep.subr.bf16.mxu0 0
    %2023 = vmatpush1.bf16.msra.mxu0 %v1492
    %2024 = vmatprep.subr.bf16.mxu0 0
    %2025 = vmatpush1.bf16.msra.mxu0 %v1493
    %2026 = vmatprep.mubr.bf16.mxu0 %v525
    %2027 = vmatmul.mubr.bf16.gmra.mrb[0].mxu0 %v523
    %v2028 = vpop.f32.mrb[0].mxu0
    %v2029 = vadd.f32 %v1989, %v2028
    %v2030 = vpop.f32.mrb[0].mxu0
    %v2031 = vpop.f32.mrb[0].mxu0
    %v2032 = vpop.f32.mrb[0].mxu0
    %2033 = vdwg.mxu0
    %2034 = vmatprep.subr.bf16.mxu0 0
    %2035 = vmatpush1.bf16.msra.mxu0 %v1494
    %2036 = vmatprep.subr.bf16.mxu0 0
    %2037 = vmatpush1.bf16.msra.mxu0 %v1495
    %2038 = vmatprep.subr.bf16.mxu0 0
    %2039 = vmatpush1.bf16.msra.mxu0 %v1496
    %2040 = vmatprep.subr.bf16.mxu0 0
    %2041 = vmatpush1.bf16.msra.mxu0 %v1497
    %2042 = vmatprep.subr.bf16.mxu0 0
    %2043 = vmatpush1.bf16.msra.mxu0 %v1498
    %2044 = vmatprep.subr.bf16.mxu0 0
    %2045 = vmatpush1.bf16.msra.mxu0 %v1499
    %2046 = vmatprep.subr.bf16.mxu0 0
    %2047 = vmatpush1.bf16.msra.mxu0 %v1500
    %2048 = vmatprep.subr.bf16.mxu0 0
    %2049 = vmatpush1.bf16.msra.mxu0 %v1501
    %2050 = vmatprep.subr.bf16.mxu0 0
    %2051 = vmatpush1.bf16.msra.mxu0 %v1502
    %2052 = vmatprep.subr.bf16.mxu0 0
    %2053 = vmatpush1.bf16.msra.mxu0 %v1503
    %2054 = vmatprep.subr.bf16.mxu0 0
    %2055 = vmatpush1.bf16.msra.mxu0 %v1504
    %2056 = vmatprep.subr.bf16.mxu0 0
    %2057 = vmatpush1.bf16.msra.mxu0 %v1505
    %2058 = vmatprep.subr.bf16.mxu0 0
    %2059 = vmatpush1.bf16.msra.mxu0 %v1506
    %2060 = vmatprep.subr.bf16.mxu0 0
    %2061 = vmatpush1.bf16.msra.mxu0 %v1507
    %2062 = vmatprep.subr.bf16.mxu0 0
    %2063 = vmatpush1.bf16.msra.mxu0 %v1508
    %2064 = vmatprep.subr.bf16.mxu0 0
    %2065 = vmatpush1.bf16.msra.mxu0 %v1509
    %2066 = vmatprep.mubr.bf16.mxu0 %v522
    %2067 = vmatmul.mubr.bf16.gmra.mrb[0].mxu0 %v508
    %v2068 = vpop.f32.mrb[0].mxu0
    %v2069 = vadd.f32 %v2029, %v2068
    %v2070 = vpop.f32.mrb[0].mxu0
    %v2071 = vpop.f32.mrb[0].mxu0
    %v2072 = vpop.f32.mrb[0].mxu0
    %2073 = vdwg.mxu0
    %2074 = vmatprep.subr.bf16.mxu0 0
    %2075 = vmatpush1.bf16.msra.mxu0 %v1510
    %2076 = vmatprep.subr.bf16.mxu0 0
    %2077 = vmatpush1.bf16.msra.mxu0 %v1511
    %2078 = vmatprep.subr.bf16.mxu0 0
    %2079 = vmatpush1.bf16.msra.mxu0 %v1512
    %2080 = vmatprep.subr.bf16.mxu0 0
    %2081 = vmatpush1.bf16.msra.mxu0 %v1513
    %2082 = vmatprep.subr.bf16.mxu0 0
    %2083 = vmatpush1.bf16.msra.mxu0 %v1514
    %2084 = vmatprep.subr.bf16.mxu0 0
    %2085 = vmatpush1.bf16.msra.mxu0 %v1515
    %2086 = vmatprep.subr.bf16.mxu0 0
    %2087 = vmatpush1.bf16.msra.mxu0 %v1516
    %2088 = vmatprep.subr.bf16.mxu0 0
    %2089 = vmatpush1.bf16.msra.mxu0 %v1517
    %2090 = vmatprep.subr.bf16.mxu0 0
    %2091 = vmatpush1.bf16.msra.mxu0 %v1518
    %2092 = vmatprep.subr.bf16.mxu0 0
    %2093 = vmatpush1.bf16.msra.mxu0 %v1519
    %2094 = vmatprep.subr.bf16.mxu0 0
    %2095 = vmatpush1.bf16.msra.mxu0 %v1520
    %2096 = vmatprep.subr.bf16.mxu0 0
    %2097 = vmatpush1.bf16.msra.mxu0 %v1521
    %2098 = vmatprep.subr.bf16.mxu0 0
    %2099 = vmatpush1.bf16.msra.mxu0 %v1522
    %2100 = vmatprep.subr.bf16.mxu0 0
    %2101 = vmatpush1.bf16.msra.mxu0 %v1523
    %2102 = vmatprep.subr.bf16.mxu0 0
    %2103 = vmatpush1.bf16.msra.mxu0 %v1524
    %2104 = vmatprep.subr.bf16.mxu0 0
    %2105 = vmatpush1.bf16.msra.mxu0 %v1525
    %2106 = vmatprep.mubr.bf16.mxu0 %v526
    %2107 = vmatmul.mubr.bf16.gmra.mrb[0].mxu0 %v524
    %v2108 = vpop.f32.mrb[0].mxu0
    %v2109 = vadd.f32 %v2069, %v2108
    %v2110 = vpop.f32.mrb[0].mxu0
    %v2111 = vpop.f32.mrb[0].mxu0
    %v2112 = vpop.f32.mrb[0].mxu0
    %2113 = vdwg.mxu0
    %2114 = vmatprep.subr.bf16.mxu0 0
    %2115 = vmatpush1.bf16.msra.mxu0 %v1526
    %2116 = vmatprep.subr.bf16.mxu0 0
    %2117 = vmatpush1.bf16.msra.mxu0 %v1527
    %2118 = vmatprep.subr.bf16.mxu0 0
    %2119 = vmatpush1.bf16.msra.mxu0 %v1528
    %2120 = vmatprep.subr.bf16.mxu0 0
    %2121 = vmatpush1.bf16.msra.mxu0 %v1529
    %2122 = vmatprep.subr.bf16.mxu0 0
    %2123 = vmatpush1.bf16.msra.mxu0 %v1530
    %2124 = vmatprep.subr.bf16.mxu0 0
    %2125 = vmatpush1.bf16.msra.mxu0 %v1531
    %2126 = vmatprep.subr.bf16.mxu0 0
    %2127 = vmatpush1.bf16.msra.mxu0 %v1532
    %2128 = vmatprep.subr.bf16.mxu0 0
    %2129 = vmatpush1.bf16.msra.mxu0 %v1533
    %2130 = vmatprep.subr.bf16.mxu0 0
    %2131 = vmatpush1.bf16.msra.mxu0 %v1534
    %2132 = vmatprep.subr.bf16.mxu0 0
    %2133 = vmatpush1.bf16.msra.mxu0 %v1535
    %2134 = vmatprep.subr.bf16.mxu0 0
    %2135 = vmatpush1.bf16.msra.mxu0 %v1536
    %2136 = vmatprep.subr.bf16.mxu0 0
    %2137 = vmatpush1.bf16.msra.mxu0 %v1537
    %2138 = vmatprep.subr.bf16.mxu0 0
    %2139 = vmatpush1.bf16.msra.mxu0 %v1538
    %2140 = vmatprep.subr.bf16.mxu0 0
    %2141 = vmatpush1.bf16.msra.mxu0 %v1539
    %2142 = vmatprep.subr.bf16.mxu0 0
    %2143 = vmatpush1.bf16.msra.mxu0 %v1540
    %2144 = vmatprep.subr.bf16.mxu0 0
    %2145 = vmatpush1.bf16.msra.mxu0 %v1541
    %2146 = vmatprep.mubr.bf16.mxu0 %v564
    %2147 = vmatmul.mubr.bf16.gmra.mrb[0].mxu0 %v550
    %v2148 = vpop.f32.mrb[0].mxu0
    %v2149 = vadd.f32 %v2109, %v2148
    %v2150 = vpop.f32.mrb[0].mxu0
    %v2151 = vpop.f32.mrb[0].mxu0
    %v2152 = vpop.f32.mrb[0].mxu0
    %2153 = vdwg.mxu0
    %2154 = vmatprep.subr.bf16.mxu0 0
    %2155 = vmatpush1.bf16.msra.mxu0 %v1542
    %2156 = vmatprep.subr.bf16.mxu0 0
    %2157 = vmatpush1.bf16.msra.mxu0 %v1543
    %2158 = vmatprep.subr.bf16.mxu0 0
    %2159 = vmatpush1.bf16.msra.mxu0 %v1544
    %2160 = vmatprep.subr.bf16.mxu0 0
    %2161 = vmatpush1.bf16.msra.mxu0 %v1545
    %2162 = vmatprep.subr.bf16.mxu0 0
    %2163 = vmatpush1.bf16.msra.mxu0 %v1546
    %2164 = vmatprep.subr.bf16.mxu0 0
    %2165 = vmatpush1.bf16.msra.mxu0 %v1547
    %2166 = vmatprep.subr.bf16.mxu0 0
    %2167 = vmatpush1.bf16.msra.mxu0 %v1548
    %2168 = vmatprep.subr.bf16.mxu0 0
    %2169 = vmatpush1.bf16.msra.mxu0 %v1549
    %2170 = vmatprep.subr.bf16.mxu0 0
    %2171 = vmatpush1.bf16.msra.mxu0 %v1550
    %2172 = vmatprep.subr.bf16.mxu0 0
    %2173 = vmatpush1.bf16.msra.mxu0 %v1551
    %2174 = vmatprep.subr.bf16.mxu0 0
    %2175 = vmatpush1.bf16.msra.mxu0 %v1552
    %2176 = vmatprep.subr.bf16.mxu0 0
    %2177 = vmatpush1.bf16.msra.mxu0 %v1553
    %2178 = vmatprep.subr.bf16.mxu0 0
    %2179 = vmatpush1.bf16.msra.mxu0 %v1554
    %2180 = vmatprep.subr.bf16.mxu0 0
    %2181 = vmatpush1.bf16.msra.mxu0 %v1555
    %2182 = vmatprep.subr.bf16.mxu0 0
    %2183 = vmatpush1.bf16.msra.mxu0 %v1556
    %2184 = vmatprep.subr.bf16.mxu0 0
    %2185 = vmatpush1.bf16.msra.mxu0 %v1557
    %2186 = vmatprep.mubr.bf16.mxu0 %v574
    %2187 = vmatmul.mubr.bf16.gmra.mrb[0].mxu0 %v572
    %v2188 = vpop.f32.mrb[0].mxu0
    %v2189 = vadd.f32 %v2149, %v2188
    %v2190 = vpop.f32.mrb[0].mxu0
    %v2191 = vpop.f32.mrb[0].mxu0
    %v2192 = vpop.f32.mrb[0].mxu0
    %2193 = vdwg.mxu0
    %2194 = vmatprep.subr.bf16.mxu0 0
    %2195 = vmatpush1.bf16.msra.mxu0 %v1558
    %2196 = vmatprep.subr.bf16.mxu0 0
    %2197 = vmatpush1.bf16.msra.mxu0 %v1559
    %2198 = vmatprep.subr.bf16.mxu0 0
    %2199 = vmatpush1.bf16.msra.mxu0 %v1560
    %2200 = vmatprep.subr.bf16.mxu0 0
    %2201 = vmatpush1.bf16.msra.mxu0 %v1561
    %2202 = vmatprep.subr.bf16.mxu0 0
    %2203 = vmatpush1.bf16.msra.mxu0 %v1562
    %2204 = vmatprep.subr.bf16.mxu0 0
    %2205 = vmatpush1.bf16.msra.mxu0 %v1563
    %2206 = vmatprep.subr.bf16.mxu0 0
    %2207 = vmatpush1.bf16.msra.mxu0 %v1564
    %2208 = vmatprep.subr.bf16.mxu0 0
    %2209 = vmatpush1.bf16.msra.mxu0 %v1565
    %2210 = vmatprep.subr.bf16.mxu0 0
    %2211 = vmatpush1.bf16.msra.mxu0 %v1566
    %2212 = vmatprep.subr.bf16.mxu0 0
    %2213 = vmatpush1.bf16.msra.mxu0 %v1567
    %2214 = vmatprep.subr.bf16.mxu0 0
    %2215 = vmatpush1.bf16.msra.mxu0 %v1568
    %2216 = vmatprep.subr.bf16.mxu0 0
    %2217 = vmatpush1.bf16.msra.mxu0 %v1569
    %2218 = vmatprep.subr.bf16.mxu0 0
    %2219 = vmatpush1.bf16.msra.mxu0 %v1570
    %2220 = vmatprep.subr.bf16.mxu0 0
    %2221 = vmatpush1.bf16.msra.mxu0 %v1571
    %2222 = vmatprep.subr.bf16.mxu0 0
    %2223 = vmatpush1.bf16.msra.mxu0 %v1572
    %2224 = vmatprep.subr.bf16.mxu0 0
    %2225 = vmatpush1.bf16.msra.mxu0 %v1573
    %2226 = vmatprep.mubr.bf16.mxu0 %v571
    %2227 = vmatmul.mubr.bf16.gmra.mrb[0].mxu0 %v557
    %v2228 = vpop.f32.mrb[0].mxu0
    %v2229 = vadd.f32 %v2189, %v2228
    %v2230 = vpop.f32.mrb[0].mxu0
    %v2231 = vpop.f32.mrb[0].mxu0
    %v2232 = vpop.f32.mrb[0].mxu0
    %2233 = vdwg.mxu0
    %2234 = vmatprep.subr.bf16.mxu0 0
    %2235 = vmatpush1.bf16.msra.mxu0 %v1574
    %2236 = vmatprep.subr.bf16.mxu0 0
    %2237 = vmatpush1.bf16.msra.mxu0 %v1575
    %2238 = vmatprep.subr.bf16.mxu0 0
    %2239 = vmatpush1.bf16.msra.mxu0 %v1576
    %2240 = vmatprep.subr.bf16.mxu0 0
    %2241 = vmatpush1.bf16.msra.mxu0 %v1577
    %2242 = vmatprep.subr.bf16.mxu0 0
    %2243 = vmatpush1.bf16.msra.mxu0 %v1578
    %2244 = vmatprep.subr.bf16.mxu0 0
    %2245 = vmatpush1.bf16.msra.mxu0 %v1579
    %2246 = vmatprep.subr.bf16.mxu0 0
    %2247 = vmatpush1.bf16.msra.mxu0 %v1580
    %2248 = vmatprep.subr.bf16.mxu0 0
    %2249 = vmatpush1.bf16.msra.mxu0 %v1581
    %2250 = vmatprep.subr.bf16.mxu0 0
    %2251 = vmatpush1.bf16.msra.mxu0 %v1582
    %2252 = vmatprep.subr.bf16.mxu0 0
    %2253 = vmatpush1.bf16.msra.mxu0 %v1583
    %2254 = vmatprep.subr.bf16.mxu0 0
    %2255 = vmatpush1.bf16.msra.mxu0 %v1584
    %2256 = vmatprep.subr.bf16.mxu0 0
    %2257 = vmatpush1.bf16.msra.mxu0 %v1585
    %2258 = vmatprep.subr.bf16.mxu0 0
    %2259 = vmatpush1.bf16.msra.mxu0 %v1586
    %2260 = vmatprep.subr.bf16.mxu0 0
    %2261 = vmatpush1.bf16.msra.mxu0 %v1587
    %2262 = vmatprep.subr.bf16.mxu0 0
    %2263 = vmatpush1.bf16.msra.mxu0 %v1588
    %2264 = vmatprep.subr.bf16.mxu0 0
    %2265 = vmatpush1.bf16.msra.mxu0 %v1589
    %2266 = vmatprep.mubr.bf16.mxu0 %v575
    %2267 = vmatmul.mubr.bf16.gmra.mrb[0].mxu0 %v573
    %v2268 = vpop.f32.mrb[0].mxu0
    %v2269 = vadd.f32 %v2229, %v2268
    %v2270 = vpop.f32.mrb[0].mxu0
    %v2271 = vpop.f32.mrb[0].mxu0
    %v2272 = vpop.f32.mrb[0].mxu0
    %2273 = vdwg.mxu0
    %2274 = vmatprep.subr.bf16.mxu0 0
    %2275 = vmatpush1.bf16.msra.mxu0 %v1590
    %2276 = vmatprep.subr.bf16.mxu0 0
    %2277 = vmatpush1.bf16.msra.mxu0 %v1591
    %2278 = vmatprep.subr.bf16.mxu0 0
    %2279 = vmatpush1.bf16.msra.mxu0 %v1592
    %2280 = vmatprep.subr.bf16.mxu0 0
    %2281 = vmatpush1.bf16.msra.mxu0 %v1593
    %2282 = vmatprep.subr.bf16.mxu0 0
    %2283 = vmatpush1.bf16.msra.mxu0 0
    %2284 = vmatprep.subr.bf16.mxu0 0
    %2285 = vmatpush1.bf16.msra.mxu0 0
    %2286 = vmatprep.subr.bf16.mxu0 0
    %2287 = vmatpush1.bf16.msra.mxu0 0
    %2288 = vmatprep.subr.bf16.mxu0 0
    %2289 = vmatpush1.bf16.msra.mxu0 0
    %2290 = vmatprep.subr.bf16.mxu0 0
    %2291 = vmatpush1.bf16.msra.mxu0 0
    %2292 = vmatprep.subr.bf16.mxu0 0
    %2293 = vmatpush1.bf16.msra.mxu0 0
    %2294 = vmatprep.subr.bf16.mxu0 0
    %2295 = vmatpush1.bf16.msra.mxu0 0
    %2296 = vmatprep.subr.bf16.mxu0 0
    %2297 = vmatpush1.bf16.msra.mxu0 0
    %2298 = vmatprep.subr.bf16.mxu0 0
    %2299 = vmatpush1.bf16.msra.mxu0 0
    %2300 = vmatprep.subr.bf16.mxu0 0
    %2301 = vmatpush1.bf16.msra.mxu0 0
    %2302 = vmatprep.subr.bf16.mxu0 0
    %2303 = vmatpush1.bf16.msra.mxu0 0
    %2304 = vmatprep.subr.bf16.mxu0 0
    %2305 = vmatpush1.bf16.msra.mxu0 0
    %2306 = vmatprep.mubr.bf16.mxu0 0
    %2307 = vmatmul.mubr.bf16.gmra.mrb[0].mxu0 %v1792
    %v2308 = vpop.f32.mrb[0].mxu0
    %v2309 = vadd.f32 %v2269, %v2308
    %v2310 = vpop.f32.mrb[0].mxu0
    %v2311 = vpop.f32.mrb[0].mxu0
    %v2312 = vpop.f32.mrb[0].mxu0
    %2313 = vdwg.mxu0
    %v2314 = vmax.f32 %v2309, 0.0
    %v2315 = vpack.c.bf16 %v2314, %v2314
    %v2316 = vld [vmem:[%s3] sm:$0xf]
    %v2317 = vld [vmem:[%s3 + $0x4] sm:$0xf]
    %v2318 = vld [vmem:[%s3 + $0x8] sm:$0xf]
    %v2319 = vld [vmem:[%s3 + $0xc] sm:$0xf]
    %v2320 = vld [vmem:[%s3 + $0x10] sm:$0xf]
    %v2321 = vld [vmem:[%s3 + $0x14] sm:$0xf]
    %v2322 = vld [vmem:[%s3 + $0x18] sm:$0xf]
    %v2323 = vld [vmem:[%s3 + $0x1c] sm:$0xf]
    %v2324 = vld [vmem:[%s3 + $0x20] sm:$0xf]
    %v2325 = vld [vmem:[%s3 + $0x24] sm:$0xf]
    %v2326 = vld [vmem:[%s3 + $0x28] sm:$0xf]
    %v2327 = vld [vmem:[%s3 + $0x2c] sm:$0xf]
    %v2328 = vld [vmem:[%s3 + $0x30] sm:$0xf]
    %v2329 = vld [vmem:[%s3 + $0x34] sm:$0xf]
    %v2330 = vld [vmem:[%s3 + $0x38] sm:$0xf]
    %v2331 = vld [vmem:[%s3 + $0x3c] sm:$0xf]
    %v2332 = vld [vmem:[%s4] sm:$0x1]
    %v2334 = vlaneseq
    %v2335 = vshrl.u32 %v2334, 7
    %v2336 = vsub.s32 0, %v2335
    %v2337 = vrot.slane %v2332, %v2336
    %v2355 = vunpack.c.l.b16 %v2316
    %v2356 = vunpack.c.l.b16 %v2317
    %v2357 = vunpack.c.l.b16 %v2318
    %v2358 = vunpack.c.l.b16 %v2319
    %v2359 = vunpack.c.l.b16 %v2320
    %v2360 = vunpack.c.l.b16 %v2321
    %v2361 = vunpack.c.l.b16 %v2322
    %v2362 = vunpack.c.l.b16 %v2323
    %v2363 = vunpack.c.l.b16 %v2324
    %v2364 = vunpack.c.l.b16 %v2325
    %v2365 = vunpack.c.l.b16 %v2326
    %v2366 = vunpack.c.l.b16 %v2327
    %v2367 = vunpack.c.l.b16 %v2328
    %v2368 = vunpack.c.l.b16 %v2329
    %v2369 = vunpack.c.l.b16 %v2330
    %v2370 = vunpack.c.l.b16 %v2331
    %v2371 = vpack.c.b16 %v2356, %v2355
    %v2372 = vpack.c.b16 %v2358, %v2357
    %v2373 = vpack.c.b16 %v2360, %v2359
    %v2374 = vpack.c.b16 %v2362, %v2361
    %v2375 = vpack.c.b16 %v2364, %v2363
    %v2376 = vpack.c.b16 %v2366, %v2365
    %v2377 = vpack.c.b16 %v2368, %v2367
    %v2378 = vpack.c.b16 %v2370, %v2369
    %2387 = vmatprep.subr.bf16.mxu0 0
    %2388 = vmatpush1.bf16.msra.mxu0 %v2371
    %2389 = vmatprep.subr.bf16.mxu0 0
    %2390 = vmatpush1.bf16.msra.mxu0 %v2372
    %2391 = vmatprep.subr.bf16.mxu0 0
    %2392 = vmatpush1.bf16.msra.mxu0 %v2373
    %2393 = vmatprep.subr.bf16.mxu0 0
    %2394 = vmatpush1.bf16.msra.mxu0 %v2374
    %2395 = vmatprep.subr.bf16.mxu0 0
    %2396 = vmatpush1.bf16.msra.mxu0 %v2375
    %2397 = vmatprep.subr.bf16.mxu0 0
    %2398 = vmatpush1.bf16.msra.mxu0 %v2376
    %2399 = vmatprep.subr.bf16.mxu0 0
    %2400 = vmatpush1.bf16.msra.mxu0 %v2377
    %2401 = vmatprep.subr.bf16.mxu0 0
    %2402 = vmatpush1.bf16.msra.mxu0 %v2378
    %2403 = vmatprep.subr.bf16.mxu0 0
    %2404 = vmatpush1.bf16.msra.mxu0 0
    %2405 = vmatprep.subr.bf16.mxu0 0
    %2406 = vmatpush1.bf16.msra.mxu0 0
    %2407 = vmatprep.subr.bf16.mxu0 0
    %2408 = vmatpush1.bf16.msra.mxu0 0
    %2409 = vmatprep.subr.bf16.mxu0 0
    %2410 = vmatpush1.bf16.msra.mxu0 0
    %2411 = vmatprep.subr.bf16.mxu0 0
    %2412 = vmatpush1.bf16.msra.mxu0 0
    %2413 = vmatprep.subr.bf16.mxu0 0
    %2414 = vmatpush1.bf16.msra.mxu0 0
    %2415 = vmatprep.subr.bf16.mxu0 0
    %2416 = vmatpush1.bf16.msra.mxu0 0
    %2417 = vmatprep.subr.bf16.mxu0 0
    %2418 = vmatpush1.bf16.msra.mxu0 0
    %2419 = vmatprep.mubr.bf16.mxu0 0
    %2420 = vmatmul.mubr.bf16.gmra.mrb[0].mxu0 %v2315
    %v2421 = vpop.f32.mrb[0].mxu0
    %v2422 = vadd.f32 %v2337, %v2421
    %v2423 = vpop.f32.mrb[0].mxu0
    %v2424 = vpop.f32.mrb[0].mxu0
    %v2425 = vpop.f32.mrb[0].mxu0
    %2426 = vdwg.mxu0
    %2427 = vst [vmem:[#allocation2] sm:$0x3] %v2422
    // Predicated region
    $region22: #{simple_cnn_forward.5} parent=1 // pred_check
      _
    $region23: #{simple_cnn_forward.5} parent=1 // pred_check_branch
      %2429 = sbr.rel (0) target = $region25
    $region24: #{simple_cnn_forward.5} parent=1 // pred_region
      %s2431 = ssub.s32 32, 32
      %2432 = vsyncadd [#allocation3], %s2431
      %s2434 = sshll.u32 [#allocation2], 4
      %s2435 = int_to_ptr.vmem [resolvable:$true] %s2434
      %2437 = dma.vmem_to_hbm [thread:$0]  %s2435, 32, %s5, [#allocation3]
    $region25: #{simple_cnn_forward.5} parent=1 // pred_fallthru
      _
    // Predicated region
    $region26: #{simple_cnn_forward.5} parent=1 // pred_check
      _
    $region27: #{simple_cnn_forward.5} parent=1 // pred_check_branch
      %2439 = sbr.rel (0) target = $region29
    $region28: #{simple_cnn_forward.5} parent=1 // pred_region
      %2440 = dma.done [#allocation3], 32
    $region29: #{simple_cnn_forward.5} parent=1 // pred_fallthru
      _
    %2441 = vsyncpa [#allocation3], 1

</llo_original>
